<compile_context>
chip_gen: v6e
topology: v6e:2x2x1
jax: 0.10.0
libtpu: 0.0.40
codegen_flags: <defaults>
</compile_context>

<pallas_src>
import functools

import jax
import jax.numpy as jnp
from jax import lax
from jax.experimental import pallas as pl
from jax.experimental.pallas import tpu as pltpu

N_LAYERS = 4          # hidden (Linear+Tanh) blocks after the input layer
HIDDEN_DIM = 64
OBS_DIM = 16
BATCH = 8             # small demo batch; production batches just change tile_b
MAX_TILE_B = 1024     # upper bound on batch columns per grid step (128-multiple)


def _round_up(x, m):
    return ((x + m - 1) // m) * m


def _default_compute_dtype():
    """bf16 matmul/tanh path on bf16-capable VPU/EUP chips (v6e, v7x); f32 otherwise."""
    try:
        kind = jax.devices()[0].device_kind.lower()
    except Exception:
        return jnp.float32
    if "v6" in kind or "v7" in kind:
        return jnp.bfloat16
    return jnp.float32


def _pick_tile_b(batch, max_tile_b=MAX_TILE_B):
    """Choose the per-step batch tile (multiple of 128 lanes).

    Big batches get the largest tile (amortizes the ~0.35 us/step overhead);
    medium batches are split into exactly 2 tiles so a "parallel" grid keeps
    both v7x TensorCores busy; tiny batches use a single 128-lane tile.
    """
    max_tile_b = max(128, _round_up(max_tile_b, 128))
    b128 = _round_up(batch, 128)
    if b128 >= 2 * max_tile_b:
        return max_tile_b
    if b128 >= 256:
        return _round_up(b128 // 2, 128)
    return 128


def critic_kernel(obs_ref, w_in_ref, b_in_ref, wh_ref, bh_ref,
                  w_out_ref, b_out_ref, out_ref, *,
                  n_layers, compute_dtype, precision):
    # obs_ref: [TILE_B, obs_dim] straight from HBM (no wrapper transpose).
    obs = obs_ref[...].astype(compute_dtype)
    # Input layer Linear(obs_dim, H) + Tanh, feature-major result:
    # contract obs over its last axis so x = W_in @ obs^T  -> [H, TILE_B].
    acc = lax.dot_general(
        w_in_ref[...], obs,
        dimension_numbers=(((1,), (1,)), ((), ())),
        preferred_element_type=jnp.float32,
        precision=precision)
    x = jnp.tanh((acc + b_in_ref[...]).astype(compute_dtype))       # [H, TILE_B]
    # Deep MLP: n_layers * (Linear(H, H) + Tanh); static unroll (n_layers small).
    for i in range(n_layers):
        acc = jnp.dot(wh_ref[i], x,
                      preferred_element_type=jnp.float32,
                      precision=precision)
        x = jnp.tanh((acc + bh_ref[i]).astype(compute_dtype))       # [H, TILE_B]
    # Output head Linear(H, 1): f32 VPU multiply + sublane (XLU) reduction keeps
    # the result lane-dense ([1, TILE_B]); b_out is an SMEM scalar.
    v = jnp.sum(x.astype(jnp.float32) * w_out_ref[...], axis=0, keepdims=True)
    out_ref[...] = jnp.tanh(v + b_out_ref[0, 0])                    # final F.tanh


def critic_forward(obs, params, *, max_tile_b=MAX_TILE_B, compute_dtype=None):
    """obs: [batch, obs_dim] float32 -> value: [batch] float32."""
    w_in, b_in, wh, bh, w_out, b_out = params
    batch, obs_dim = obs.shape
    hidden = w_in.shape[0]
    n_layers = wh.shape[0]

    if compute_dtype is None:
        compute_dtype = _default_compute_dtype()
    precision = (lax.Precision.HIGHEST if compute_dtype == jnp.float32
                 else lax.Precision.DEFAULT)

    tile_b = _pick_tile_b(batch, max_tile_b)
    b_pad = pl.cdiv(batch, tile_b) * tile_b
    if b_pad != batch:
        # Only a batch-axis zero pad (no transpose, no extra pass for aligned batches).
        obs = jnp.pad(obs, ((0, b_pad - batch), (0, 0)))

    # Matmul weights in the compute dtype (tiny one-time cast); biases/head stay f32.
    w_in_c = w_in.astype(compute_dtype)
    wh_c = wh.astype(compute_dtype)

    # Advisory cost so XLA can overlap this tiny kernel with neighbors.
    flops = 2 * b_pad * (obs_dim * hidden + n_layers * hidden * hidden + hidden)
    transcendentals = b_pad * ((n_layers + 1) * hidden + 1)
    param_bytes = sum(int(a.size) * a.dtype.itemsize
                      for a in (w_in_c, b_in, wh_c, bh, w_out, b_out))
    bytes_accessed = int(b_pad * obs_dim * obs.dtype.itemsize + b_pad * 4 + param_bytes)

    kernel = functools.partial(critic_kernel, n_layers=n_layers,
                               compute_dtype=compute_dtype, precision=precision)
    out = pl.pallas_call(
        kernel,
        out_shape=jax.ShapeDtypeStruct((1, b_pad), jnp.float32),
        grid=(b_pad // tile_b,),
        in_specs=[
            # obs tile follows the grid index; weights/biases stay VMEM-resident.
            pl.BlockSpec((tile_b, obs_dim), lambda i: (i, 0)),
            pl.BlockSpec((hidden, obs_dim), lambda i: (0, 0)),
            pl.BlockSpec((hidden, 1), lambda i: (0, 0)),
            pl.BlockSpec((n_layers, hidden, hidden), lambda i: (0, 0, 0)),
            pl.BlockSpec((n_layers, hidden, 1), lambda i: (0, 0, 0)),
            pl.BlockSpec((hidden, 1), lambda i: (0, 0)),
            pl.BlockSpec(memory_space=pltpu.MemorySpace.SMEM),   # b_out scalar
        ],
        out_specs=pl.BlockSpec((1, tile_b), lambda i: (0, i)),
        compiler_params=pltpu.CompilerParams(
            dimension_semantics=("parallel",)),
        cost_estimate=pl.CostEstimate(flops=flops,
                                      transcendentals=transcendentals,
                                      bytes_accessed=bytes_accessed),
    )(obs, w_in_c, b_in, wh_c, bh, w_out, b_out)
    # PyTorch .squeeze(): [batch, 1] -> [batch]
    return out[0, :batch]


def init_params(key, obs_dim=OBS_DIM, hidden_dim=HIDDEN_DIM, n_layers=N_LAYERS):
    """Deterministic synthetic init. Weights stored in PyTorch [out, in] layout,
    biases as [out, 1] columns, w_out as a [hidden, 1] column (== PyTorch
    weight.T) for the in-kernel lane-dense reduction."""
    ks = jax.random.split(key, 6)
    s_in = 1.0 / jnp.sqrt(obs_dim)
    s_h = 1.0 / jnp.sqrt(hidden_dim)
    w_in = jax.random.uniform(ks[0], (hidden_dim, obs_dim), jnp.float32, -s_in, s_in)
    b_in = jax.random.uniform(ks[1], (hidden_dim, 1), jnp.float32, -s_in, s_in)
    wh = jax.random.uniform(ks[2], (n_layers, hidden_dim, hidden_dim), jnp.float32, -s_h, s_h)
    bh = jax.random.uniform(ks[3], (n_layers, hidden_dim, 1), jnp.float32, -s_h, s_h)
    w_out = jax.random.uniform(ks[4], (hidden_dim, 1), jnp.float32, -s_h, s_h)
    b_out = jax.random.uniform(ks[5], (1, 1), jnp.float32, -s_h, s_h)
    return w_in, b_in, wh, bh, w_out, b_out


def critic_forward_ref(obs, params):
    """Pure-JAX reference for correctness check."""
    w_in, b_in, wh, bh, w_out, b_out = params
    dot = functools.partial(jnp.dot, precision=lax.Precision.HIGHEST)
    x = jnp.tanh(dot(obs, w_in.T) + b_in[:, 0])
    for i in range(wh.shape[0]):
        x = jnp.tanh(dot(x, wh[i].T) + bh[i, :, 0])
    v = jnp.tanh(dot(x, w_out) + b_out[0])
    return v[:, 0]


if __name__ == "__main__":
    key = jax.random.PRNGKey(0)
    k_obs, k_par = jax.random.split(key)
    obs = jax.random.normal(k_obs, (BATCH, OBS_DIM), jnp.float32)
    params = init_params(k_par)

    compute_dtype = _default_compute_dtype()
    out = critic_forward(obs, params, compute_dtype=compute_dtype)
    jax.block_until_ready(out)

    ref = critic_forward_ref(obs, params)
    # bf16 matmul/tanh path (v6e/v7x) needs a looser tolerance than f32-HIGHEST.
    tol = 2e-2 if compute_dtype == jnp.bfloat16 else 1e-4
    assert out.shape == (BATCH,), out.shape
    assert jnp.allclose(out, ref, atol=tol, rtol=tol), float(jnp.max(jnp.abs(out - ref)))

    print("KERNEL_OK")
</pallas_src>

<mosaic_0001>
module attributes {stable_mosaic.version = 11 : i64} {
  func.func @critic_kernel(%arg0: i32, %arg1: memref<128x16xf32, #tpu.memory_space<vmem>>, %arg2: memref<64x16xf32, #tpu.memory_space<vmem>>, %arg3: memref<64x1xf32, #tpu.memory_space<vmem>>, %arg4: memref<4x64x64xf32, #tpu.memory_space<vmem>>, %arg5: memref<4x64x1xf32, #tpu.memory_space<vmem>>, %arg6: memref<64x1xf32, #tpu.memory_space<vmem>>, %arg7: memref<1x1xf32, #tpu.memory_space<smem>>, %arg8: memref<1x128xf32, #tpu.memory_space<vmem>>) attributes {dimension_semantics = [#tpu.dimension_semantics<parallel>], iteration_bounds = array<i64: 1>, scalar_prefetch = 0 : i64, scratch_operands = 0 : i64, tpu.core_type = #tpu.core_type<tc>, window_params = [{transform_indices = @transform_0, window_bounds = array<i64: 128, 16>}, {pipeline_mode = #tpu.pipeline_mode<synchronous>, transform_indices = @transform_1, window_bounds = array<i64: 64, 16>}, {pipeline_mode = #tpu.pipeline_mode<synchronous>, transform_indices = @transform_2, window_bounds = array<i64: 64, 1>}, {pipeline_mode = #tpu.pipeline_mode<synchronous>, transform_indices = @transform_3, window_bounds = array<i64: 4, 64, 64>}, {pipeline_mode = #tpu.pipeline_mode<synchronous>, transform_indices = @transform_4, window_bounds = array<i64: 4, 64, 1>}, {pipeline_mode = #tpu.pipeline_mode<synchronous>, transform_indices = @transform_5, window_bounds = array<i64: 64, 1>}, {transform_indices = @transform_6, window_bounds = array<i64: 1, 1>}, {transform_indices = @transform_7, window_bounds = array<i64: 1, 128>}]} {
    %c0 = arith.constant 0 : index
    %c0_0 = arith.constant 0 : index
    %0 = vector.load %arg1[%c0, %c0_0] : memref<128x16xf32, #tpu.memory_space<vmem>>, vector<128x16xf32>
    %c0_1 = arith.constant 0 : index
    %c0_2 = arith.constant 0 : index
    %1 = vector.load %arg2[%c0_1, %c0_2] : memref<64x16xf32, #tpu.memory_space<vmem>>, vector<64x16xf32>
    %cst = arith.constant dense<0.000000e+00> : vector<64x128xf32>
    %2 = tpu.matmul %1, %0, %cst {dimension_numbers = #tpu.dot_dimension_numbers<[1], [1], [0], [0], [0, 0, 1, 0], [], []>, precision = #tpu.contract_precision<fp32>} : vector<64x16xf32>, vector<128x16xf32>, vector<64x128xf32> -> vector<64x128xf32>
    %c0_3 = arith.constant 0 : index
    %c0_4 = arith.constant 0 : index
    %3 = vector.load %arg3[%c0_3, %c0_4] : memref<64x1xf32, #tpu.memory_space<vmem>>, vector<64x1xf32>
    %4 = vector.broadcast %3 : vector<64x1xf32> to vector<64x128xf32>
    %5 = arith.addf %2, %4 : vector<64x128xf32>
    %6 = math.tanh %5 : vector<64x128xf32>
    %c0_5 = arith.constant 0 : index
    %c0_6 = arith.constant 0 : index
    %c0_7 = arith.constant 0 : index
    %7 = vector.load %arg4[%c0_5, %c0_6, %c0_7] : memref<4x64x64xf32, #tpu.memory_space<vmem>>, vector<1x64x64xf32>
    %8 = vector.shape_cast %7 : vector<1x64x64xf32> to vector<64x64xf32>
    %cst_8 = arith.constant dense<0.000000e+00> : vector<64x128xf32>
    %9 = tpu.matmul %8, %6, %cst_8 {dimension_numbers = #tpu.dot_dimension_numbers<[1], [0], [0], [1], [0, 0, 1, 1], [], []>, precision = #tpu.contract_precision<fp32>} : vector<64x64xf32>, vector<64x128xf32>, vector<64x128xf32> -> vector<64x128xf32>
    %c0_9 = arith.constant 0 : index
    %c0_10 = arith.constant 0 : index
    %c0_11 = arith.constant 0 : index
    %10 = vector.load %arg5[%c0_9, %c0_10, %c0_11] : memref<4x64x1xf32, #tpu.memory_space<vmem>>, vector<1x64x1xf32>
    %11 = vector.shape_cast %10 : vector<1x64x1xf32> to vector<64x1xf32>
    %12 = vector.broadcast %11 : vector<64x1xf32> to vector<64x128xf32>
    %13 = arith.addf %9, %12 : vector<64x128xf32>
    %14 = math.tanh %13 : vector<64x128xf32>
    %c1 = arith.constant 1 : index
    %c0_12 = arith.constant 0 : index
    %c0_13 = arith.constant 0 : index
    %15 = vector.load %arg4[%c1, %c0_12, %c0_13] : memref<4x64x64xf32, #tpu.memory_space<vmem>>, vector<1x64x64xf32>
    %16 = vector.shape_cast %15 : vector<1x64x64xf32> to vector<64x64xf32>
    %cst_14 = arith.constant dense<0.000000e+00> : vector<64x128xf32>
    %17 = tpu.matmul %16, %14, %cst_14 {dimension_numbers = #tpu.dot_dimension_numbers<[1], [0], [0], [1], [0, 0, 1, 1], [], []>, precision = #tpu.contract_precision<fp32>} : vector<64x64xf32>, vector<64x128xf32>, vector<64x128xf32> -> vector<64x128xf32>
    %c1_15 = arith.constant 1 : index
    %c0_16 = arith.constant 0 : index
    %c0_17 = arith.constant 0 : index
    %18 = vector.load %arg5[%c1_15, %c0_16, %c0_17] : memref<4x64x1xf32, #tpu.memory_space<vmem>>, vector<1x64x1xf32>
    %19 = vector.shape_cast %18 : vector<1x64x1xf32> to vector<64x1xf32>
    %20 = vector.broadcast %19 : vector<64x1xf32> to vector<64x128xf32>
    %21 = arith.addf %17, %20 : vector<64x128xf32>
    %22 = math.tanh %21 : vector<64x128xf32>
    %c2 = arith.constant 2 : index
    %c0_18 = arith.constant 0 : index
    %c0_19 = arith.constant 0 : index
    %23 = vector.load %arg4[%c2, %c0_18, %c0_19] : memref<4x64x64xf32, #tpu.memory_space<vmem>>, vector<1x64x64xf32>
    %24 = vector.shape_cast %23 : vector<1x64x64xf32> to vector<64x64xf32>
    %cst_20 = arith.constant dense<0.000000e+00> : vector<64x128xf32>
    %25 = tpu.matmul %24, %22, %cst_20 {dimension_numbers = #tpu.dot_dimension_numbers<[1], [0], [0], [1], [0, 0, 1, 1], [], []>, precision = #tpu.contract_precision<fp32>} : vector<64x64xf32>, vector<64x128xf32>, vector<64x128xf32> -> vector<64x128xf32>
    %c2_21 = arith.constant 2 : index
    %c0_22 = arith.constant 0 : index
    %c0_23 = arith.constant 0 : index
    %26 = vector.load %arg5[%c2_21, %c0_22, %c0_23] : memref<4x64x1xf32, #tpu.memory_space<vmem>>, vector<1x64x1xf32>
    %27 = vector.shape_cast %26 : vector<1x64x1xf32> to vector<64x1xf32>
    %28 = vector.broadcast %27 : vector<64x1xf32> to vector<64x128xf32>
    %29 = arith.addf %25, %28 : vector<64x128xf32>
    %30 = math.tanh %29 : vector<64x128xf32>
    %c3 = arith.constant 3 : index
    %c0_24 = arith.constant 0 : index
    %c0_25 = arith.constant 0 : index
    %31 = vector.load %arg4[%c3, %c0_24, %c0_25] : memref<4x64x64xf32, #tpu.memory_space<vmem>>, vector<1x64x64xf32>
    %32 = vector.shape_cast %31 : vector<1x64x64xf32> to vector<64x64xf32>
    %cst_26 = arith.constant dense<0.000000e+00> : vector<64x128xf32>
    %33 = tpu.matmul %32, %30, %cst_26 {dimension_numbers = #tpu.dot_dimension_numbers<[1], [0], [0], [1], [0, 0, 1, 1], [], []>, precision = #tpu.contract_precision<fp32>} : vector<64x64xf32>, vector<64x128xf32>, vector<64x128xf32> -> vector<64x128xf32>
    %c3_27 = arith.constant 3 : index
    %c0_28 = arith.constant 0 : index
    %c0_29 = arith.constant 0 : index
    %34 = vector.load %arg5[%c3_27, %c0_28, %c0_29] : memref<4x64x1xf32, #tpu.memory_space<vmem>>, vector<1x64x1xf32>
    %35 = vector.shape_cast %34 : vector<1x64x1xf32> to vector<64x1xf32>
    %36 = vector.broadcast %35 : vector<64x1xf32> to vector<64x128xf32>
    %37 = arith.addf %33, %36 : vector<64x128xf32>
    %38 = math.tanh %37 : vector<64x128xf32>
    %c0_30 = arith.constant 0 : index
    %c0_31 = arith.constant 0 : index
    %39 = vector.load %arg6[%c0_30, %c0_31] : memref<64x1xf32, #tpu.memory_space<vmem>>, vector<64x1xf32>
    %40 = vector.broadcast %39 : vector<64x1xf32> to vector<64x128xf32>
    %41 = arith.mulf %38, %40 : vector<64x128xf32>
    %cst_32 = arith.constant dense<0.000000e+00> : vector<128xf32>
    %42 = vector.multi_reduction <add>, %41, %cst_32 [0] : vector<64x128xf32> to vector<128xf32>
    %43 = vector.shape_cast %42 : vector<128xf32> to vector<1x128xf32>
    %c0_33 = arith.constant 0 : index
    %c0_34 = arith.constant 0 : index
    %44 = memref.load %arg7[%c0_33, %c0_34] : memref<1x1xf32, #tpu.memory_space<smem>>
    %45 = vector.broadcast %44 : f32 to vector<1x128xf32>
    %46 = arith.addf %43, %45 : vector<1x128xf32>
    %47 = math.tanh %46 : vector<1x128xf32>
    %c0_35 = arith.constant 0 : index
    %c0_36 = arith.constant 0 : index
    %48 = vector.load %arg8[%c0_35, %c0_36] : memref<1x128xf32, #tpu.memory_space<vmem>>, vector<1x128xf32>
    tpu.vector_store %arg8[%c0_35, %c0_36], %47 {strides = array<i32>} : memref<1x128xf32, #tpu.memory_space<vmem>>, vector<1x128xf32>,
    return
  }
  func.func @transform_0(%arg0: i32) -> (i32, i32) {
    %c0_i32 = arith.constant 0 : i32
    %c0_i32_0 = arith.constant 0 : i32
    return %arg0, %c0_i32 : i32, i32
  }
  func.func @transform_1(%arg0: i32) -> (i32, i32) {
    %c0_i32 = arith.constant 0 : i32
    %c0_i32_0 = arith.constant 0 : i32
    %c0_i32_1 = arith.constant 0 : i32
    return %c0_i32, %c0_i32_0 : i32, i32
  }
  func.func @transform_2(%arg0: i32) -> (i32, i32) {
    %c0_i32 = arith.constant 0 : i32
    %c0_i32_0 = arith.constant 0 : i32
    %c0_i32_1 = arith.constant 0 : i32
    return %c0_i32, %c0_i32_0 : i32, i32
  }
  func.func @transform_3(%arg0: i32) -> (i32, i32, i32) {
    %c0_i32 = arith.constant 0 : i32
    %c0_i32_0 = arith.constant 0 : i32
    %c0_i32_1 = arith.constant 0 : i32
    %c0_i32_2 = arith.constant 0 : i32
    return %c0_i32, %c0_i32_0, %c0_i32_1 : i32, i32, i32
  }
  func.func @transform_4(%arg0: i32) -> (i32, i32, i32) {
    %c0_i32 = arith.constant 0 : i32
    %c0_i32_0 = arith.constant 0 : i32
    %c0_i32_1 = arith.constant 0 : i32
    %c0_i32_2 = arith.constant 0 : i32
    return %c0_i32, %c0_i32_0, %c0_i32_1 : i32, i32, i32
  }
  func.func @transform_5(%arg0: i32) -> (i32, i32) {
    %c0_i32 = arith.constant 0 : i32
    %c0_i32_0 = arith.constant 0 : i32
    %c0_i32_1 = arith.constant 0 : i32
    return %c0_i32, %c0_i32_0 : i32, i32
  }
  func.func @transform_6(%arg0: i32) -> (i32, i32) {
    %c0_i32 = arith.constant 0 : i32
    %c0_i32_0 = arith.constant 0 : i32
    %c0_i32_1 = arith.constant 0 : i32
    return %c0_i32, %c0_i32_0 : i32, i32
  }
  func.func @transform_7(%arg0: i32) -> (i32, i32) {
    %c0_i32 = arith.constant 0 : i32
    %c0_i32_0 = arith.constant 0 : i32
    return %c0_i32, %arg0 : i32, i32
  }
}

</mosaic_0001>

<llo_original>
// kernel: tpu_custom_call.1
$region0: #{tpu_custom_call.1}
  #allocation0 [shape = 'u32[]', space=smem, size = 0x4, offset = 0x4, fixed_abs, tag = 'smem constant byte address 0x4 - core index']
  #allocation1 [shape = 'u32[144,128]{1,0:T(1,128)}', space=vmem, size = 0x12000, scoped, tag = 'internal scratch']
  #allocation2 [shape = 'f32[1,1]{1,0:T(1,128)S(6)}', space=smem, size = 0x200, scoped, tag = 'scoped memory for tpu_custom_call.1']
  %s0 = inlined_call_operand.vmem [shape: f32[128,16], index: 0, kind: input, shape index: {}]
  %s1 = inlined_call_operand.vmem [shape: f32[64,16], index: 1, kind: input, shape index: {}]
  %s2 = inlined_call_operand.vmem [shape: f32[64,1], index: 2, kind: input, shape index: {}]
  %s3 = inlined_call_operand.vmem [shape: f32[4,64,64], index: 3, kind: input, shape index: {}]
  %s4 = inlined_call_operand.vmem [shape: f32[4,64,1], index: 4, kind: input, shape index: {}]
  %s5 = inlined_call_operand.vmem [shape: f32[64,1], index: 5, kind: input, shape index: {}]
  %s6 = inlined_call_operand.<no memory space> [shape: f32[1,1], index: 6, kind: input, shape index: {}]
  %s7 = inlined_call_operand.hbm [shape: f32[1,128], index: 7, kind: output, shape index: {}]
  %s8 = sld [smem:[#allocation0]]
  $region38: #{tpu_custom_call.1} parent=0
    _
  %s10 = ssub.s32 1, %s8
  %s11 = scalar_select 0, %s10, %s8
  %12 = sst [smem:[#allocation2]] %s6
  $region1: #{tpu_custom_call.1} parent=0
    #allocation3 [shape = 'u8[512]{0}', space=vmem, size = 0x400, scoped, tag = 'output window, operand 0, single buffered']
    #allocation4 [shape = 's32[1]{0}', space=sflag, size = 0x4, scoped, tag = 'scoped memory for tpu_custom_call.1']
    %13 = vsyncpa [#allocation4], 0
    // Predicated region
    $region2: #{tpu_custom_call.1} parent=1 // pred_check
      _
    $region3: #{tpu_custom_call.1} parent=1 // pred_check_branch
      %15 = sbr.rel (0) target = $region5
    $region4: #{tpu_custom_call.1} parent=1 // pred_region
      _
    $region5: #{tpu_custom_call.1} parent=1 // pred_fallthru
      _
    // Predicated region
    $region6: #{tpu_custom_call.1} parent=1 // pred_check
      _
    $region7: #{tpu_custom_call.1} parent=1 // pred_check_branch
      %17 = sbr.rel (0) target = $region9
    $region8: #{tpu_custom_call.1} parent=1 // pred_region
      _
    $region9: #{tpu_custom_call.1} parent=1 // pred_fallthru
      _
    // Predicated region
    $region10: #{tpu_custom_call.1} parent=1 // pred_check
      _
    $region11: #{tpu_custom_call.1} parent=1 // pred_check_branch
      %19 = sbr.rel (0) target = $region13
    $region12: #{tpu_custom_call.1} parent=1 // pred_region
      _
    $region13: #{tpu_custom_call.1} parent=1 // pred_fallthru
      _
    // Predicated region
    $region14: #{tpu_custom_call.1} parent=1 // pred_check
      _
    $region15: #{tpu_custom_call.1} parent=1 // pred_check_branch
      %21 = sbr.rel (0) target = $region17
    $region16: #{tpu_custom_call.1} parent=1 // pred_region
      _
    $region17: #{tpu_custom_call.1} parent=1 // pred_fallthru
      _
    // Predicated region
    $region18: #{tpu_custom_call.1} parent=1 // pred_check
      _
    $region19: #{tpu_custom_call.1} parent=1 // pred_check_branch
      %23 = sbr.rel (0) target = $region21
    $region20: #{tpu_custom_call.1} parent=1 // pred_region
      _
    $region21: #{tpu_custom_call.1} parent=1 // pred_fallthru
      _
    // Predicated region
    $region22: #{tpu_custom_call.1} parent=1 // pred_check
      _
    $region23: #{tpu_custom_call.1} parent=1 // pred_check_branch
      %25 = sbr.rel (0) target = $region25
    $region24: #{tpu_custom_call.1} parent=1 // pred_region
      _
    $region25: #{tpu_custom_call.1} parent=1 // pred_fallthru
      _
    // Predicated region
    $region26: #{tpu_custom_call.1} parent=1 // pred_check
      _
    $region27: #{tpu_custom_call.1} parent=1 // pred_check_branch
      %27 = sbr.rel (0) target = $region29
    $region28: #{tpu_custom_call.1} parent=1 // pred_region
      _
    $region29: #{tpu_custom_call.1} parent=1 // pred_fallthru
      _
    %v28 = vld [vmem:[%s0] sm:$0xff]
    %v29 = vld [vmem:[%s0 + $0x8] sm:$0xff]
    %v30 = vld [vmem:[%s0 + $0x10] sm:$0xff]
    %v31 = vld [vmem:[%s0 + $0x18] sm:$0xff]
    %v32 = vld [vmem:[%s0 + $0x20] sm:$0xff]
    %v33 = vld [vmem:[%s0 + $0x28] sm:$0xff]
    %v34 = vld [vmem:[%s0 + $0x30] sm:$0xff]
    %v35 = vld [vmem:[%s0 + $0x38] sm:$0xff]
    %v36 = vld [vmem:[%s0 + $0x40] sm:$0xff]
    %v37 = vld [vmem:[%s0 + $0x48] sm:$0xff]
    %v38 = vld [vmem:[%s0 + $0x50] sm:$0xff]
    %v39 = vld [vmem:[%s0 + $0x58] sm:$0xff]
    %v40 = vld [vmem:[%s0 + $0x60] sm:$0xff]
    %v41 = vld [vmem:[%s0 + $0x68] sm:$0xff]
    %v42 = vld [vmem:[%s0 + $0x70] sm:$0xff]
    %v43 = vld [vmem:[%s0 + $0x78] sm:$0xff]
    %v44 = vld [vmem:[%s1] sm:$0xff]
    %v45 = vld [vmem:[%s1 + $0x8] sm:$0xff]
    %v46 = vld [vmem:[%s1 + $0x10] sm:$0xff]
    %v47 = vld [vmem:[%s1 + $0x18] sm:$0xff]
    %v48 = vld [vmem:[%s1 + $0x20] sm:$0xff]
    %v49 = vld [vmem:[%s1 + $0x28] sm:$0xff]
    %v50 = vld [vmem:[%s1 + $0x30] sm:$0xff]
    %v51 = vld [vmem:[%s1 + $0x38] sm:$0xff]
    %v52 = vld [vmem:[%s2] sm:$0xff]
    %v53 = vld [vmem:[%s2 + $0x8] sm:$0xff]
    %v54 = vld [vmem:[%s2 + $0x10] sm:$0xff]
    %v55 = vld [vmem:[%s2 + $0x18] sm:$0xff]
    %v56 = vld [vmem:[%s2 + $0x20] sm:$0xff]
    %v57 = vld [vmem:[%s2 + $0x28] sm:$0xff]
    %v58 = vld [vmem:[%s2 + $0x30] sm:$0xff]
    %v59 = vld [vmem:[%s2 + $0x38] sm:$0xff]
    %61 = vset.pattern.permute.xlu0 0
    %62 = vperm.xlu0 %61, %v52
    %v63 = vpop.permute.xlu0 %62
    %66 = vset.pattern.permute.xlu0 0
    %67 = vperm.xlu0 %66, %v53
    %v68 = vpop.permute.xlu0 %67
    %71 = vset.pattern.permute.xlu0 0
    %72 = vperm.xlu0 %71, %v54
    %v73 = vpop.permute.xlu0 %72
    %76 = vset.pattern.permute.xlu0 0
    %77 = vperm.xlu0 %76, %v55
    %v78 = vpop.permute.xlu0 %77
    %81 = vset.pattern.permute.xlu0 0
    %82 = vperm.xlu0 %81, %v56
    %v83 = vpop.permute.xlu0 %82
    %86 = vset.pattern.permute.xlu0 0
    %87 = vperm.xlu0 %86, %v57
    %v88 = vpop.permute.xlu0 %87
    %91 = vset.pattern.permute.xlu0 0
    %92 = vperm.xlu0 %91, %v58
    %v93 = vpop.permute.xlu0 %92
    %96 = vset.pattern.permute.xlu0 0
    %97 = vperm.xlu0 %96, %v59
    %v98 = vpop.permute.xlu0 %97
    %vm100 = vcmask 130048
    %v102 = vsel %vm100, %v44, 0
    %v105 = vsel %vm100, %v45, 0
    %v108 = vsel %vm100, %v46, 0
    %v111 = vsel %vm100, %v47, 0
    %v114 = vsel %vm100, %v48, 0
    %v117 = vsel %vm100, %v49, 0
    %v120 = vsel %vm100, %v50, 0
    %v123 = vsel %vm100, %v51, 0
    %v126 = vsel %vm100, %v28, 0
    %v129 = vsel %vm100, %v29, 0
    %v132 = vsel %vm100, %v30, 0
    %v135 = vsel %vm100, %v31, 0
    %v138 = vsel %vm100, %v32, 0
    %v141 = vsel %vm100, %v33, 0
    %v144 = vsel %vm100, %v34, 0
    %v147 = vsel %vm100, %v35, 0
    %v150 = vsel %vm100, %v36, 0
    %v153 = vsel %vm100, %v37, 0
    %v156 = vsel %vm100, %v38, 0
    %v159 = vsel %vm100, %v39, 0
    %v162 = vsel %vm100, %v40, 0
    %v165 = vsel %vm100, %v41, 0
    %v168 = vsel %vm100, %v42, 0
    %v171 = vsel %vm100, %v43, 0
    %173 = vmatprep.subr.mxu0 0.0
    %v174 = vand.u32 %v171, 4294901760
    %175 = vmatpush1.xpose.msra.mxu0 %v174
    %176 = vmatprep.subr.mxu0 0.0
    %v177 = vand.u32 %v168, 4294901760
    %178 = vmatpush1.xpose.msra.mxu0 %v177
    %179 = vmatprep.subr.mxu0 0.0
    %v180 = vand.u32 %v165, 4294901760
    %181 = vmatpush1.xpose.msra.mxu0 %v180
    %182 = vmatprep.subr.mxu0 0.0
    %v183 = vand.u32 %v162, 4294901760
    %184 = vmatpush1.xpose.msra.mxu0 %v183
    %185 = vmatprep.subr.mxu0 0.0
    %v186 = vand.u32 %v159, 4294901760
    %187 = vmatpush1.xpose.msra.mxu0 %v186
    %188 = vmatprep.subr.mxu0 0.0
    %v189 = vand.u32 %v156, 4294901760
    %190 = vmatpush1.xpose.msra.mxu0 %v189
    %191 = vmatprep.subr.mxu0 0.0
    %v192 = vand.u32 %v153, 4294901760
    %193 = vmatpush1.xpose.msra.mxu0 %v192
    %194 = vmatprep.subr.mxu0 0.0
    %v195 = vand.u32 %v150, 4294901760
    %196 = vmatpush1.xpose.msra.mxu0 %v195
    %197 = vmatprep.subr.mxu0 0.0
    %v198 = vand.u32 %v147, 4294901760
    %199 = vmatpush1.xpose.msra.mxu0 %v198
    %200 = vmatprep.subr.mxu0 0.0
    %v201 = vand.u32 %v144, 4294901760
    %202 = vmatpush1.xpose.msra.mxu0 %v201
    %203 = vmatprep.subr.mxu0 0.0
    %v204 = vand.u32 %v141, 4294901760
    %205 = vmatpush1.xpose.msra.mxu0 %v204
    %206 = vmatprep.subr.mxu0 0.0
    %v207 = vand.u32 %v138, 4294901760
    %208 = vmatpush1.xpose.msra.mxu0 %v207
    %209 = vmatprep.subr.mxu0 0.0
    %v210 = vand.u32 %v135, 4294901760
    %211 = vmatpush1.xpose.msra.mxu0 %v210
    %212 = vmatprep.subr.mxu0 0.0
    %v213 = vand.u32 %v132, 4294901760
    %214 = vmatpush1.xpose.msra.mxu0 %v213
    %215 = vmatprep.subr.mxu0 0.0
    %v216 = vand.u32 %v129, 4294901760
    %217 = vmatpush1.xpose.msra.mxu0 %v216
    %218 = vmatprep.subr.mxu0 0.0
    %v219 = vand.u32 %v126, 4294901760
    %220 = vmatpush1.xpose.msra.mxu0 %v219
    %221 = vmatprep.subr.mxu0 0.0
    %222 = vmatpush2.xpose.msra.mxu0 0.0
    %223 = vmatprep.subr.mxu0 0.0
    %224 = vmatpush2.xpose.msra.mxu0 0.0
    %225 = vmatprep.subr.mxu0 0.0
    %226 = vmatpush2.xpose.msra.mxu0 0.0
    %227 = vmatprep.subr.mxu0 0.0
    %228 = vmatpush2.xpose.msra.mxu0 0.0
    %229 = vmatprep.subr.mxu0 0.0
    %230 = vmatpush2.xpose.msra.mxu0 0.0
    %231 = vmatprep.subr.mxu0 0.0
    %232 = vmatpush2.xpose.msra.mxu0 0.0
    %233 = vmatprep.subr.mxu0 0.0
    %234 = vmatpush2.xpose.msra.mxu0 0.0
    %235 = vmatprep.subr.mxu0 0.0
    %236 = vmatpush2.xpose.msra.mxu0 0.0
    %237 = vmatprep.subr.mxu0 0.0
    %238 = vmatpush2.xpose.msra.mxu0 0.0
    %239 = vmatprep.subr.mxu0 0.0
    %240 = vmatpush2.xpose.msra.mxu0 0.0
    %241 = vmatprep.subr.mxu0 0.0
    %242 = vmatpush2.xpose.msra.mxu0 0.0
    %243 = vmatprep.subr.mxu0 0.0
    %244 = vmatpush2.xpose.msra.mxu0 0.0
    %245 = vmatprep.subr.mxu0 0.0
    %246 = vmatpush2.xpose.msra.mxu0 0.0
    %247 = vmatprep.subr.mxu0 0.0
    %248 = vmatpush2.xpose.msra.mxu0 0.0
    %249 = vmatprep.subr.mxu0 0.0
    %250 = vmatpush2.xpose.msra.mxu0 0.0
    %251 = vmatprep.subr.mxu0 0.0
    %252 = vmatpush2.xpose.msra.mxu0 0.0
    %253 = vmatprep.mubr.f32.mxu0 0.0
    %v254 = vand.u32 %v102, 4294901760
    %v255 = vsub.f32 %v102, %v254
    %v256 = vand.u32 %v255, 4294901760
    %v257 = vsub.f32 %v255, %v256
    %v258 = vand.u32 %v257, 4294901760
    %259 = vmatmul.mubr.f32.gmra.mxu0 %v258
    %v260 = vpop.f32.mrf.mxu0
    %v261 = vadd.f32 %v63, %v260
    %v262 = vpop.f32.mrf.mxu0
    %263 = vmatprep.mubr.f32.mxu0 0.0
    %v264 = vand.u32 %v105, 4294901760
    %v265 = vsub.f32 %v105, %v264
    %v266 = vand.u32 %v265, 4294901760
    %v267 = vsub.f32 %v265, %v266
    %v268 = vand.u32 %v267, 4294901760
    %269 = vmatmul.mubr.f32.gmra.mxu0 %v268
    %v270 = vpop.f32.mrf.mxu0
    %v271 = vadd.f32 %v68, %v270
    %v272 = vpop.f32.mrf.mxu0
    %273 = vmatprep.mubr.f32.mxu0 0.0
    %v274 = vand.u32 %v108, 4294901760
    %v275 = vsub.f32 %v108, %v274
    %v276 = vand.u32 %v275, 4294901760
    %v277 = vsub.f32 %v275, %v276
    %v278 = vand.u32 %v277, 4294901760
    %279 = vmatmul.mubr.f32.gmra.mxu0 %v278
    %v280 = vpop.f32.mrf.mxu0
    %v281 = vadd.f32 %v73, %v280
    %v282 = vpop.f32.mrf.mxu0
    %283 = vmatprep.mubr.f32.mxu0 0.0
    %v284 = vand.u32 %v111, 4294901760
    %v285 = vsub.f32 %v111, %v284
    %v286 = vand.u32 %v285, 4294901760
    %v287 = vsub.f32 %v285, %v286
    %v288 = vand.u32 %v287, 4294901760
    %289 = vmatmul.mubr.f32.gmra.mxu0 %v288
    %v290 = vpop.f32.mrf.mxu0
    %v291 = vadd.f32 %v78, %v290
    %v292 = vpop.f32.mrf.mxu0
    %293 = vmatprep.mubr.f32.mxu0 0.0
    %v294 = vand.u32 %v114, 4294901760
    %v295 = vsub.f32 %v114, %v294
    %v296 = vand.u32 %v295, 4294901760
    %v297 = vsub.f32 %v295, %v296
    %v298 = vand.u32 %v297, 4294901760
    %299 = vmatmul.mubr.f32.gmra.mxu0 %v298
    %v300 = vpop.f32.mrf.mxu0
    %v301 = vadd.f32 %v83, %v300
    %v302 = vpop.f32.mrf.mxu0
    %303 = vmatprep.mubr.f32.mxu0 0.0
    %v304 = vand.u32 %v117, 4294901760
    %v305 = vsub.f32 %v117, %v304
    %v306 = vand.u32 %v305, 4294901760
    %v307 = vsub.f32 %v305, %v306
    %v308 = vand.u32 %v307, 4294901760
    %309 = vmatmul.mubr.f32.gmra.mxu0 %v308
    %v310 = vpop.f32.mrf.mxu0
    %v311 = vadd.f32 %v88, %v310
    %v312 = vpop.f32.mrf.mxu0
    %313 = vmatprep.mubr.f32.mxu0 0.0
    %v314 = vand.u32 %v120, 4294901760
    %v315 = vsub.f32 %v120, %v314
    %v316 = vand.u32 %v315, 4294901760
    %v317 = vsub.f32 %v315, %v316
    %v318 = vand.u32 %v317, 4294901760
    %319 = vmatmul.mubr.f32.gmra.mxu0 %v318
    %v320 = vpop.f32.mrf.mxu0
    %v321 = vadd.f32 %v93, %v320
    %v322 = vpop.f32.mrf.mxu0
    %323 = vmatprep.mubr.f32.mxu0 0.0
    %v324 = vand.u32 %v123, 4294901760
    %v325 = vsub.f32 %v123, %v324
    %v326 = vand.u32 %v325, 4294901760
    %v327 = vsub.f32 %v325, %v326
    %v328 = vand.u32 %v327, 4294901760
    %329 = vmatmul.mubr.f32.gmra.mxu0 %v328
    %v330 = vpop.f32.mrf.mxu0
    %v331 = vadd.f32 %v98, %v330
    %v332 = vpop.f32.mrf.mxu0
    %333 = vdwg.mxu0
    %334 = vmatprep.subr.mxu0 0.0
    %v335 = vand.u32 %v171, 4294901760
    %v336 = vsub.f32 %v171, %v335
    %v337 = vand.u32 %v336, 4294901760
    %v338 = vsub.f32 %v336, %v337
    %v339 = vand.u32 %v338, 4294901760
    %340 = vmatpush1.xpose.msra.mxu0 %v339
    %341 = vmatprep.subr.mxu0 0.0
    %v342 = vand.u32 %v168, 4294901760
    %v343 = vsub.f32 %v168, %v342
    %v344 = vand.u32 %v343, 4294901760
    %v345 = vsub.f32 %v343, %v344
    %v346 = vand.u32 %v345, 4294901760
    %347 = vmatpush1.xpose.msra.mxu0 %v346
    %348 = vmatprep.subr.mxu0 0.0
    %v349 = vand.u32 %v165, 4294901760
    %v350 = vsub.f32 %v165, %v349
    %v351 = vand.u32 %v350, 4294901760
    %v352 = vsub.f32 %v350, %v351
    %v353 = vand.u32 %v352, 4294901760
    %354 = vmatpush1.xpose.msra.mxu0 %v353
    %355 = vmatprep.subr.mxu0 0.0
    %v356 = vand.u32 %v162, 4294901760
    %v357 = vsub.f32 %v162, %v356
    %v358 = vand.u32 %v357, 4294901760
    %v359 = vsub.f32 %v357, %v358
    %v360 = vand.u32 %v359, 4294901760
    %361 = vmatpush1.xpose.msra.mxu0 %v360
    %362 = vmatprep.subr.mxu0 0.0
    %v363 = vand.u32 %v159, 4294901760
    %v364 = vsub.f32 %v159, %v363
    %v365 = vand.u32 %v364, 4294901760
    %v366 = vsub.f32 %v364, %v365
    %v367 = vand.u32 %v366, 4294901760
    %368 = vmatpush1.xpose.msra.mxu0 %v367
    %369 = vmatprep.subr.mxu0 0.0
    %v370 = vand.u32 %v156, 4294901760
    %v371 = vsub.f32 %v156, %v370
    %v372 = vand.u32 %v371, 4294901760
    %v373 = vsub.f32 %v371, %v372
    %v374 = vand.u32 %v373, 4294901760
    %375 = vmatpush1.xpose.msra.mxu0 %v374
    %376 = vmatprep.subr.mxu0 0.0
    %v377 = vand.u32 %v153, 4294901760
    %v378 = vsub.f32 %v153, %v377
    %v379 = vand.u32 %v378, 4294901760
    %v380 = vsub.f32 %v378, %v379
    %v381 = vand.u32 %v380, 4294901760
    %382 = vmatpush1.xpose.msra.mxu0 %v381
    %383 = vmatprep.subr.mxu0 0.0
    %v384 = vand.u32 %v150, 4294901760
    %v385 = vsub.f32 %v150, %v384
    %v386 = vand.u32 %v385, 4294901760
    %v387 = vsub.f32 %v385, %v386
    %v388 = vand.u32 %v387, 4294901760
    %389 = vmatpush1.xpose.msra.mxu0 %v388
    %390 = vmatprep.subr.mxu0 0.0
    %v391 = vand.u32 %v147, 4294901760
    %v392 = vsub.f32 %v147, %v391
    %v393 = vand.u32 %v392, 4294901760
    %v394 = vsub.f32 %v392, %v393
    %v395 = vand.u32 %v394, 4294901760
    %396 = vmatpush1.xpose.msra.mxu0 %v395
    %397 = vmatprep.subr.mxu0 0.0
    %v398 = vand.u32 %v144, 4294901760
    %v399 = vsub.f32 %v144, %v398
    %v400 = vand.u32 %v399, 4294901760
    %v401 = vsub.f32 %v399, %v400
    %v402 = vand.u32 %v401, 4294901760
    %403 = vmatpush1.xpose.msra.mxu0 %v402
    %404 = vmatprep.subr.mxu0 0.0
    %v405 = vand.u32 %v141, 4294901760
    %v406 = vsub.f32 %v141, %v405
    %v407 = vand.u32 %v406, 4294901760
    %v408 = vsub.f32 %v406, %v407
    %v409 = vand.u32 %v408, 4294901760
    %410 = vmatpush1.xpose.msra.mxu0 %v409
    %411 = vmatprep.subr.mxu0 0.0
    %v412 = vand.u32 %v138, 4294901760
    %v413 = vsub.f32 %v138, %v412
    %v414 = vand.u32 %v413, 4294901760
    %v415 = vsub.f32 %v413, %v414
    %v416 = vand.u32 %v415, 4294901760
    %417 = vmatpush1.xpose.msra.mxu0 %v416
    %418 = vmatprep.subr.mxu0 0.0
    %v419 = vand.u32 %v135, 4294901760
    %v420 = vsub.f32 %v135, %v419
    %v421 = vand.u32 %v420, 4294901760
    %v422 = vsub.f32 %v420, %v421
    %v423 = vand.u32 %v422, 4294901760
    %424 = vmatpush1.xpose.msra.mxu0 %v423
    %425 = vmatprep.subr.mxu0 0.0
    %v426 = vand.u32 %v132, 4294901760
    %v427 = vsub.f32 %v132, %v426
    %v428 = vand.u32 %v427, 4294901760
    %v429 = vsub.f32 %v427, %v428
    %v430 = vand.u32 %v429, 4294901760
    %431 = vmatpush1.xpose.msra.mxu0 %v430
    %432 = vmatprep.subr.mxu0 0.0
    %v433 = vand.u32 %v129, 4294901760
    %v434 = vsub.f32 %v129, %v433
    %v435 = vand.u32 %v434, 4294901760
    %v436 = vsub.f32 %v434, %v435
    %v437 = vand.u32 %v436, 4294901760
    %438 = vmatpush1.xpose.msra.mxu0 %v437
    %439 = vmatprep.subr.mxu0 0.0
    %v440 = vand.u32 %v126, 4294901760
    %v441 = vsub.f32 %v126, %v440
    %v442 = vand.u32 %v441, 4294901760
    %v443 = vsub.f32 %v441, %v442
    %v444 = vand.u32 %v443, 4294901760
    %445 = vmatpush1.xpose.msra.mxu0 %v444
    %446 = vmatprep.subr.mxu0 0.0
    %447 = vmatpush2.xpose.msra.mxu0 0.0
    %448 = vmatprep.subr.mxu0 0.0
    %449 = vmatpush2.xpose.msra.mxu0 0.0
    %450 = vmatprep.subr.mxu0 0.0
    %451 = vmatpush2.xpose.msra.mxu0 0.0
    %452 = vmatprep.subr.mxu0 0.0
    %453 = vmatpush2.xpose.msra.mxu0 0.0
    %454 = vmatprep.subr.mxu0 0.0
    %455 = vmatpush2.xpose.msra.mxu0 0.0
    %456 = vmatprep.subr.mxu0 0.0
    %457 = vmatpush2.xpose.msra.mxu0 0.0
    %458 = vmatprep.subr.mxu0 0.0
    %459 = vmatpush2.xpose.msra.mxu0 0.0
    %460 = vmatprep.subr.mxu0 0.0
    %461 = vmatpush2.xpose.msra.mxu0 0.0
    %462 = vmatprep.subr.mxu0 0.0
    %463 = vmatpush2.xpose.msra.mxu0 0.0
    %464 = vmatprep.subr.mxu0 0.0
    %465 = vmatpush2.xpose.msra.mxu0 0.0
    %466 = vmatprep.subr.mxu0 0.0
    %467 = vmatpush2.xpose.msra.mxu0 0.0
    %468 = vmatprep.subr.mxu0 0.0
    %469 = vmatpush2.xpose.msra.mxu0 0.0
    %470 = vmatprep.subr.mxu0 0.0
    %471 = vmatpush2.xpose.msra.mxu0 0.0
    %472 = vmatprep.subr.mxu0 0.0
    %473 = vmatpush2.xpose.msra.mxu0 0.0
    %474 = vmatprep.subr.mxu0 0.0
    %475 = vmatpush2.xpose.msra.mxu0 0.0
    %476 = vmatprep.subr.mxu0 0.0
    %477 = vmatpush2.xpose.msra.mxu0 0.0
    %478 = vmatprep.mubr.f32.mxu0 0.0
    %v479 = vand.u32 %v102, 4294901760
    %480 = vmatmul.mubr.f32.gmra.mxu0 %v479
    %v481 = vpop.f32.mrf.mxu0
    %v482 = vadd.f32 %v261, %v481
    %v483 = vpop.f32.mrf.mxu0
    %484 = vmatprep.mubr.f32.mxu0 0.0
    %v485 = vand.u32 %v105, 4294901760
    %486 = vmatmul.mubr.f32.gmra.mxu0 %v485
    %v487 = vpop.f32.mrf.mxu0
    %v488 = vadd.f32 %v271, %v487
    %v489 = vpop.f32.mrf.mxu0
    %490 = vmatprep.mubr.f32.mxu0 0.0
    %v491 = vand.u32 %v108, 4294901760
    %492 = vmatmul.mubr.f32.gmra.mxu0 %v491
    %v493 = vpop.f32.mrf.mxu0
    %v494 = vadd.f32 %v281, %v493
    %v495 = vpop.f32.mrf.mxu0
    %496 = vmatprep.mubr.f32.mxu0 0.0
    %v497 = vand.u32 %v111, 4294901760
    %498 = vmatmul.mubr.f32.gmra.mxu0 %v497
    %v499 = vpop.f32.mrf.mxu0
    %v500 = vadd.f32 %v291, %v499
    %v501 = vpop.f32.mrf.mxu0
    %502 = vmatprep.mubr.f32.mxu0 0.0
    %v503 = vand.u32 %v114, 4294901760
    %504 = vmatmul.mubr.f32.gmra.mxu0 %v503
    %v505 = vpop.f32.mrf.mxu0
    %v506 = vadd.f32 %v301, %v505
    %v507 = vpop.f32.mrf.mxu0
    %508 = vmatprep.mubr.f32.mxu0 0.0
    %v509 = vand.u32 %v117, 4294901760
    %510 = vmatmul.mubr.f32.gmra.mxu0 %v509
    %v511 = vpop.f32.mrf.mxu0
    %v512 = vadd.f32 %v311, %v511
    %v513 = vpop.f32.mrf.mxu0
    %514 = vmatprep.mubr.f32.mxu0 0.0
    %v515 = vand.u32 %v120, 4294901760
    %516 = vmatmul.mubr.f32.gmra.mxu0 %v515
    %v517 = vpop.f32.mrf.mxu0
    %v518 = vadd.f32 %v321, %v517
    %v519 = vpop.f32.mrf.mxu0
    %520 = vmatprep.mubr.f32.mxu0 0.0
    %v521 = vand.u32 %v123, 4294901760
    %522 = vmatmul.mubr.f32.gmra.mxu0 %v521
    %v523 = vpop.f32.mrf.mxu0
    %v524 = vadd.f32 %v331, %v523
    %v525 = vpop.f32.mrf.mxu0
    %526 = vdwg.mxu0
    %527 = vmatprep.subr.mxu0 0.0
    %v528 = vand.u32 %v171, 4294901760
    %v529 = vsub.f32 %v171, %v528
    %530 = vmatpush1.xpose.msra.mxu0 %v529
    %531 = vmatprep.subr.mxu0 0.0
    %v532 = vand.u32 %v168, 4294901760
    %v533 = vsub.f32 %v168, %v532
    %534 = vmatpush1.xpose.msra.mxu0 %v533
    %535 = vmatprep.subr.mxu0 0.0
    %v536 = vand.u32 %v165, 4294901760
    %v537 = vsub.f32 %v165, %v536
    %538 = vmatpush1.xpose.msra.mxu0 %v537
    %539 = vmatprep.subr.mxu0 0.0
    %v540 = vand.u32 %v162, 4294901760
    %v541 = vsub.f32 %v162, %v540
    %542 = vmatpush1.xpose.msra.mxu0 %v541
    %543 = vmatprep.subr.mxu0 0.0
    %v544 = vand.u32 %v159, 4294901760
    %v545 = vsub.f32 %v159, %v544
    %546 = vmatpush1.xpose.msra.mxu0 %v545
    %547 = vmatprep.subr.mxu0 0.0
    %v548 = vand.u32 %v156, 4294901760
    %v549 = vsub.f32 %v156, %v548
    %550 = vmatpush1.xpose.msra.mxu0 %v549
    %551 = vmatprep.subr.mxu0 0.0
    %v552 = vand.u32 %v153, 4294901760
    %v553 = vsub.f32 %v153, %v552
    %554 = vmatpush1.xpose.msra.mxu0 %v553
    %555 = vmatprep.subr.mxu0 0.0
    %v556 = vand.u32 %v150, 4294901760
    %v557 = vsub.f32 %v150, %v556
    %558 = vmatpush1.xpose.msra.mxu0 %v557
    %559 = vmatprep.subr.mxu0 0.0
    %v560 = vand.u32 %v147, 4294901760
    %v561 = vsub.f32 %v147, %v560
    %562 = vmatpush1.xpose.msra.mxu0 %v561
    %563 = vmatprep.subr.mxu0 0.0
    %v564 = vand.u32 %v144, 4294901760
    %v565 = vsub.f32 %v144, %v564
    %566 = vmatpush1.xpose.msra.mxu0 %v565
    %567 = vmatprep.subr.mxu0 0.0
    %v568 = vand.u32 %v141, 4294901760
    %v569 = vsub.f32 %v141, %v568
    %570 = vmatpush1.xpose.msra.mxu0 %v569
    %571 = vmatprep.subr.mxu0 0.0
    %v572 = vand.u32 %v138, 4294901760
    %v573 = vsub.f32 %v138, %v572
    %574 = vmatpush1.xpose.msra.mxu0 %v573
    %575 = vmatprep.subr.mxu0 0.0
    %v576 = vand.u32 %v135, 4294901760
    %v577 = vsub.f32 %v135, %v576
    %578 = vmatpush1.xpose.msra.mxu0 %v577
    %579 = vmatprep.subr.mxu0 0.0
    %v580 = vand.u32 %v132, 4294901760
    %v581 = vsub.f32 %v132, %v580
    %582 = vmatpush1.xpose.msra.mxu0 %v581
    %583 = vmatprep.subr.mxu0 0.0
    %v584 = vand.u32 %v129, 4294901760
    %v585 = vsub.f32 %v129, %v584
    %586 = vmatpush1.xpose.msra.mxu0 %v585
    %587 = vmatprep.subr.mxu0 0.0
    %v588 = vand.u32 %v126, 4294901760
    %v589 = vsub.f32 %v126, %v588
    %590 = vmatpush1.xpose.msra.mxu0 %v589
    %591 = vmatprep.subr.mxu0 0.0
    %592 = vmatpush2.xpose.msra.mxu0 0.0
    %593 = vmatprep.subr.mxu0 0.0
    %594 = vmatpush2.xpose.msra.mxu0 0.0
    %595 = vmatprep.subr.mxu0 0.0
    %596 = vmatpush2.xpose.msra.mxu0 0.0
    %597 = vmatprep.subr.mxu0 0.0
    %598 = vmatpush2.xpose.msra.mxu0 0.0
    %599 = vmatprep.subr.mxu0 0.0
    %600 = vmatpush2.xpose.msra.mxu0 0.0
    %601 = vmatprep.subr.mxu0 0.0
    %602 = vmatpush2.xpose.msra.mxu0 0.0
    %603 = vmatprep.subr.mxu0 0.0
    %604 = vmatpush2.xpose.msra.mxu0 0.0
    %605 = vmatprep.subr.mxu0 0.0
    %606 = vmatpush2.xpose.msra.mxu0 0.0
    %607 = vmatprep.subr.mxu0 0.0
    %608 = vmatpush2.xpose.msra.mxu0 0.0
    %609 = vmatprep.subr.mxu0 0.0
    %610 = vmatpush2.xpose.msra.mxu0 0.0
    %611 = vmatprep.subr.mxu0 0.0
    %612 = vmatpush2.xpose.msra.mxu0 0.0
    %613 = vmatprep.subr.mxu0 0.0
    %614 = vmatpush2.xpose.msra.mxu0 0.0
    %615 = vmatprep.subr.mxu0 0.0
    %616 = vmatpush2.xpose.msra.mxu0 0.0
    %617 = vmatprep.subr.mxu0 0.0
    %618 = vmatpush2.xpose.msra.mxu0 0.0
    %619 = vmatprep.subr.mxu0 0.0
    %620 = vmatpush2.xpose.msra.mxu0 0.0
    %621 = vmatprep.subr.mxu0 0.0
    %622 = vmatpush2.xpose.msra.mxu0 0.0
    %623 = vmatprep.mubr.f32.mxu0 0.0
    %v624 = vand.u32 %v102, 4294901760
    %v625 = vsub.f32 %v102, %v624
    %626 = vmatmul.mubr.f32.gmra.mxu0 %v625
    %v627 = vpop.f32.mrf.mxu0
    %v628 = vadd.f32 %v482, %v627
    %v629 = vpop.f32.mrf.mxu0
    %630 = vmatprep.mubr.f32.mxu0 0.0
    %v631 = vand.u32 %v105, 4294901760
    %v632 = vsub.f32 %v105, %v631
    %633 = vmatmul.mubr.f32.gmra.mxu0 %v632
    %v634 = vpop.f32.mrf.mxu0
    %v635 = vadd.f32 %v488, %v634
    %v636 = vpop.f32.mrf.mxu0
    %637 = vmatprep.mubr.f32.mxu0 0.0
    %v638 = vand.u32 %v108, 4294901760
    %v639 = vsub.f32 %v108, %v638
    %640 = vmatmul.mubr.f32.gmra.mxu0 %v639
    %v641 = vpop.f32.mrf.mxu0
    %v642 = vadd.f32 %v494, %v641
    %v643 = vpop.f32.mrf.mxu0
    %644 = vmatprep.mubr.f32.mxu0 0.0
    %v645 = vand.u32 %v111, 4294901760
    %v646 = vsub.f32 %v111, %v645
    %647 = vmatmul.mubr.f32.gmra.mxu0 %v646
    %v648 = vpop.f32.mrf.mxu0
    %v649 = vadd.f32 %v500, %v648
    %v650 = vpop.f32.mrf.mxu0
    %651 = vmatprep.mubr.f32.mxu0 0.0
    %v652 = vand.u32 %v114, 4294901760
    %v653 = vsub.f32 %v114, %v652
    %654 = vmatmul.mubr.f32.gmra.mxu0 %v653
    %v655 = vpop.f32.mrf.mxu0
    %v656 = vadd.f32 %v506, %v655
    %v657 = vpop.f32.mrf.mxu0
    %658 = vmatprep.mubr.f32.mxu0 0.0
    %v659 = vand.u32 %v117, 4294901760
    %v660 = vsub.f32 %v117, %v659
    %661 = vmatmul.mubr.f32.gmra.mxu0 %v660
    %v662 = vpop.f32.mrf.mxu0
    %v663 = vadd.f32 %v512, %v662
    %v664 = vpop.f32.mrf.mxu0
    %665 = vmatprep.mubr.f32.mxu0 0.0
    %v666 = vand.u32 %v120, 4294901760
    %v667 = vsub.f32 %v120, %v666
    %668 = vmatmul.mubr.f32.gmra.mxu0 %v667
    %v669 = vpop.f32.mrf.mxu0
    %v670 = vadd.f32 %v518, %v669
    %v671 = vpop.f32.mrf.mxu0
    %672 = vmatprep.mubr.f32.mxu0 0.0
    %v673 = vand.u32 %v123, 4294901760
    %v674 = vsub.f32 %v123, %v673
    %675 = vmatmul.mubr.f32.gmra.mxu0 %v674
    %v676 = vpop.f32.mrf.mxu0
    %v677 = vadd.f32 %v524, %v676
    %v678 = vpop.f32.mrf.mxu0
    %679 = vdwg.mxu0
    %680 = vmatprep.subr.mxu0 0.0
    %v681 = vand.u32 %v171, 4294901760
    %682 = vmatpush1.xpose.msra.mxu0 %v681
    %683 = vmatprep.subr.mxu0 0.0
    %v684 = vand.u32 %v168, 4294901760
    %685 = vmatpush1.xpose.msra.mxu0 %v684
    %686 = vmatprep.subr.mxu0 0.0
    %v687 = vand.u32 %v165, 4294901760
    %688 = vmatpush1.xpose.msra.mxu0 %v687
    %689 = vmatprep.subr.mxu0 0.0
    %v690 = vand.u32 %v162, 4294901760
    %691 = vmatpush1.xpose.msra.mxu0 %v690
    %692 = vmatprep.subr.mxu0 0.0
    %v693 = vand.u32 %v159, 4294901760
    %694 = vmatpush1.xpose.msra.mxu0 %v693
    %695 = vmatprep.subr.mxu0 0.0
    %v696 = vand.u32 %v156, 4294901760
    %697 = vmatpush1.xpose.msra.mxu0 %v696
    %698 = vmatprep.subr.mxu0 0.0
    %v699 = vand.u32 %v153, 4294901760
    %700 = vmatpush1.xpose.msra.mxu0 %v699
    %701 = vmatprep.subr.mxu0 0.0
    %v702 = vand.u32 %v150, 4294901760
    %703 = vmatpush1.xpose.msra.mxu0 %v702
    %704 = vmatprep.subr.mxu0 0.0
    %v705 = vand.u32 %v147, 4294901760
    %706 = vmatpush1.xpose.msra.mxu0 %v705
    %707 = vmatprep.subr.mxu0 0.0
    %v708 = vand.u32 %v144, 4294901760
    %709 = vmatpush1.xpose.msra.mxu0 %v708
    %710 = vmatprep.subr.mxu0 0.0
    %v711 = vand.u32 %v141, 4294901760
    %712 = vmatpush1.xpose.msra.mxu0 %v711
    %713 = vmatprep.subr.mxu0 0.0
    %v714 = vand.u32 %v138, 4294901760
    %715 = vmatpush1.xpose.msra.mxu0 %v714
    %716 = vmatprep.subr.mxu0 0.0
    %v717 = vand.u32 %v135, 4294901760
    %718 = vmatpush1.xpose.msra.mxu0 %v717
    %719 = vmatprep.subr.mxu0 0.0
    %v720 = vand.u32 %v132, 4294901760
    %721 = vmatpush1.xpose.msra.mxu0 %v720
    %722 = vmatprep.subr.mxu0 0.0
    %v723 = vand.u32 %v129, 4294901760
    %724 = vmatpush1.xpose.msra.mxu0 %v723
    %725 = vmatprep.subr.mxu0 0.0
    %v726 = vand.u32 %v126, 4294901760
    %727 = vmatpush1.xpose.msra.mxu0 %v726
    %728 = vmatprep.subr.mxu0 0.0
    %729 = vmatpush2.xpose.msra.mxu0 0.0
    %730 = vmatprep.subr.mxu0 0.0
    %731 = vmatpush2.xpose.msra.mxu0 0.0
    %732 = vmatprep.subr.mxu0 0.0
    %733 = vmatpush2.xpose.msra.mxu0 0.0
    %734 = vmatprep.subr.mxu0 0.0
    %735 = vmatpush2.xpose.msra.mxu0 0.0
    %736 = vmatprep.subr.mxu0 0.0
    %737 = vmatpush2.xpose.msra.mxu0 0.0
    %738 = vmatprep.subr.mxu0 0.0
    %739 = vmatpush2.xpose.msra.mxu0 0.0
    %740 = vmatprep.subr.mxu0 0.0
    %741 = vmatpush2.xpose.msra.mxu0 0.0
    %742 = vmatprep.subr.mxu0 0.0
    %743 = vmatpush2.xpose.msra.mxu0 0.0
    %744 = vmatprep.subr.mxu0 0.0
    %745 = vmatpush2.xpose.msra.mxu0 0.0
    %746 = vmatprep.subr.mxu0 0.0
    %747 = vmatpush2.xpose.msra.mxu0 0.0
    %748 = vmatprep.subr.mxu0 0.0
    %749 = vmatpush2.xpose.msra.mxu0 0.0
    %750 = vmatprep.subr.mxu0 0.0
    %751 = vmatpush2.xpose.msra.mxu0 0.0
    %752 = vmatprep.subr.mxu0 0.0
    %753 = vmatpush2.xpose.msra.mxu0 0.0
    %754 = vmatprep.subr.mxu0 0.0
    %755 = vmatpush2.xpose.msra.mxu0 0.0
    %756 = vmatprep.subr.mxu0 0.0
    %757 = vmatpush2.xpose.msra.mxu0 0.0
    %758 = vmatprep.subr.mxu0 0.0
    %759 = vmatpush2.xpose.msra.mxu0 0.0
    %760 = vmatprep.mubr.f32.mxu0 0.0
    %v761 = vand.u32 %v102, 4294901760
    %v762 = vsub.f32 %v102, %v761
    %v763 = vand.u32 %v762, 4294901760
    %764 = vmatmul.mubr.f32.gmra.mxu0 %v763
    %v765 = vpop.f32.mrf.mxu0
    %v766 = vadd.f32 %v628, %v765
    %v767 = vpop.f32.mrf.mxu0
    %768 = vmatprep.mubr.f32.mxu0 0.0
    %v769 = vand.u32 %v105, 4294901760
    %v770 = vsub.f32 %v105, %v769
    %v771 = vand.u32 %v770, 4294901760
    %772 = vmatmul.mubr.f32.gmra.mxu0 %v771
    %v773 = vpop.f32.mrf.mxu0
    %v774 = vadd.f32 %v635, %v773
    %v775 = vpop.f32.mrf.mxu0
    %776 = vmatprep.mubr.f32.mxu0 0.0
    %v777 = vand.u32 %v108, 4294901760
    %v778 = vsub.f32 %v108, %v777
    %v779 = vand.u32 %v778, 4294901760
    %780 = vmatmul.mubr.f32.gmra.mxu0 %v779
    %v781 = vpop.f32.mrf.mxu0
    %v782 = vadd.f32 %v642, %v781
    %v783 = vpop.f32.mrf.mxu0
    %784 = vmatprep.mubr.f32.mxu0 0.0
    %v785 = vand.u32 %v111, 4294901760
    %v786 = vsub.f32 %v111, %v785
    %v787 = vand.u32 %v786, 4294901760
    %788 = vmatmul.mubr.f32.gmra.mxu0 %v787
    %v789 = vpop.f32.mrf.mxu0
    %v790 = vadd.f32 %v649, %v789
    %v791 = vpop.f32.mrf.mxu0
    %792 = vmatprep.mubr.f32.mxu0 0.0
    %v793 = vand.u32 %v114, 4294901760
    %v794 = vsub.f32 %v114, %v793
    %v795 = vand.u32 %v794, 4294901760
    %796 = vmatmul.mubr.f32.gmra.mxu0 %v795
    %v797 = vpop.f32.mrf.mxu0
    %v798 = vadd.f32 %v656, %v797
    %v799 = vpop.f32.mrf.mxu0
    %800 = vmatprep.mubr.f32.mxu0 0.0
    %v801 = vand.u32 %v117, 4294901760
    %v802 = vsub.f32 %v117, %v801
    %v803 = vand.u32 %v802, 4294901760
    %804 = vmatmul.mubr.f32.gmra.mxu0 %v803
    %v805 = vpop.f32.mrf.mxu0
    %v806 = vadd.f32 %v663, %v805
    %v807 = vpop.f32.mrf.mxu0
    %808 = vmatprep.mubr.f32.mxu0 0.0
    %v809 = vand.u32 %v120, 4294901760
    %v810 = vsub.f32 %v120, %v809
    %v811 = vand.u32 %v810, 4294901760
    %812 = vmatmul.mubr.f32.gmra.mxu0 %v811
    %v813 = vpop.f32.mrf.mxu0
    %v814 = vadd.f32 %v670, %v813
    %v815 = vpop.f32.mrf.mxu0
    %816 = vmatprep.mubr.f32.mxu0 0.0
    %v817 = vand.u32 %v123, 4294901760
    %v818 = vsub.f32 %v123, %v817
    %v819 = vand.u32 %v818, 4294901760
    %820 = vmatmul.mubr.f32.gmra.mxu0 %v819
    %v821 = vpop.f32.mrf.mxu0
    %v822 = vadd.f32 %v677, %v821
    %v823 = vpop.f32.mrf.mxu0
    %824 = vdwg.mxu0
    %825 = vmatprep.subr.mxu0 0.0
    %v826 = vand.u32 %v171, 4294901760
    %v827 = vsub.f32 %v171, %v826
    %v828 = vand.u32 %v827, 4294901760
    %829 = vmatpush1.xpose.msra.mxu0 %v828
    %830 = vmatprep.subr.mxu0 0.0
    %v831 = vand.u32 %v168, 4294901760
    %v832 = vsub.f32 %v168, %v831
    %v833 = vand.u32 %v832, 4294901760
    %834 = vmatpush1.xpose.msra.mxu0 %v833
    %835 = vmatprep.subr.mxu0 0.0
    %v836 = vand.u32 %v165, 4294901760
    %v837 = vsub.f32 %v165, %v836
    %v838 = vand.u32 %v837, 4294901760
    %839 = vmatpush1.xpose.msra.mxu0 %v838
    %840 = vmatprep.subr.mxu0 0.0
    %v841 = vand.u32 %v162, 4294901760
    %v842 = vsub.f32 %v162, %v841
    %v843 = vand.u32 %v842, 4294901760
    %844 = vmatpush1.xpose.msra.mxu0 %v843
    %845 = vmatprep.subr.mxu0 0.0
    %v846 = vand.u32 %v159, 4294901760
    %v847 = vsub.f32 %v159, %v846
    %v848 = vand.u32 %v847, 4294901760
    %849 = vmatpush1.xpose.msra.mxu0 %v848
    %850 = vmatprep.subr.mxu0 0.0
    %v851 = vand.u32 %v156, 4294901760
    %v852 = vsub.f32 %v156, %v851
    %v853 = vand.u32 %v852, 4294901760
    %854 = vmatpush1.xpose.msra.mxu0 %v853
    %855 = vmatprep.subr.mxu0 0.0
    %v856 = vand.u32 %v153, 4294901760
    %v857 = vsub.f32 %v153, %v856
    %v858 = vand.u32 %v857, 4294901760
    %859 = vmatpush1.xpose.msra.mxu0 %v858
    %860 = vmatprep.subr.mxu0 0.0
    %v861 = vand.u32 %v150, 4294901760
    %v862 = vsub.f32 %v150, %v861
    %v863 = vand.u32 %v862, 4294901760
    %864 = vmatpush1.xpose.msra.mxu0 %v863
    %865 = vmatprep.subr.mxu0 0.0
    %v866 = vand.u32 %v147, 4294901760
    %v867 = vsub.f32 %v147, %v866
    %v868 = vand.u32 %v867, 4294901760
    %869 = vmatpush1.xpose.msra.mxu0 %v868
    %870 = vmatprep.subr.mxu0 0.0
    %v871 = vand.u32 %v144, 4294901760
    %v872 = vsub.f32 %v144, %v871
    %v873 = vand.u32 %v872, 4294901760
    %874 = vmatpush1.xpose.msra.mxu0 %v873
    %875 = vmatprep.subr.mxu0 0.0
    %v876 = vand.u32 %v141, 4294901760
    %v877 = vsub.f32 %v141, %v876
    %v878 = vand.u32 %v877, 4294901760
    %879 = vmatpush1.xpose.msra.mxu0 %v878
    %880 = vmatprep.subr.mxu0 0.0
    %v881 = vand.u32 %v138, 4294901760
    %v882 = vsub.f32 %v138, %v881
    %v883 = vand.u32 %v882, 4294901760
    %884 = vmatpush1.xpose.msra.mxu0 %v883
    %885 = vmatprep.subr.mxu0 0.0
    %v886 = vand.u32 %v135, 4294901760
    %v887 = vsub.f32 %v135, %v886
    %v888 = vand.u32 %v887, 4294901760
    %889 = vmatpush1.xpose.msra.mxu0 %v888
    %890 = vmatprep.subr.mxu0 0.0
    %v891 = vand.u32 %v132, 4294901760
    %v892 = vsub.f32 %v132, %v891
    %v893 = vand.u32 %v892, 4294901760
    %894 = vmatpush1.xpose.msra.mxu0 %v893
    %895 = vmatprep.subr.mxu0 0.0
    %v896 = vand.u32 %v129, 4294901760
    %v897 = vsub.f32 %v129, %v896
    %v898 = vand.u32 %v897, 4294901760
    %899 = vmatpush1.xpose.msra.mxu0 %v898
    %900 = vmatprep.subr.mxu0 0.0
    %v901 = vand.u32 %v126, 4294901760
    %v902 = vsub.f32 %v126, %v901
    %v903 = vand.u32 %v902, 4294901760
    %904 = vmatpush1.xpose.msra.mxu0 %v903
    %905 = vmatprep.subr.mxu0 0.0
    %906 = vmatpush2.xpose.msra.mxu0 0.0
    %907 = vmatprep.subr.mxu0 0.0
    %908 = vmatpush2.xpose.msra.mxu0 0.0
    %909 = vmatprep.subr.mxu0 0.0
    %910 = vmatpush2.xpose.msra.mxu0 0.0
    %911 = vmatprep.subr.mxu0 0.0
    %912 = vmatpush2.xpose.msra.mxu0 0.0
    %913 = vmatprep.subr.mxu0 0.0
    %914 = vmatpush2.xpose.msra.mxu0 0.0
    %915 = vmatprep.subr.mxu0 0.0
    %916 = vmatpush2.xpose.msra.mxu0 0.0
    %917 = vmatprep.subr.mxu0 0.0
    %918 = vmatpush2.xpose.msra.mxu0 0.0
    %919 = vmatprep.subr.mxu0 0.0
    %920 = vmatpush2.xpose.msra.mxu0 0.0
    %921 = vmatprep.subr.mxu0 0.0
    %922 = vmatpush2.xpose.msra.mxu0 0.0
    %923 = vmatprep.subr.mxu0 0.0
    %924 = vmatpush2.xpose.msra.mxu0 0.0
    %925 = vmatprep.subr.mxu0 0.0
    %926 = vmatpush2.xpose.msra.mxu0 0.0
    %927 = vmatprep.subr.mxu0 0.0
    %928 = vmatpush2.xpose.msra.mxu0 0.0
    %929 = vmatprep.subr.mxu0 0.0
    %930 = vmatpush2.xpose.msra.mxu0 0.0
    %931 = vmatprep.subr.mxu0 0.0
    %932 = vmatpush2.xpose.msra.mxu0 0.0
    %933 = vmatprep.subr.mxu0 0.0
    %934 = vmatpush2.xpose.msra.mxu0 0.0
    %935 = vmatprep.subr.mxu0 0.0
    %936 = vmatpush2.xpose.msra.mxu0 0.0
    %937 = vmatprep.mubr.f32.mxu0 0.0
    %v938 = vand.u32 %v102, 4294901760
    %939 = vmatmul.mubr.f32.gmra.mxu0 %v938
    %v940 = vpop.f32.mrf.mxu0
    %v941 = vadd.f32 %v766, %v940
    %v942 = vpop.f32.mrf.mxu0
    %943 = vmatprep.mubr.f32.mxu0 0.0
    %v944 = vand.u32 %v105, 4294901760
    %945 = vmatmul.mubr.f32.gmra.mxu0 %v944
    %v946 = vpop.f32.mrf.mxu0
    %v947 = vadd.f32 %v774, %v946
    %v948 = vpop.f32.mrf.mxu0
    %949 = vmatprep.mubr.f32.mxu0 0.0
    %v950 = vand.u32 %v108, 4294901760
    %951 = vmatmul.mubr.f32.gmra.mxu0 %v950
    %v952 = vpop.f32.mrf.mxu0
    %v953 = vadd.f32 %v782, %v952
    %v954 = vpop.f32.mrf.mxu0
    %955 = vmatprep.mubr.f32.mxu0 0.0
    %v956 = vand.u32 %v111, 4294901760
    %957 = vmatmul.mubr.f32.gmra.mxu0 %v956
    %v958 = vpop.f32.mrf.mxu0
    %v959 = vadd.f32 %v790, %v958
    %v960 = vpop.f32.mrf.mxu0
    %961 = vmatprep.mubr.f32.mxu0 0.0
    %v962 = vand.u32 %v114, 4294901760
    %963 = vmatmul.mubr.f32.gmra.mxu0 %v962
    %v964 = vpop.f32.mrf.mxu0
    %v965 = vadd.f32 %v798, %v964
    %v966 = vpop.f32.mrf.mxu0
    %967 = vmatprep.mubr.f32.mxu0 0.0
    %v968 = vand.u32 %v117, 4294901760
    %969 = vmatmul.mubr.f32.gmra.mxu0 %v968
    %v970 = vpop.f32.mrf.mxu0
    %v971 = vadd.f32 %v806, %v970
    %v972 = vpop.f32.mrf.mxu0
    %973 = vmatprep.mubr.f32.mxu0 0.0
    %v974 = vand.u32 %v120, 4294901760
    %975 = vmatmul.mubr.f32.gmra.mxu0 %v974
    %v976 = vpop.f32.mrf.mxu0
    %v977 = vadd.f32 %v814, %v976
    %v978 = vpop.f32.mrf.mxu0
    %979 = vmatprep.mubr.f32.mxu0 0.0
    %v980 = vand.u32 %v123, 4294901760
    %981 = vmatmul.mubr.f32.gmra.mxu0 %v980
    %v982 = vpop.f32.mrf.mxu0
    %v983 = vadd.f32 %v822, %v982
    %v984 = vpop.f32.mrf.mxu0
    %985 = vdwg.mxu0
    %986 = vmatprep.subr.mxu0 0.0
    %v987 = vand.u32 %v171, 4294901760
    %988 = vmatpush1.xpose.msra.mxu0 %v987
    %989 = vmatprep.subr.mxu0 0.0
    %v990 = vand.u32 %v168, 4294901760
    %991 = vmatpush1.xpose.msra.mxu0 %v990
    %992 = vmatprep.subr.mxu0 0.0
    %v993 = vand.u32 %v165, 4294901760
    %994 = vmatpush1.xpose.msra.mxu0 %v993
    %995 = vmatprep.subr.mxu0 0.0
    %v996 = vand.u32 %v162, 4294901760
    %997 = vmatpush1.xpose.msra.mxu0 %v996
    %998 = vmatprep.subr.mxu0 0.0
    %v999 = vand.u32 %v159, 4294901760
    %1000 = vmatpush1.xpose.msra.mxu0 %v999
    %1001 = vmatprep.subr.mxu0 0.0
    %v1002 = vand.u32 %v156, 4294901760
    %1003 = vmatpush1.xpose.msra.mxu0 %v1002
    %1004 = vmatprep.subr.mxu0 0.0
    %v1005 = vand.u32 %v153, 4294901760
    %1006 = vmatpush1.xpose.msra.mxu0 %v1005
    %1007 = vmatprep.subr.mxu0 0.0
    %v1008 = vand.u32 %v150, 4294901760
    %1009 = vmatpush1.xpose.msra.mxu0 %v1008
    %1010 = vmatprep.subr.mxu0 0.0
    %v1011 = vand.u32 %v147, 4294901760
    %1012 = vmatpush1.xpose.msra.mxu0 %v1011
    %1013 = vmatprep.subr.mxu0 0.0
    %v1014 = vand.u32 %v144, 4294901760
    %1015 = vmatpush1.xpose.msra.mxu0 %v1014
    %1016 = vmatprep.subr.mxu0 0.0
    %v1017 = vand.u32 %v141, 4294901760
    %1018 = vmatpush1.xpose.msra.mxu0 %v1017
    %1019 = vmatprep.subr.mxu0 0.0
    %v1020 = vand.u32 %v138, 4294901760
    %1021 = vmatpush1.xpose.msra.mxu0 %v1020
    %1022 = vmatprep.subr.mxu0 0.0
    %v1023 = vand.u32 %v135, 4294901760
    %1024 = vmatpush1.xpose.msra.mxu0 %v1023
    %1025 = vmatprep.subr.mxu0 0.0
    %v1026 = vand.u32 %v132, 4294901760
    %1027 = vmatpush1.xpose.msra.mxu0 %v1026
    %1028 = vmatprep.subr.mxu0 0.0
    %v1029 = vand.u32 %v129, 4294901760
    %1030 = vmatpush1.xpose.msra.mxu0 %v1029
    %1031 = vmatprep.subr.mxu0 0.0
    %v1032 = vand.u32 %v126, 4294901760
    %1033 = vmatpush1.xpose.msra.mxu0 %v1032
    %1034 = vmatprep.subr.mxu0 0.0
    %1035 = vmatpush2.xpose.msra.mxu0 0.0
    %1036 = vmatprep.subr.mxu0 0.0
    %1037 = vmatpush2.xpose.msra.mxu0 0.0
    %1038 = vmatprep.subr.mxu0 0.0
    %1039 = vmatpush2.xpose.msra.mxu0 0.0
    %1040 = vmatprep.subr.mxu0 0.0
    %1041 = vmatpush2.xpose.msra.mxu0 0.0
    %1042 = vmatprep.subr.mxu0 0.0
    %1043 = vmatpush2.xpose.msra.mxu0 0.0
    %1044 = vmatprep.subr.mxu0 0.0
    %1045 = vmatpush2.xpose.msra.mxu0 0.0
    %1046 = vmatprep.subr.mxu0 0.0
    %1047 = vmatpush2.xpose.msra.mxu0 0.0
    %1048 = vmatprep.subr.mxu0 0.0
    %1049 = vmatpush2.xpose.msra.mxu0 0.0
    %1050 = vmatprep.subr.mxu0 0.0
    %1051 = vmatpush2.xpose.msra.mxu0 0.0
    %1052 = vmatprep.subr.mxu0 0.0
    %1053 = vmatpush2.xpose.msra.mxu0 0.0
    %1054 = vmatprep.subr.mxu0 0.0
    %1055 = vmatpush2.xpose.msra.mxu0 0.0
    %1056 = vmatprep.subr.mxu0 0.0
    %1057 = vmatpush2.xpose.msra.mxu0 0.0
    %1058 = vmatprep.subr.mxu0 0.0
    %1059 = vmatpush2.xpose.msra.mxu0 0.0
    %1060 = vmatprep.subr.mxu0 0.0
    %1061 = vmatpush2.xpose.msra.mxu0 0.0
    %1062 = vmatprep.subr.mxu0 0.0
    %1063 = vmatpush2.xpose.msra.mxu0 0.0
    %1064 = vmatprep.subr.mxu0 0.0
    %1065 = vmatpush2.xpose.msra.mxu0 0.0
    %1066 = vmatprep.mubr.f32.mxu0 0.0
    %v1067 = vand.u32 %v102, 4294901760
    %1068 = vmatmul.mubr.f32.gmra.mxu0 %v1067
    %v1069 = vpop.f32.mrf.mxu0
    %v1070 = vadd.f32 %v941, %v1069
    %v1071 = vpop.f32.mrf.mxu0
    %1072 = vmatprep.mubr.f32.mxu0 0.0
    %v1073 = vand.u32 %v105, 4294901760
    %1074 = vmatmul.mubr.f32.gmra.mxu0 %v1073
    %v1075 = vpop.f32.mrf.mxu0
    %v1076 = vadd.f32 %v947, %v1075
    %v1077 = vpop.f32.mrf.mxu0
    %1078 = vmatprep.mubr.f32.mxu0 0.0
    %v1079 = vand.u32 %v108, 4294901760
    %1080 = vmatmul.mubr.f32.gmra.mxu0 %v1079
    %v1081 = vpop.f32.mrf.mxu0
    %v1082 = vadd.f32 %v953, %v1081
    %v1083 = vpop.f32.mrf.mxu0
    %1084 = vmatprep.mubr.f32.mxu0 0.0
    %v1085 = vand.u32 %v111, 4294901760
    %1086 = vmatmul.mubr.f32.gmra.mxu0 %v1085
    %v1087 = vpop.f32.mrf.mxu0
    %v1088 = vadd.f32 %v959, %v1087
    %v1089 = vpop.f32.mrf.mxu0
    %1090 = vmatprep.mubr.f32.mxu0 0.0
    %v1091 = vand.u32 %v114, 4294901760
    %1092 = vmatmul.mubr.f32.gmra.mxu0 %v1091
    %v1093 = vpop.f32.mrf.mxu0
    %v1094 = vadd.f32 %v965, %v1093
    %v1095 = vpop.f32.mrf.mxu0
    %1096 = vmatprep.mubr.f32.mxu0 0.0
    %v1097 = vand.u32 %v117, 4294901760
    %1098 = vmatmul.mubr.f32.gmra.mxu0 %v1097
    %v1099 = vpop.f32.mrf.mxu0
    %v1100 = vadd.f32 %v971, %v1099
    %v1101 = vpop.f32.mrf.mxu0
    %1102 = vmatprep.mubr.f32.mxu0 0.0
    %v1103 = vand.u32 %v120, 4294901760
    %1104 = vmatmul.mubr.f32.gmra.mxu0 %v1103
    %v1105 = vpop.f32.mrf.mxu0
    %v1106 = vadd.f32 %v977, %v1105
    %v1107 = vpop.f32.mrf.mxu0
    %1108 = vmatprep.mubr.f32.mxu0 0.0
    %v1109 = vand.u32 %v123, 4294901760
    %1110 = vmatmul.mubr.f32.gmra.mxu0 %v1109
    %v1111 = vpop.f32.mrf.mxu0
    %v1112 = vadd.f32 %v983, %v1111
    %v1113 = vpop.f32.mrf.mxu0
    %1114 = vdwg.mxu0
    %v1115 = vtanh.pop %v1070
    %v1116 = vtanh.pop %v1076
    %v1117 = vtanh.pop %v1082
    %v1118 = vtanh.pop %v1088
    %v1119 = vtanh.pop %v1094
    %v1120 = vtanh.pop %v1100
    %v1121 = vtanh.pop %v1106
    %v1122 = vtanh.pop %v1112
    %v1123 = vld [vmem:[%s3] sm:$0xff]
    %v1124 = vld [vmem:[%s3 + $0x8] sm:$0xff]
    %v1125 = vld [vmem:[%s3 + $0x10] sm:$0xff]
    %v1126 = vld [vmem:[%s3 + $0x18] sm:$0xff]
    %v1127 = vld [vmem:[%s3 + $0x20] sm:$0xff]
    %v1128 = vld [vmem:[%s3 + $0x28] sm:$0xff]
    %v1129 = vld [vmem:[%s3 + $0x30] sm:$0xff]
    %v1130 = vld [vmem:[%s3 + $0x38] sm:$0xff]
    %v1131 = vld [vmem:[%s4] sm:$0xff]
    %v1132 = vld [vmem:[%s4 + $0x8] sm:$0xff]
    %v1133 = vld [vmem:[%s4 + $0x10] sm:$0xff]
    %v1134 = vld [vmem:[%s4 + $0x18] sm:$0xff]
    %v1135 = vld [vmem:[%s4 + $0x20] sm:$0xff]
    %v1136 = vld [vmem:[%s4 + $0x28] sm:$0xff]
    %v1137 = vld [vmem:[%s4 + $0x30] sm:$0xff]
    %v1138 = vld [vmem:[%s4 + $0x38] sm:$0xff]
    %1140 = vset.pattern.permute.xlu0 0
    %1141 = vperm.xlu0 %1140, %v1131
    %v1142 = vpop.permute.xlu0 %1141
    %1145 = vset.pattern.permute.xlu0 0
    %1146 = vperm.xlu0 %1145, %v1132
    %v1147 = vpop.permute.xlu0 %1146
    %1150 = vset.pattern.permute.xlu0 0
    %1151 = vperm.xlu0 %1150, %v1133
    %v1152 = vpop.permute.xlu0 %1151
    %1155 = vset.pattern.permute.xlu0 0
    %1156 = vperm.xlu0 %1155, %v1134
    %v1157 = vpop.permute.xlu0 %1156
    %1160 = vset.pattern.permute.xlu0 0
    %1161 = vperm.xlu0 %1160, %v1135
    %v1162 = vpop.permute.xlu0 %1161
    %1165 = vset.pattern.permute.xlu0 0
    %1166 = vperm.xlu0 %1165, %v1136
    %v1167 = vpop.permute.xlu0 %1166
    %1170 = vset.pattern.permute.xlu0 0
    %1171 = vperm.xlu0 %1170, %v1137
    %v1172 = vpop.permute.xlu0 %1171
    %1175 = vset.pattern.permute.xlu0 0
    %1176 = vperm.xlu0 %1175, %v1138
    %v1177 = vpop.permute.xlu0 %1176
    %vm1179 = vcmask 523264
    %v1181 = vsel %vm1179, %v1123, 0
    %v1184 = vsel %vm1179, %v1124, 0
    %v1187 = vsel %vm1179, %v1125, 0
    %v1190 = vsel %vm1179, %v1126, 0
    %v1193 = vsel %vm1179, %v1127, 0
    %v1196 = vsel %vm1179, %v1128, 0
    %v1199 = vsel %vm1179, %v1129, 0
    %v1202 = vsel %vm1179, %v1130, 0
    %1204 = vmatprep.subr.mxu0 0.0
    %1205 = vmatpush1.msra.mxu0 0.0
    %1206 = vmatprep.subr.mxu0 0.0
    %1207 = vmatpush1.msra.mxu0 0.0
    %1208 = vmatprep.subr.mxu0 0.0
    %1209 = vmatpush1.msra.mxu0 0.0
    %1210 = vmatprep.subr.mxu0 0.0
    %1211 = vmatpush1.msra.mxu0 0.0
    %1212 = vmatprep.subr.mxu0 0.0
    %1213 = vmatpush1.msra.mxu0 0.0
    %1214 = vmatprep.subr.mxu0 0.0
    %1215 = vmatpush1.msra.mxu0 0.0
    %1216 = vmatprep.subr.mxu0 0.0
    %1217 = vmatpush1.msra.mxu0 0.0
    %1218 = vmatprep.subr.mxu0 0.0
    %1219 = vmatpush1.msra.mxu0 0.0
    %1220 = vmatprep.subr.mxu0 0.0
    %v1221 = vand.u32 %v1122, 4294901760
    %1222 = vmatpush1.msra.mxu0 %v1221
    %1223 = vmatprep.subr.mxu0 0.0
    %v1224 = vand.u32 %v1121, 4294901760
    %1225 = vmatpush1.msra.mxu0 %v1224
    %1226 = vmatprep.subr.mxu0 0.0
    %v1227 = vand.u32 %v1120, 4294901760
    %1228 = vmatpush1.msra.mxu0 %v1227
    %1229 = vmatprep.subr.mxu0 0.0
    %v1230 = vand.u32 %v1119, 4294901760
    %1231 = vmatpush1.msra.mxu0 %v1230
    %1232 = vmatprep.subr.mxu0 0.0
    %v1233 = vand.u32 %v1118, 4294901760
    %1234 = vmatpush1.msra.mxu0 %v1233
    %1235 = vmatprep.subr.mxu0 0.0
    %v1236 = vand.u32 %v1117, 4294901760
    %1237 = vmatpush1.msra.mxu0 %v1236
    %1238 = vmatprep.subr.mxu0 0.0
    %v1239 = vand.u32 %v1116, 4294901760
    %1240 = vmatpush1.msra.mxu0 %v1239
    %1241 = vmatprep.subr.mxu0 0.0
    %v1242 = vand.u32 %v1115, 4294901760
    %1243 = vmatpush1.msra.mxu0 %v1242
    %1244 = vmatprep.subr.mxu0 0.0
    %1245 = vmatpush2.msra.mxu0 0.0
    %1246 = vmatprep.subr.mxu0 0.0
    %1247 = vmatpush2.msra.mxu0 0.0
    %1248 = vmatprep.subr.mxu0 0.0
    %1249 = vmatpush2.msra.mxu0 0.0
    %1250 = vmatprep.subr.mxu0 0.0
    %1251 = vmatpush2.msra.mxu0 0.0
    %1252 = vmatprep.subr.mxu0 0.0
    %1253 = vmatpush2.msra.mxu0 0.0
    %1254 = vmatprep.subr.mxu0 0.0
    %1255 = vmatpush2.msra.mxu0 0.0
    %1256 = vmatprep.subr.mxu0 0.0
    %1257 = vmatpush2.msra.mxu0 0.0
    %1258 = vmatprep.subr.mxu0 0.0
    %1259 = vmatpush2.msra.mxu0 0.0
    %1260 = vmatprep.subr.mxu0 0.0
    %1261 = vmatpush2.msra.mxu0 0.0
    %1262 = vmatprep.subr.mxu0 0.0
    %1263 = vmatpush2.msra.mxu0 0.0
    %1264 = vmatprep.subr.mxu0 0.0
    %1265 = vmatpush2.msra.mxu0 0.0
    %1266 = vmatprep.subr.mxu0 0.0
    %1267 = vmatpush2.msra.mxu0 0.0
    %1268 = vmatprep.subr.mxu0 0.0
    %1269 = vmatpush2.msra.mxu0 0.0
    %1270 = vmatprep.subr.mxu0 0.0
    %1271 = vmatpush2.msra.mxu0 0.0
    %1272 = vmatprep.subr.mxu0 0.0
    %1273 = vmatpush2.msra.mxu0 0.0
    %1274 = vmatprep.subr.mxu0 0.0
    %1275 = vmatpush2.msra.mxu0 0.0
    %1276 = vmatprep.mubr.f32.mxu0 0.0
    %v1277 = vand.u32 %v1181, 4294901760
    %v1278 = vsub.f32 %v1181, %v1277
    %v1279 = vand.u32 %v1278, 4294901760
    %v1280 = vsub.f32 %v1278, %v1279
    %v1281 = vand.u32 %v1280, 4294901760
    %1282 = vmatmul.mubr.f32.gmra.mxu0 %v1281
    %v1283 = vpop.f32.mrf.mxu0
    %v1284 = vadd.f32 %v1142, %v1283
    %v1285 = vpop.f32.mrf.mxu0
    %1286 = vmatprep.mubr.f32.mxu0 0.0
    %v1287 = vand.u32 %v1184, 4294901760
    %v1288 = vsub.f32 %v1184, %v1287
    %v1289 = vand.u32 %v1288, 4294901760
    %v1290 = vsub.f32 %v1288, %v1289
    %v1291 = vand.u32 %v1290, 4294901760
    %1292 = vmatmul.mubr.f32.gmra.mxu0 %v1291
    %v1293 = vpop.f32.mrf.mxu0
    %v1294 = vadd.f32 %v1147, %v1293
    %v1295 = vpop.f32.mrf.mxu0
    %1296 = vmatprep.mubr.f32.mxu0 0.0
    %v1297 = vand.u32 %v1187, 4294901760
    %v1298 = vsub.f32 %v1187, %v1297
    %v1299 = vand.u32 %v1298, 4294901760
    %v1300 = vsub.f32 %v1298, %v1299
    %v1301 = vand.u32 %v1300, 4294901760
    %1302 = vmatmul.mubr.f32.gmra.mxu0 %v1301
    %v1303 = vpop.f32.mrf.mxu0
    %v1304 = vadd.f32 %v1152, %v1303
    %v1305 = vpop.f32.mrf.mxu0
    %1306 = vmatprep.mubr.f32.mxu0 0.0
    %v1307 = vand.u32 %v1190, 4294901760
    %v1308 = vsub.f32 %v1190, %v1307
    %v1309 = vand.u32 %v1308, 4294901760
    %v1310 = vsub.f32 %v1308, %v1309
    %v1311 = vand.u32 %v1310, 4294901760
    %1312 = vmatmul.mubr.f32.gmra.mxu0 %v1311
    %v1313 = vpop.f32.mrf.mxu0
    %v1314 = vadd.f32 %v1157, %v1313
    %v1315 = vpop.f32.mrf.mxu0
    %1316 = vmatprep.mubr.f32.mxu0 0.0
    %v1317 = vand.u32 %v1193, 4294901760
    %v1318 = vsub.f32 %v1193, %v1317
    %v1319 = vand.u32 %v1318, 4294901760
    %v1320 = vsub.f32 %v1318, %v1319
    %v1321 = vand.u32 %v1320, 4294901760
    %1322 = vmatmul.mubr.f32.gmra.mxu0 %v1321
    %v1323 = vpop.f32.mrf.mxu0
    %v1324 = vadd.f32 %v1162, %v1323
    %v1325 = vpop.f32.mrf.mxu0
    %1326 = vmatprep.mubr.f32.mxu0 0.0
    %v1327 = vand.u32 %v1196, 4294901760
    %v1328 = vsub.f32 %v1196, %v1327
    %v1329 = vand.u32 %v1328, 4294901760
    %v1330 = vsub.f32 %v1328, %v1329
    %v1331 = vand.u32 %v1330, 4294901760
    %1332 = vmatmul.mubr.f32.gmra.mxu0 %v1331
    %v1333 = vpop.f32.mrf.mxu0
    %v1334 = vadd.f32 %v1167, %v1333
    %v1335 = vpop.f32.mrf.mxu0
    %1336 = vmatprep.mubr.f32.mxu0 0.0
    %v1337 = vand.u32 %v1199, 4294901760
    %v1338 = vsub.f32 %v1199, %v1337
    %v1339 = vand.u32 %v1338, 4294901760
    %v1340 = vsub.f32 %v1338, %v1339
    %v1341 = vand.u32 %v1340, 4294901760
    %1342 = vmatmul.mubr.f32.gmra.mxu0 %v1341
    %v1343 = vpop.f32.mrf.mxu0
    %v1344 = vadd.f32 %v1172, %v1343
    %v1345 = vpop.f32.mrf.mxu0
    %1346 = vmatprep.mubr.f32.mxu0 0.0
    %v1347 = vand.u32 %v1202, 4294901760
    %v1348 = vsub.f32 %v1202, %v1347
    %v1349 = vand.u32 %v1348, 4294901760
    %v1350 = vsub.f32 %v1348, %v1349
    %v1351 = vand.u32 %v1350, 4294901760
    %1352 = vmatmul.mubr.f32.gmra.mxu0 %v1351
    %v1353 = vpop.f32.mrf.mxu0
    %v1354 = vadd.f32 %v1177, %v1353
    %v1355 = vpop.f32.mrf.mxu0
    %1356 = vdwg.mxu0
    %1357 = vmatprep.subr.mxu0 0.0
    %1358 = vmatpush1.msra.mxu0 0.0
    %1359 = vmatprep.subr.mxu0 0.0
    %1360 = vmatpush1.msra.mxu0 0.0
    %1361 = vmatprep.subr.mxu0 0.0
    %1362 = vmatpush1.msra.mxu0 0.0
    %1363 = vmatprep.subr.mxu0 0.0
    %1364 = vmatpush1.msra.mxu0 0.0
    %1365 = vmatprep.subr.mxu0 0.0
    %1366 = vmatpush1.msra.mxu0 0.0
    %1367 = vmatprep.subr.mxu0 0.0
    %1368 = vmatpush1.msra.mxu0 0.0
    %1369 = vmatprep.subr.mxu0 0.0
    %1370 = vmatpush1.msra.mxu0 0.0
    %1371 = vmatprep.subr.mxu0 0.0
    %1372 = vmatpush1.msra.mxu0 0.0
    %1373 = vmatprep.subr.mxu0 0.0
    %v1374 = vand.u32 %v1122, 4294901760
    %v1375 = vsub.f32 %v1122, %v1374
    %v1376 = vand.u32 %v1375, 4294901760
    %v1377 = vsub.f32 %v1375, %v1376
    %v1378 = vand.u32 %v1377, 4294901760
    %1379 = vmatpush1.msra.mxu0 %v1378
    %1380 = vmatprep.subr.mxu0 0.0
    %v1381 = vand.u32 %v1121, 4294901760
    %v1382 = vsub.f32 %v1121, %v1381
    %v1383 = vand.u32 %v1382, 4294901760
    %v1384 = vsub.f32 %v1382, %v1383
    %v1385 = vand.u32 %v1384, 4294901760
    %1386 = vmatpush1.msra.mxu0 %v1385
    %1387 = vmatprep.subr.mxu0 0.0
    %v1388 = vand.u32 %v1120, 4294901760
    %v1389 = vsub.f32 %v1120, %v1388
    %v1390 = vand.u32 %v1389, 4294901760
    %v1391 = vsub.f32 %v1389, %v1390
    %v1392 = vand.u32 %v1391, 4294901760
    %1393 = vmatpush1.msra.mxu0 %v1392
    %1394 = vmatprep.subr.mxu0 0.0
    %v1395 = vand.u32 %v1119, 4294901760
    %v1396 = vsub.f32 %v1119, %v1395
    %v1397 = vand.u32 %v1396, 4294901760
    %v1398 = vsub.f32 %v1396, %v1397
    %v1399 = vand.u32 %v1398, 4294901760
    %1400 = vmatpush1.msra.mxu0 %v1399
    %1401 = vmatprep.subr.mxu0 0.0
    %v1402 = vand.u32 %v1118, 4294901760
    %v1403 = vsub.f32 %v1118, %v1402
    %v1404 = vand.u32 %v1403, 4294901760
    %v1405 = vsub.f32 %v1403, %v1404
    %v1406 = vand.u32 %v1405, 4294901760
    %1407 = vmatpush1.msra.mxu0 %v1406
    %1408 = vmatprep.subr.mxu0 0.0
    %v1409 = vand.u32 %v1117, 4294901760
    %v1410 = vsub.f32 %v1117, %v1409
    %v1411 = vand.u32 %v1410, 4294901760
    %v1412 = vsub.f32 %v1410, %v1411
    %v1413 = vand.u32 %v1412, 4294901760
    %1414 = vmatpush1.msra.mxu0 %v1413
    %1415 = vmatprep.subr.mxu0 0.0
    %v1416 = vand.u32 %v1116, 4294901760
    %v1417 = vsub.f32 %v1116, %v1416
    %v1418 = vand.u32 %v1417, 4294901760
    %v1419 = vsub.f32 %v1417, %v1418
    %v1420 = vand.u32 %v1419, 4294901760
    %1421 = vmatpush1.msra.mxu0 %v1420
    %1422 = vmatprep.subr.mxu0 0.0
    %v1423 = vand.u32 %v1115, 4294901760
    %v1424 = vsub.f32 %v1115, %v1423
    %v1425 = vand.u32 %v1424, 4294901760
    %v1426 = vsub.f32 %v1424, %v1425
    %v1427 = vand.u32 %v1426, 4294901760
    %1428 = vmatpush1.msra.mxu0 %v1427
    %1429 = vmatprep.subr.mxu0 0.0
    %1430 = vmatpush2.msra.mxu0 0.0
    %1431 = vmatprep.subr.mxu0 0.0
    %1432 = vmatpush2.msra.mxu0 0.0
    %1433 = vmatprep.subr.mxu0 0.0
    %1434 = vmatpush2.msra.mxu0 0.0
    %1435 = vmatprep.subr.mxu0 0.0
    %1436 = vmatpush2.msra.mxu0 0.0
    %1437 = vmatprep.subr.mxu0 0.0
    %1438 = vmatpush2.msra.mxu0 0.0
    %1439 = vmatprep.subr.mxu0 0.0
    %1440 = vmatpush2.msra.mxu0 0.0
    %1441 = vmatprep.subr.mxu0 0.0
    %1442 = vmatpush2.msra.mxu0 0.0
    %1443 = vmatprep.subr.mxu0 0.0
    %1444 = vmatpush2.msra.mxu0 0.0
    %1445 = vmatprep.subr.mxu0 0.0
    %1446 = vmatpush2.msra.mxu0 0.0
    %1447 = vmatprep.subr.mxu0 0.0
    %1448 = vmatpush2.msra.mxu0 0.0
    %1449 = vmatprep.subr.mxu0 0.0
    %1450 = vmatpush2.msra.mxu0 0.0
    %1451 = vmatprep.subr.mxu0 0.0
    %1452 = vmatpush2.msra.mxu0 0.0
    %1453 = vmatprep.subr.mxu0 0.0
    %1454 = vmatpush2.msra.mxu0 0.0
    %1455 = vmatprep.subr.mxu0 0.0
    %1456 = vmatpush2.msra.mxu0 0.0
    %1457 = vmatprep.subr.mxu0 0.0
    %1458 = vmatpush2.msra.mxu0 0.0
    %1459 = vmatprep.subr.mxu0 0.0
    %1460 = vmatpush2.msra.mxu0 0.0
    %1461 = vmatprep.mubr.f32.mxu0 0.0
    %v1462 = vand.u32 %v1181, 4294901760
    %1463 = vmatmul.mubr.f32.gmra.mxu0 %v1462
    %v1464 = vpop.f32.mrf.mxu0
    %v1465 = vadd.f32 %v1284, %v1464
    %v1466 = vpop.f32.mrf.mxu0
    %1467 = vmatprep.mubr.f32.mxu0 0.0
    %v1468 = vand.u32 %v1184, 4294901760
    %1469 = vmatmul.mubr.f32.gmra.mxu0 %v1468
    %v1470 = vpop.f32.mrf.mxu0
    %v1471 = vadd.f32 %v1294, %v1470
    %v1472 = vpop.f32.mrf.mxu0
    %1473 = vmatprep.mubr.f32.mxu0 0.0
    %v1474 = vand.u32 %v1187, 4294901760
    %1475 = vmatmul.mubr.f32.gmra.mxu0 %v1474
    %v1476 = vpop.f32.mrf.mxu0
    %v1477 = vadd.f32 %v1304, %v1476
    %v1478 = vpop.f32.mrf.mxu0
    %1479 = vmatprep.mubr.f32.mxu0 0.0
    %v1480 = vand.u32 %v1190, 4294901760
    %1481 = vmatmul.mubr.f32.gmra.mxu0 %v1480
    %v1482 = vpop.f32.mrf.mxu0
    %v1483 = vadd.f32 %v1314, %v1482
    %v1484 = vpop.f32.mrf.mxu0
    %1485 = vmatprep.mubr.f32.mxu0 0.0
    %v1486 = vand.u32 %v1193, 4294901760
    %1487 = vmatmul.mubr.f32.gmra.mxu0 %v1486
    %v1488 = vpop.f32.mrf.mxu0
    %v1489 = vadd.f32 %v1324, %v1488
    %v1490 = vpop.f32.mrf.mxu0
    %1491 = vmatprep.mubr.f32.mxu0 0.0
    %v1492 = vand.u32 %v1196, 4294901760
    %1493 = vmatmul.mubr.f32.gmra.mxu0 %v1492
    %v1494 = vpop.f32.mrf.mxu0
    %v1495 = vadd.f32 %v1334, %v1494
    %v1496 = vpop.f32.mrf.mxu0
    %1497 = vmatprep.mubr.f32.mxu0 0.0
    %v1498 = vand.u32 %v1199, 4294901760
    %1499 = vmatmul.mubr.f32.gmra.mxu0 %v1498
    %v1500 = vpop.f32.mrf.mxu0
    %v1501 = vadd.f32 %v1344, %v1500
    %v1502 = vpop.f32.mrf.mxu0
    %1503 = vmatprep.mubr.f32.mxu0 0.0
    %v1504 = vand.u32 %v1202, 4294901760
    %1505 = vmatmul.mubr.f32.gmra.mxu0 %v1504
    %v1506 = vpop.f32.mrf.mxu0
    %v1507 = vadd.f32 %v1354, %v1506
    %v1508 = vpop.f32.mrf.mxu0
    %1509 = vdwg.mxu0
    %1510 = vmatprep.subr.mxu0 0.0
    %1511 = vmatpush1.msra.mxu0 0.0
    %1512 = vmatprep.subr.mxu0 0.0
    %1513 = vmatpush1.msra.mxu0 0.0
    %1514 = vmatprep.subr.mxu0 0.0
    %1515 = vmatpush1.msra.mxu0 0.0
    %1516 = vmatprep.subr.mxu0 0.0
    %1517 = vmatpush1.msra.mxu0 0.0
    %1518 = vmatprep.subr.mxu0 0.0
    %1519 = vmatpush1.msra.mxu0 0.0
    %1520 = vmatprep.subr.mxu0 0.0
    %1521 = vmatpush1.msra.mxu0 0.0
    %1522 = vmatprep.subr.mxu0 0.0
    %1523 = vmatpush1.msra.mxu0 0.0
    %1524 = vmatprep.subr.mxu0 0.0
    %1525 = vmatpush1.msra.mxu0 0.0
    %1526 = vmatprep.subr.mxu0 0.0
    %v1527 = vand.u32 %v1122, 4294901760
    %v1528 = vsub.f32 %v1122, %v1527
    %1529 = vmatpush1.msra.mxu0 %v1528
    %1530 = vmatprep.subr.mxu0 0.0
    %v1531 = vand.u32 %v1121, 4294901760
    %v1532 = vsub.f32 %v1121, %v1531
    %1533 = vmatpush1.msra.mxu0 %v1532
    %1534 = vmatprep.subr.mxu0 0.0
    %v1535 = vand.u32 %v1120, 4294901760
    %v1536 = vsub.f32 %v1120, %v1535
    %1537 = vmatpush1.msra.mxu0 %v1536
    %1538 = vmatprep.subr.mxu0 0.0
    %v1539 = vand.u32 %v1119, 4294901760
    %v1540 = vsub.f32 %v1119, %v1539
    %1541 = vmatpush1.msra.mxu0 %v1540
    %1542 = vmatprep.subr.mxu0 0.0
    %v1543 = vand.u32 %v1118, 4294901760
    %v1544 = vsub.f32 %v1118, %v1543
    %1545 = vmatpush1.msra.mxu0 %v1544
    %1546 = vmatprep.subr.mxu0 0.0
    %v1547 = vand.u32 %v1117, 4294901760
    %v1548 = vsub.f32 %v1117, %v1547
    %1549 = vmatpush1.msra.mxu0 %v1548
    %1550 = vmatprep.subr.mxu0 0.0
    %v1551 = vand.u32 %v1116, 4294901760
    %v1552 = vsub.f32 %v1116, %v1551
    %1553 = vmatpush1.msra.mxu0 %v1552
    %1554 = vmatprep.subr.mxu0 0.0
    %v1555 = vand.u32 %v1115, 4294901760
    %v1556 = vsub.f32 %v1115, %v1555
    %1557 = vmatpush1.msra.mxu0 %v1556
    %1558 = vmatprep.subr.mxu0 0.0
    %1559 = vmatpush2.msra.mxu0 0.0
    %1560 = vmatprep.subr.mxu0 0.0
    %1561 = vmatpush2.msra.mxu0 0.0
    %1562 = vmatprep.subr.mxu0 0.0
    %1563 = vmatpush2.msra.mxu0 0.0
    %1564 = vmatprep.subr.mxu0 0.0
    %1565 = vmatpush2.msra.mxu0 0.0
    %1566 = vmatprep.subr.mxu0 0.0
    %1567 = vmatpush2.msra.mxu0 0.0
    %1568 = vmatprep.subr.mxu0 0.0
    %1569 = vmatpush2.msra.mxu0 0.0
    %1570 = vmatprep.subr.mxu0 0.0
    %1571 = vmatpush2.msra.mxu0 0.0
    %1572 = vmatprep.subr.mxu0 0.0
    %1573 = vmatpush2.msra.mxu0 0.0
    %1574 = vmatprep.subr.mxu0 0.0
    %1575 = vmatpush2.msra.mxu0 0.0
    %1576 = vmatprep.subr.mxu0 0.0
    %1577 = vmatpush2.msra.mxu0 0.0
    %1578 = vmatprep.subr.mxu0 0.0
    %1579 = vmatpush2.msra.mxu0 0.0
    %1580 = vmatprep.subr.mxu0 0.0
    %1581 = vmatpush2.msra.mxu0 0.0
    %1582 = vmatprep.subr.mxu0 0.0
    %1583 = vmatpush2.msra.mxu0 0.0
    %1584 = vmatprep.subr.mxu0 0.0
    %1585 = vmatpush2.msra.mxu0 0.0
    %1586 = vmatprep.subr.mxu0 0.0
    %1587 = vmatpush2.msra.mxu0 0.0
    %1588 = vmatprep.subr.mxu0 0.0
    %1589 = vmatpush2.msra.mxu0 0.0
    %1590 = vmatprep.mubr.f32.mxu0 0.0
    %v1591 = vand.u32 %v1181, 4294901760
    %v1592 = vsub.f32 %v1181, %v1591
    %1593 = vmatmul.mubr.f32.gmra.mxu0 %v1592
    %v1594 = vpop.f32.mrf.mxu0
    %v1595 = vadd.f32 %v1465, %v1594
    %v1596 = vpop.f32.mrf.mxu0
    %1597 = vmatprep.mubr.f32.mxu0 0.0
    %v1598 = vand.u32 %v1184, 4294901760
    %v1599 = vsub.f32 %v1184, %v1598
    %1600 = vmatmul.mubr.f32.gmra.mxu0 %v1599
    %v1601 = vpop.f32.mrf.mxu0
    %v1602 = vadd.f32 %v1471, %v1601
    %v1603 = vpop.f32.mrf.mxu0
    %1604 = vmatprep.mubr.f32.mxu0 0.0
    %v1605 = vand.u32 %v1187, 4294901760
    %v1606 = vsub.f32 %v1187, %v1605
    %1607 = vmatmul.mubr.f32.gmra.mxu0 %v1606
    %v1608 = vpop.f32.mrf.mxu0
    %v1609 = vadd.f32 %v1477, %v1608
    %v1610 = vpop.f32.mrf.mxu0
    %1611 = vmatprep.mubr.f32.mxu0 0.0
    %v1612 = vand.u32 %v1190, 4294901760
    %v1613 = vsub.f32 %v1190, %v1612
    %1614 = vmatmul.mubr.f32.gmra.mxu0 %v1613
    %v1615 = vpop.f32.mrf.mxu0
    %v1616 = vadd.f32 %v1483, %v1615
    %v1617 = vpop.f32.mrf.mxu0
    %1618 = vmatprep.mubr.f32.mxu0 0.0
    %v1619 = vand.u32 %v1193, 4294901760
    %v1620 = vsub.f32 %v1193, %v1619
    %1621 = vmatmul.mubr.f32.gmra.mxu0 %v1620
    %v1622 = vpop.f32.mrf.mxu0
    %v1623 = vadd.f32 %v1489, %v1622
    %v1624 = vpop.f32.mrf.mxu0
    %1625 = vmatprep.mubr.f32.mxu0 0.0
    %v1626 = vand.u32 %v1196, 4294901760
    %v1627 = vsub.f32 %v1196, %v1626
    %1628 = vmatmul.mubr.f32.gmra.mxu0 %v1627
    %v1629 = vpop.f32.mrf.mxu0
    %v1630 = vadd.f32 %v1495, %v1629
    %v1631 = vpop.f32.mrf.mxu0
    %1632 = vmatprep.mubr.f32.mxu0 0.0
    %v1633 = vand.u32 %v1199, 4294901760
    %v1634 = vsub.f32 %v1199, %v1633
    %1635 = vmatmul.mubr.f32.gmra.mxu0 %v1634
    %v1636 = vpop.f32.mrf.mxu0
    %v1637 = vadd.f32 %v1501, %v1636
    %v1638 = vpop.f32.mrf.mxu0
    %1639 = vmatprep.mubr.f32.mxu0 0.0
    %v1640 = vand.u32 %v1202, 4294901760
    %v1641 = vsub.f32 %v1202, %v1640
    %1642 = vmatmul.mubr.f32.gmra.mxu0 %v1641
    %v1643 = vpop.f32.mrf.mxu0
    %v1644 = vadd.f32 %v1507, %v1643
    %v1645 = vpop.f32.mrf.mxu0
    %1646 = vdwg.mxu0
    %1647 = vmatprep.subr.mxu0 0.0
    %1648 = vmatpush1.msra.mxu0 0.0
    %1649 = vmatprep.subr.mxu0 0.0
    %1650 = vmatpush1.msra.mxu0 0.0
    %1651 = vmatprep.subr.mxu0 0.0
    %1652 = vmatpush1.msra.mxu0 0.0
    %1653 = vmatprep.subr.mxu0 0.0
    %1654 = vmatpush1.msra.mxu0 0.0
    %1655 = vmatprep.subr.mxu0 0.0
    %1656 = vmatpush1.msra.mxu0 0.0
    %1657 = vmatprep.subr.mxu0 0.0
    %1658 = vmatpush1.msra.mxu0 0.0
    %1659 = vmatprep.subr.mxu0 0.0
    %1660 = vmatpush1.msra.mxu0 0.0
    %1661 = vmatprep.subr.mxu0 0.0
    %1662 = vmatpush1.msra.mxu0 0.0
    %1663 = vmatprep.subr.mxu0 0.0
    %v1664 = vand.u32 %v1122, 4294901760
    %1665 = vmatpush1.msra.mxu0 %v1664
    %1666 = vmatprep.subr.mxu0 0.0
    %v1667 = vand.u32 %v1121, 4294901760
    %1668 = vmatpush1.msra.mxu0 %v1667
    %1669 = vmatprep.subr.mxu0 0.0
    %v1670 = vand.u32 %v1120, 4294901760
    %1671 = vmatpush1.msra.mxu0 %v1670
    %1672 = vmatprep.subr.mxu0 0.0
    %v1673 = vand.u32 %v1119, 4294901760
    %1674 = vmatpush1.msra.mxu0 %v1673
    %1675 = vmatprep.subr.mxu0 0.0
    %v1676 = vand.u32 %v1118, 4294901760
    %1677 = vmatpush1.msra.mxu0 %v1676
    %1678 = vmatprep.subr.mxu0 0.0
    %v1679 = vand.u32 %v1117, 4294901760
    %1680 = vmatpush1.msra.mxu0 %v1679
    %1681 = vmatprep.subr.mxu0 0.0
    %v1682 = vand.u32 %v1116, 4294901760
    %1683 = vmatpush1.msra.mxu0 %v1682
    %1684 = vmatprep.subr.mxu0 0.0
    %v1685 = vand.u32 %v1115, 4294901760
    %1686 = vmatpush1.msra.mxu0 %v1685
    %1687 = vmatprep.subr.mxu0 0.0
    %1688 = vmatpush2.msra.mxu0 0.0
    %1689 = vmatprep.subr.mxu0 0.0
    %1690 = vmatpush2.msra.mxu0 0.0
    %1691 = vmatprep.subr.mxu0 0.0
    %1692 = vmatpush2.msra.mxu0 0.0
    %1693 = vmatprep.subr.mxu0 0.0
    %1694 = vmatpush2.msra.mxu0 0.0
    %1695 = vmatprep.subr.mxu0 0.0
    %1696 = vmatpush2.msra.mxu0 0.0
    %1697 = vmatprep.subr.mxu0 0.0
    %1698 = vmatpush2.msra.mxu0 0.0
    %1699 = vmatprep.subr.mxu0 0.0
    %1700 = vmatpush2.msra.mxu0 0.0
    %1701 = vmatprep.subr.mxu0 0.0
    %1702 = vmatpush2.msra.mxu0 0.0
    %1703 = vmatprep.subr.mxu0 0.0
    %1704 = vmatpush2.msra.mxu0 0.0
    %1705 = vmatprep.subr.mxu0 0.0
    %1706 = vmatpush2.msra.mxu0 0.0
    %1707 = vmatprep.subr.mxu0 0.0
    %1708 = vmatpush2.msra.mxu0 0.0
    %1709 = vmatprep.subr.mxu0 0.0
    %1710 = vmatpush2.msra.mxu0 0.0
    %1711 = vmatprep.subr.mxu0 0.0
    %1712 = vmatpush2.msra.mxu0 0.0
    %1713 = vmatprep.subr.mxu0 0.0
    %1714 = vmatpush2.msra.mxu0 0.0
    %1715 = vmatprep.subr.mxu0 0.0
    %1716 = vmatpush2.msra.mxu0 0.0
    %1717 = vmatprep.subr.mxu0 0.0
    %1718 = vmatpush2.msra.mxu0 0.0
    %1719 = vmatprep.mubr.f32.mxu0 0.0
    %v1720 = vand.u32 %v1181, 4294901760
    %v1721 = vsub.f32 %v1181, %v1720
    %v1722 = vand.u32 %v1721, 4294901760
    %1723 = vmatmul.mubr.f32.gmra.mxu0 %v1722
    %v1724 = vpop.f32.mrf.mxu0
    %v1725 = vadd.f32 %v1595, %v1724
    %v1726 = vpop.f32.mrf.mxu0
    %1727 = vmatprep.mubr.f32.mxu0 0.0
    %v1728 = vand.u32 %v1184, 4294901760
    %v1729 = vsub.f32 %v1184, %v1728
    %v1730 = vand.u32 %v1729, 4294901760
    %1731 = vmatmul.mubr.f32.gmra.mxu0 %v1730
    %v1732 = vpop.f32.mrf.mxu0
    %v1733 = vadd.f32 %v1602, %v1732
    %v1734 = vpop.f32.mrf.mxu0
    %1735 = vmatprep.mubr.f32.mxu0 0.0
    %v1736 = vand.u32 %v1187, 4294901760
    %v1737 = vsub.f32 %v1187, %v1736
    %v1738 = vand.u32 %v1737, 4294901760
    %1739 = vmatmul.mubr.f32.gmra.mxu0 %v1738
    %v1740 = vpop.f32.mrf.mxu0
    %v1741 = vadd.f32 %v1609, %v1740
    %v1742 = vpop.f32.mrf.mxu0
    %1743 = vmatprep.mubr.f32.mxu0 0.0
    %v1744 = vand.u32 %v1190, 4294901760
    %v1745 = vsub.f32 %v1190, %v1744
    %v1746 = vand.u32 %v1745, 4294901760
    %1747 = vmatmul.mubr.f32.gmra.mxu0 %v1746
    %v1748 = vpop.f32.mrf.mxu0
    %v1749 = vadd.f32 %v1616, %v1748
    %v1750 = vpop.f32.mrf.mxu0
    %1751 = vmatprep.mubr.f32.mxu0 0.0
    %v1752 = vand.u32 %v1193, 4294901760
    %v1753 = vsub.f32 %v1193, %v1752
    %v1754 = vand.u32 %v1753, 4294901760
    %1755 = vmatmul.mubr.f32.gmra.mxu0 %v1754
    %v1756 = vpop.f32.mrf.mxu0
    %v1757 = vadd.f32 %v1623, %v1756
    %v1758 = vpop.f32.mrf.mxu0
    %1759 = vmatprep.mubr.f32.mxu0 0.0
    %v1760 = vand.u32 %v1196, 4294901760
    %v1761 = vsub.f32 %v1196, %v1760
    %v1762 = vand.u32 %v1761, 4294901760
    %1763 = vmatmul.mubr.f32.gmra.mxu0 %v1762
    %v1764 = vpop.f32.mrf.mxu0
    %v1765 = vadd.f32 %v1630, %v1764
    %v1766 = vpop.f32.mrf.mxu0
    %1767 = vmatprep.mubr.f32.mxu0 0.0
    %v1768 = vand.u32 %v1199, 4294901760
    %v1769 = vsub.f32 %v1199, %v1768
    %v1770 = vand.u32 %v1769, 4294901760
    %1771 = vmatmul.mubr.f32.gmra.mxu0 %v1770
    %v1772 = vpop.f32.mrf.mxu0
    %v1773 = vadd.f32 %v1637, %v1772
    %v1774 = vpop.f32.mrf.mxu0
    %1775 = vmatprep.mubr.f32.mxu0 0.0
    %v1776 = vand.u32 %v1202, 4294901760
    %v1777 = vsub.f32 %v1202, %v1776
    %v1778 = vand.u32 %v1777, 4294901760
    %1779 = vmatmul.mubr.f32.gmra.mxu0 %v1778
    %v1780 = vpop.f32.mrf.mxu0
    %v1781 = vadd.f32 %v1644, %v1780
    %v1782 = vpop.f32.mrf.mxu0
    %1783 = vdwg.mxu0
    %1784 = vmatprep.subr.mxu0 0.0
    %1785 = vmatpush1.msra.mxu0 0.0
    %1786 = vmatprep.subr.mxu0 0.0
    %1787 = vmatpush1.msra.mxu0 0.0
    %1788 = vmatprep.subr.mxu0 0.0
    %1789 = vmatpush1.msra.mxu0 0.0
    %1790 = vmatprep.subr.mxu0 0.0
    %1791 = vmatpush1.msra.mxu0 0.0
    %1792 = vmatprep.subr.mxu0 0.0
    %1793 = vmatpush1.msra.mxu0 0.0
    %1794 = vmatprep.subr.mxu0 0.0
    %1795 = vmatpush1.msra.mxu0 0.0
    %1796 = vmatprep.subr.mxu0 0.0
    %1797 = vmatpush1.msra.mxu0 0.0
    %1798 = vmatprep.subr.mxu0 0.0
    %1799 = vmatpush1.msra.mxu0 0.0
    %1800 = vmatprep.subr.mxu0 0.0
    %v1801 = vand.u32 %v1122, 4294901760
    %v1802 = vsub.f32 %v1122, %v1801
    %v1803 = vand.u32 %v1802, 4294901760
    %1804 = vmatpush1.msra.mxu0 %v1803
    %1805 = vmatprep.subr.mxu0 0.0
    %v1806 = vand.u32 %v1121, 4294901760
    %v1807 = vsub.f32 %v1121, %v1806
    %v1808 = vand.u32 %v1807, 4294901760
    %1809 = vmatpush1.msra.mxu0 %v1808
    %1810 = vmatprep.subr.mxu0 0.0
    %v1811 = vand.u32 %v1120, 4294901760
    %v1812 = vsub.f32 %v1120, %v1811
    %v1813 = vand.u32 %v1812, 4294901760
    %1814 = vmatpush1.msra.mxu0 %v1813
    %1815 = vmatprep.subr.mxu0 0.0
    %v1816 = vand.u32 %v1119, 4294901760
    %v1817 = vsub.f32 %v1119, %v1816
    %v1818 = vand.u32 %v1817, 4294901760
    %1819 = vmatpush1.msra.mxu0 %v1818
    %1820 = vmatprep.subr.mxu0 0.0
    %v1821 = vand.u32 %v1118, 4294901760
    %v1822 = vsub.f32 %v1118, %v1821
    %v1823 = vand.u32 %v1822, 4294901760
    %1824 = vmatpush1.msra.mxu0 %v1823
    %1825 = vmatprep.subr.mxu0 0.0
    %v1826 = vand.u32 %v1117, 4294901760
    %v1827 = vsub.f32 %v1117, %v1826
    %v1828 = vand.u32 %v1827, 4294901760
    %1829 = vmatpush1.msra.mxu0 %v1828
    %1830 = vmatprep.subr.mxu0 0.0
    %v1831 = vand.u32 %v1116, 4294901760
    %v1832 = vsub.f32 %v1116, %v1831
    %v1833 = vand.u32 %v1832, 4294901760
    %1834 = vmatpush1.msra.mxu0 %v1833
    %1835 = vmatprep.subr.mxu0 0.0
    %v1836 = vand.u32 %v1115, 4294901760
    %v1837 = vsub.f32 %v1115, %v1836
    %v1838 = vand.u32 %v1837, 4294901760
    %1839 = vmatpush1.msra.mxu0 %v1838
    %1840 = vmatprep.subr.mxu0 0.0
    %1841 = vmatpush2.msra.mxu0 0.0
    %1842 = vmatprep.subr.mxu0 0.0
    %1843 = vmatpush2.msra.mxu0 0.0
    %1844 = vmatprep.subr.mxu0 0.0
    %1845 = vmatpush2.msra.mxu0 0.0
    %1846 = vmatprep.subr.mxu0 0.0
    %1847 = vmatpush2.msra.mxu0 0.0
    %1848 = vmatprep.subr.mxu0 0.0
    %1849 = vmatpush2.msra.mxu0 0.0
    %1850 = vmatprep.subr.mxu0 0.0
    %1851 = vmatpush2.msra.mxu0 0.0
    %1852 = vmatprep.subr.mxu0 0.0
    %1853 = vmatpush2.msra.mxu0 0.0
    %1854 = vmatprep.subr.mxu0 0.0
    %1855 = vmatpush2.msra.mxu0 0.0
    %1856 = vmatprep.subr.mxu0 0.0
    %1857 = vmatpush2.msra.mxu0 0.0
    %1858 = vmatprep.subr.mxu0 0.0
    %1859 = vmatpush2.msra.mxu0 0.0
    %1860 = vmatprep.subr.mxu0 0.0
    %1861 = vmatpush2.msra.mxu0 0.0
    %1862 = vmatprep.subr.mxu0 0.0
    %1863 = vmatpush2.msra.mxu0 0.0
    %1864 = vmatprep.subr.mxu0 0.0
    %1865 = vmatpush2.msra.mxu0 0.0
    %1866 = vmatprep.subr.mxu0 0.0
    %1867 = vmatpush2.msra.mxu0 0.0
    %1868 = vmatprep.subr.mxu0 0.0
    %1869 = vmatpush2.msra.mxu0 0.0
    %1870 = vmatprep.subr.mxu0 0.0
    %1871 = vmatpush2.msra.mxu0 0.0
    %1872 = vmatprep.mubr.f32.mxu0 0.0
    %v1873 = vand.u32 %v1181, 4294901760
    %1874 = vmatmul.mubr.f32.gmra.mxu0 %v1873
    %v1875 = vpop.f32.mrf.mxu0
    %v1876 = vadd.f32 %v1725, %v1875
    %v1877 = vpop.f32.mrf.mxu0
    %1878 = vmatprep.mubr.f32.mxu0 0.0
    %v1879 = vand.u32 %v1184, 4294901760
    %1880 = vmatmul.mubr.f32.gmra.mxu0 %v1879
    %v1881 = vpop.f32.mrf.mxu0
    %v1882 = vadd.f32 %v1733, %v1881
    %v1883 = vpop.f32.mrf.mxu0
    %1884 = vmatprep.mubr.f32.mxu0 0.0
    %v1885 = vand.u32 %v1187, 4294901760
    %1886 = vmatmul.mubr.f32.gmra.mxu0 %v1885
    %v1887 = vpop.f32.mrf.mxu0
    %v1888 = vadd.f32 %v1741, %v1887
    %v1889 = vpop.f32.mrf.mxu0
    %1890 = vmatprep.mubr.f32.mxu0 0.0
    %v1891 = vand.u32 %v1190, 4294901760
    %1892 = vmatmul.mubr.f32.gmra.mxu0 %v1891
    %v1893 = vpop.f32.mrf.mxu0
    %v1894 = vadd.f32 %v1749, %v1893
    %v1895 = vpop.f32.mrf.mxu0
    %1896 = vmatprep.mubr.f32.mxu0 0.0
    %v1897 = vand.u32 %v1193, 4294901760
    %1898 = vmatmul.mubr.f32.gmra.mxu0 %v1897
    %v1899 = vpop.f32.mrf.mxu0
    %v1900 = vadd.f32 %v1757, %v1899
    %v1901 = vpop.f32.mrf.mxu0
    %1902 = vmatprep.mubr.f32.mxu0 0.0
    %v1903 = vand.u32 %v1196, 4294901760
    %1904 = vmatmul.mubr.f32.gmra.mxu0 %v1903
    %v1905 = vpop.f32.mrf.mxu0
    %v1906 = vadd.f32 %v1765, %v1905
    %v1907 = vpop.f32.mrf.mxu0
    %1908 = vmatprep.mubr.f32.mxu0 0.0
    %v1909 = vand.u32 %v1199, 4294901760
    %1910 = vmatmul.mubr.f32.gmra.mxu0 %v1909
    %v1911 = vpop.f32.mrf.mxu0
    %v1912 = vadd.f32 %v1773, %v1911
    %v1913 = vpop.f32.mrf.mxu0
    %1914 = vmatprep.mubr.f32.mxu0 0.0
    %v1915 = vand.u32 %v1202, 4294901760
    %1916 = vmatmul.mubr.f32.gmra.mxu0 %v1915
    %v1917 = vpop.f32.mrf.mxu0
    %v1918 = vadd.f32 %v1781, %v1917
    %v1919 = vpop.f32.mrf.mxu0
    %1920 = vdwg.mxu0
    %1921 = vmatprep.subr.mxu0 0.0
    %1922 = vmatpush1.msra.mxu0 0.0
    %1923 = vmatprep.subr.mxu0 0.0
    %1924 = vmatpush1.msra.mxu0 0.0
    %1925 = vmatprep.subr.mxu0 0.0
    %1926 = vmatpush1.msra.mxu0 0.0
    %1927 = vmatprep.subr.mxu0 0.0
    %1928 = vmatpush1.msra.mxu0 0.0
    %1929 = vmatprep.subr.mxu0 0.0
    %1930 = vmatpush1.msra.mxu0 0.0
    %1931 = vmatprep.subr.mxu0 0.0
    %1932 = vmatpush1.msra.mxu0 0.0
    %1933 = vmatprep.subr.mxu0 0.0
    %1934 = vmatpush1.msra.mxu0 0.0
    %1935 = vmatprep.subr.mxu0 0.0
    %1936 = vmatpush1.msra.mxu0 0.0
    %1937 = vmatprep.subr.mxu0 0.0
    %v1938 = vand.u32 %v1122, 4294901760
    %1939 = vmatpush1.msra.mxu0 %v1938
    %1940 = vmatprep.subr.mxu0 0.0
    %v1941 = vand.u32 %v1121, 4294901760
    %1942 = vmatpush1.msra.mxu0 %v1941
    %1943 = vmatprep.subr.mxu0 0.0
    %v1944 = vand.u32 %v1120, 4294901760
    %1945 = vmatpush1.msra.mxu0 %v1944
    %1946 = vmatprep.subr.mxu0 0.0
    %v1947 = vand.u32 %v1119, 4294901760
    %1948 = vmatpush1.msra.mxu0 %v1947
    %1949 = vmatprep.subr.mxu0 0.0
    %v1950 = vand.u32 %v1118, 4294901760
    %1951 = vmatpush1.msra.mxu0 %v1950
    %1952 = vmatprep.subr.mxu0 0.0
    %v1953 = vand.u32 %v1117, 4294901760
    %1954 = vmatpush1.msra.mxu0 %v1953
    %1955 = vmatprep.subr.mxu0 0.0
    %v1956 = vand.u32 %v1116, 4294901760
    %1957 = vmatpush1.msra.mxu0 %v1956
    %1958 = vmatprep.subr.mxu0 0.0
    %v1959 = vand.u32 %v1115, 4294901760
    %1960 = vmatpush1.msra.mxu0 %v1959
    %1961 = vmatprep.subr.mxu0 0.0
    %1962 = vmatpush2.msra.mxu0 0.0
    %1963 = vmatprep.subr.mxu0 0.0
    %1964 = vmatpush2.msra.mxu0 0.0
    %1965 = vmatprep.subr.mxu0 0.0
    %1966 = vmatpush2.msra.mxu0 0.0
    %1967 = vmatprep.subr.mxu0 0.0
    %1968 = vmatpush2.msra.mxu0 0.0
    %1969 = vmatprep.subr.mxu0 0.0
    %1970 = vmatpush2.msra.mxu0 0.0
    %1971 = vmatprep.subr.mxu0 0.0
    %1972 = vmatpush2.msra.mxu0 0.0
    %1973 = vmatprep.subr.mxu0 0.0
    %1974 = vmatpush2.msra.mxu0 0.0
    %1975 = vmatprep.subr.mxu0 0.0
    %1976 = vmatpush2.msra.mxu0 0.0
    %1977 = vmatprep.subr.mxu0 0.0
    %1978 = vmatpush2.msra.mxu0 0.0
    %1979 = vmatprep.subr.mxu0 0.0
    %1980 = vmatpush2.msra.mxu0 0.0
    %1981 = vmatprep.subr.mxu0 0.0
    %1982 = vmatpush2.msra.mxu0 0.0
    %1983 = vmatprep.subr.mxu0 0.0
    %1984 = vmatpush2.msra.mxu0 0.0
    %1985 = vmatprep.subr.mxu0 0.0
    %1986 = vmatpush2.msra.mxu0 0.0
    %1987 = vmatprep.subr.mxu0 0.0
    %1988 = vmatpush2.msra.mxu0 0.0
    %1989 = vmatprep.subr.mxu0 0.0
    %1990 = vmatpush2.msra.mxu0 0.0
    %1991 = vmatprep.subr.mxu0 0.0
    %1992 = vmatpush2.msra.mxu0 0.0
    %1993 = vmatprep.mubr.f32.mxu0 0.0
    %v1994 = vand.u32 %v1181, 4294901760
    %1995 = vmatmul.mubr.f32.gmra.mxu0 %v1994
    %v1996 = vpop.f32.mrf.mxu0
    %v1997 = vadd.f32 %v1876, %v1996
    %v1998 = vpop.f32.mrf.mxu0
    %1999 = vmatprep.mubr.f32.mxu0 0.0
    %v2000 = vand.u32 %v1184, 4294901760
    %2001 = vmatmul.mubr.f32.gmra.mxu0 %v2000
    %v2002 = vpop.f32.mrf.mxu0
    %v2003 = vadd.f32 %v1882, %v2002
    %v2004 = vpop.f32.mrf.mxu0
    %2005 = vmatprep.mubr.f32.mxu0 0.0
    %v2006 = vand.u32 %v1187, 4294901760
    %2007 = vmatmul.mubr.f32.gmra.mxu0 %v2006
    %v2008 = vpop.f32.mrf.mxu0
    %v2009 = vadd.f32 %v1888, %v2008
    %v2010 = vpop.f32.mrf.mxu0
    %2011 = vmatprep.mubr.f32.mxu0 0.0
    %v2012 = vand.u32 %v1190, 4294901760
    %2013 = vmatmul.mubr.f32.gmra.mxu0 %v2012
    %v2014 = vpop.f32.mrf.mxu0
    %v2015 = vadd.f32 %v1894, %v2014
    %v2016 = vpop.f32.mrf.mxu0
    %2017 = vmatprep.mubr.f32.mxu0 0.0
    %v2018 = vand.u32 %v1193, 4294901760
    %2019 = vmatmul.mubr.f32.gmra.mxu0 %v2018
    %v2020 = vpop.f32.mrf.mxu0
    %v2021 = vadd.f32 %v1900, %v2020
    %v2022 = vpop.f32.mrf.mxu0
    %2023 = vmatprep.mubr.f32.mxu0 0.0
    %v2024 = vand.u32 %v1196, 4294901760
    %2025 = vmatmul.mubr.f32.gmra.mxu0 %v2024
    %v2026 = vpop.f32.mrf.mxu0
    %v2027 = vadd.f32 %v1906, %v2026
    %v2028 = vpop.f32.mrf.mxu0
    %2029 = vmatprep.mubr.f32.mxu0 0.0
    %v2030 = vand.u32 %v1199, 4294901760
    %2031 = vmatmul.mubr.f32.gmra.mxu0 %v2030
    %v2032 = vpop.f32.mrf.mxu0
    %v2033 = vadd.f32 %v1912, %v2032
    %v2034 = vpop.f32.mrf.mxu0
    %2035 = vmatprep.mubr.f32.mxu0 0.0
    %v2036 = vand.u32 %v1202, 4294901760
    %2037 = vmatmul.mubr.f32.gmra.mxu0 %v2036
    %v2038 = vpop.f32.mrf.mxu0
    %v2039 = vadd.f32 %v1918, %v2038
    %v2040 = vpop.f32.mrf.mxu0
    %2041 = vdwg.mxu0
    %v2042 = vtanh.pop %v1997
    %v2043 = vtanh.pop %v2003
    %v2044 = vtanh.pop %v2009
    %v2045 = vtanh.pop %v2015
    %v2046 = vtanh.pop %v2021
    %v2047 = vtanh.pop %v2027
    %v2048 = vtanh.pop %v2033
    %v2049 = vtanh.pop %v2039
    %s2050 = scalar_lea.vmem %s3, 64
    %v2051 = vld [vmem:[%s2050] sm:$0xff]
    %v2052 = vld [vmem:[%s2050 + $0x8] sm:$0xff]
    %v2053 = vld [vmem:[%s2050 + $0x10] sm:$0xff]
    %v2054 = vld [vmem:[%s2050 + $0x18] sm:$0xff]
    %v2055 = vld [vmem:[%s2050 + $0x20] sm:$0xff]
    %v2056 = vld [vmem:[%s2050 + $0x28] sm:$0xff]
    %v2057 = vld [vmem:[%s2050 + $0x30] sm:$0xff]
    %v2058 = vld [vmem:[%s2050 + $0x38] sm:$0xff]
    %s2059 = scalar_lea.vmem %s4, 64
    %v2060 = vld [vmem:[%s2059] sm:$0xff]
    %v2061 = vld [vmem:[%s2059 + $0x8] sm:$0xff]
    %v2062 = vld [vmem:[%s2059 + $0x10] sm:$0xff]
    %v2063 = vld [vmem:[%s2059 + $0x18] sm:$0xff]
    %v2064 = vld [vmem:[%s2059 + $0x20] sm:$0xff]
    %v2065 = vld [vmem:[%s2059 + $0x28] sm:$0xff]
    %v2066 = vld [vmem:[%s2059 + $0x30] sm:$0xff]
    %v2067 = vld [vmem:[%s2059 + $0x38] sm:$0xff]
    %2069 = vset.pattern.permute.xlu0 0
    %2070 = vperm.xlu0 %2069, %v2060
    %v2071 = vpop.permute.xlu0 %2070
    %2074 = vset.pattern.permute.xlu0 0
    %2075 = vperm.xlu0 %2074, %v2061
    %v2076 = vpop.permute.xlu0 %2075
    %2079 = vset.pattern.permute.xlu0 0
    %2080 = vperm.xlu0 %2079, %v2062
    %v2081 = vpop.permute.xlu0 %2080
    %2084 = vset.pattern.permute.xlu0 0
    %2085 = vperm.xlu0 %2084, %v2063
    %v2086 = vpop.permute.xlu0 %2085
    %2089 = vset.pattern.permute.xlu0 0
    %2090 = vperm.xlu0 %2089, %v2064
    %v2091 = vpop.permute.xlu0 %2090
    %2094 = vset.pattern.permute.xlu0 0
    %2095 = vperm.xlu0 %2094, %v2065
    %v2096 = vpop.permute.xlu0 %2095
    %2099 = vset.pattern.permute.xlu0 0
    %2100 = vperm.xlu0 %2099, %v2066
    %v2101 = vpop.permute.xlu0 %2100
    %2104 = vset.pattern.permute.xlu0 0
    %2105 = vperm.xlu0 %2104, %v2067
    %v2106 = vpop.permute.xlu0 %2105
    %v2109 = vsel %vm1179, %v2051, 0
    %v2112 = vsel %vm1179, %v2052, 0
    %v2115 = vsel %vm1179, %v2053, 0
    %v2118 = vsel %vm1179, %v2054, 0
    %v2121 = vsel %vm1179, %v2055, 0
    %v2124 = vsel %vm1179, %v2056, 0
    %v2127 = vsel %vm1179, %v2057, 0
    %v2130 = vsel %vm1179, %v2058, 0
    %2132 = vmatprep.subr.mxu0 0.0
    %2133 = vmatpush1.msra.mxu0 0.0
    %2134 = vmatprep.subr.mxu0 0.0
    %2135 = vmatpush1.msra.mxu0 0.0
    %2136 = vmatprep.subr.mxu0 0.0
    %2137 = vmatpush1.msra.mxu0 0.0
    %2138 = vmatprep.subr.mxu0 0.0
    %2139 = vmatpush1.msra.mxu0 0.0
    %2140 = vmatprep.subr.mxu0 0.0
    %2141 = vmatpush1.msra.mxu0 0.0
    %2142 = vmatprep.subr.mxu0 0.0
    %2143 = vmatpush1.msra.mxu0 0.0
    %2144 = vmatprep.subr.mxu0 0.0
    %2145 = vmatpush1.msra.mxu0 0.0
    %2146 = vmatprep.subr.mxu0 0.0
    %2147 = vmatpush1.msra.mxu0 0.0
    %2148 = vmatprep.subr.mxu0 0.0
    %v2149 = vand.u32 %v2049, 4294901760
    %2150 = vmatpush1.msra.mxu0 %v2149
    %2151 = vmatprep.subr.mxu0 0.0
    %v2152 = vand.u32 %v2048, 4294901760
    %2153 = vmatpush1.msra.mxu0 %v2152
    %2154 = vmatprep.subr.mxu0 0.0
    %v2155 = vand.u32 %v2047, 4294901760
    %2156 = vmatpush1.msra.mxu0 %v2155
    %2157 = vmatprep.subr.mxu0 0.0
    %v2158 = vand.u32 %v2046, 4294901760
    %2159 = vmatpush1.msra.mxu0 %v2158
    %2160 = vmatprep.subr.mxu0 0.0
    %v2161 = vand.u32 %v2045, 4294901760
    %2162 = vmatpush1.msra.mxu0 %v2161
    %2163 = vmatprep.subr.mxu0 0.0
    %v2164 = vand.u32 %v2044, 4294901760
    %2165 = vmatpush1.msra.mxu0 %v2164
    %2166 = vmatprep.subr.mxu0 0.0
    %v2167 = vand.u32 %v2043, 4294901760
    %2168 = vmatpush1.msra.mxu0 %v2167
    %2169 = vmatprep.subr.mxu0 0.0
    %v2170 = vand.u32 %v2042, 4294901760
    %2171 = vmatpush1.msra.mxu0 %v2170
    %2172 = vmatprep.subr.mxu0 0.0
    %2173 = vmatpush2.msra.mxu0 0.0
    %2174 = vmatprep.subr.mxu0 0.0
    %2175 = vmatpush2.msra.mxu0 0.0
    %2176 = vmatprep.subr.mxu0 0.0
    %2177 = vmatpush2.msra.mxu0 0.0
    %2178 = vmatprep.subr.mxu0 0.0
    %2179 = vmatpush2.msra.mxu0 0.0
    %2180 = vmatprep.subr.mxu0 0.0
    %2181 = vmatpush2.msra.mxu0 0.0
    %2182 = vmatprep.subr.mxu0 0.0
    %2183 = vmatpush2.msra.mxu0 0.0
    %2184 = vmatprep.subr.mxu0 0.0
    %2185 = vmatpush2.msra.mxu0 0.0
    %2186 = vmatprep.subr.mxu0 0.0
    %2187 = vmatpush2.msra.mxu0 0.0
    %2188 = vmatprep.subr.mxu0 0.0
    %2189 = vmatpush2.msra.mxu0 0.0
    %2190 = vmatprep.subr.mxu0 0.0
    %2191 = vmatpush2.msra.mxu0 0.0
    %2192 = vmatprep.subr.mxu0 0.0
    %2193 = vmatpush2.msra.mxu0 0.0
    %2194 = vmatprep.subr.mxu0 0.0
    %2195 = vmatpush2.msra.mxu0 0.0
    %2196 = vmatprep.subr.mxu0 0.0
    %2197 = vmatpush2.msra.mxu0 0.0
    %2198 = vmatprep.subr.mxu0 0.0
    %2199 = vmatpush2.msra.mxu0 0.0
    %2200 = vmatprep.subr.mxu0 0.0
    %2201 = vmatpush2.msra.mxu0 0.0
    %2202 = vmatprep.subr.mxu0 0.0
    %2203 = vmatpush2.msra.mxu0 0.0
    %2204 = vmatprep.mubr.f32.mxu0 0.0
    %v2205 = vand.u32 %v2109, 4294901760
    %v2206 = vsub.f32 %v2109, %v2205
    %v2207 = vand.u32 %v2206, 4294901760
    %v2208 = vsub.f32 %v2206, %v2207
    %v2209 = vand.u32 %v2208, 4294901760
    %2210 = vmatmul.mubr.f32.gmra.mxu0 %v2209
    %v2211 = vpop.f32.mrf.mxu0
    %v2212 = vadd.f32 %v2071, %v2211
    %v2213 = vpop.f32.mrf.mxu0
    %2214 = vmatprep.mubr.f32.mxu0 0.0
    %v2215 = vand.u32 %v2112, 4294901760
    %v2216 = vsub.f32 %v2112, %v2215
    %v2217 = vand.u32 %v2216, 4294901760
    %v2218 = vsub.f32 %v2216, %v2217
    %v2219 = vand.u32 %v2218, 4294901760
    %2220 = vmatmul.mubr.f32.gmra.mxu0 %v2219
    %v2221 = vpop.f32.mrf.mxu0
    %v2222 = vadd.f32 %v2076, %v2221
    %v2223 = vpop.f32.mrf.mxu0
    %2224 = vmatprep.mubr.f32.mxu0 0.0
    %v2225 = vand.u32 %v2115, 4294901760
    %v2226 = vsub.f32 %v2115, %v2225
    %v2227 = vand.u32 %v2226, 4294901760
    %v2228 = vsub.f32 %v2226, %v2227
    %v2229 = vand.u32 %v2228, 4294901760
    %2230 = vmatmul.mubr.f32.gmra.mxu0 %v2229
    %v2231 = vpop.f32.mrf.mxu0
    %v2232 = vadd.f32 %v2081, %v2231
    %v2233 = vpop.f32.mrf.mxu0
    %2234 = vmatprep.mubr.f32.mxu0 0.0
    %v2235 = vand.u32 %v2118, 4294901760
    %v2236 = vsub.f32 %v2118, %v2235
    %v2237 = vand.u32 %v2236, 4294901760
    %v2238 = vsub.f32 %v2236, %v2237
    %v2239 = vand.u32 %v2238, 4294901760
    %2240 = vmatmul.mubr.f32.gmra.mxu0 %v2239
    %v2241 = vpop.f32.mrf.mxu0
    %v2242 = vadd.f32 %v2086, %v2241
    %v2243 = vpop.f32.mrf.mxu0
    %2244 = vmatprep.mubr.f32.mxu0 0.0
    %v2245 = vand.u32 %v2121, 4294901760
    %v2246 = vsub.f32 %v2121, %v2245
    %v2247 = vand.u32 %v2246, 4294901760
    %v2248 = vsub.f32 %v2246, %v2247
    %v2249 = vand.u32 %v2248, 4294901760
    %2250 = vmatmul.mubr.f32.gmra.mxu0 %v2249
    %v2251 = vpop.f32.mrf.mxu0
    %v2252 = vadd.f32 %v2091, %v2251
    %v2253 = vpop.f32.mrf.mxu0
    %2254 = vmatprep.mubr.f32.mxu0 0.0
    %v2255 = vand.u32 %v2124, 4294901760
    %v2256 = vsub.f32 %v2124, %v2255
    %v2257 = vand.u32 %v2256, 4294901760
    %v2258 = vsub.f32 %v2256, %v2257
    %v2259 = vand.u32 %v2258, 4294901760
    %2260 = vmatmul.mubr.f32.gmra.mxu0 %v2259
    %v2261 = vpop.f32.mrf.mxu0
    %v2262 = vadd.f32 %v2096, %v2261
    %v2263 = vpop.f32.mrf.mxu0
    %2264 = vmatprep.mubr.f32.mxu0 0.0
    %v2265 = vand.u32 %v2127, 4294901760
    %v2266 = vsub.f32 %v2127, %v2265
    %v2267 = vand.u32 %v2266, 4294901760
    %v2268 = vsub.f32 %v2266, %v2267
    %v2269 = vand.u32 %v2268, 4294901760
    %2270 = vmatmul.mubr.f32.gmra.mxu0 %v2269
    %v2271 = vpop.f32.mrf.mxu0
    %v2272 = vadd.f32 %v2101, %v2271
    %v2273 = vpop.f32.mrf.mxu0
    %2274 = vmatprep.mubr.f32.mxu0 0.0
    %v2275 = vand.u32 %v2130, 4294901760
    %v2276 = vsub.f32 %v2130, %v2275
    %v2277 = vand.u32 %v2276, 4294901760
    %v2278 = vsub.f32 %v2276, %v2277
    %v2279 = vand.u32 %v2278, 4294901760
    %2280 = vmatmul.mubr.f32.gmra.mxu0 %v2279
    %v2281 = vpop.f32.mrf.mxu0
    %v2282 = vadd.f32 %v2106, %v2281
    %v2283 = vpop.f32.mrf.mxu0
    %2284 = vdwg.mxu0
    %2285 = vmatprep.subr.mxu0 0.0
    %2286 = vmatpush1.msra.mxu0 0.0
    %2287 = vmatprep.subr.mxu0 0.0
    %2288 = vmatpush1.msra.mxu0 0.0
    %2289 = vmatprep.subr.mxu0 0.0
    %2290 = vmatpush1.msra.mxu0 0.0
    %2291 = vmatprep.subr.mxu0 0.0
    %2292 = vmatpush1.msra.mxu0 0.0
    %2293 = vmatprep.subr.mxu0 0.0
    %2294 = vmatpush1.msra.mxu0 0.0
    %2295 = vmatprep.subr.mxu0 0.0
    %2296 = vmatpush1.msra.mxu0 0.0
    %2297 = vmatprep.subr.mxu0 0.0
    %2298 = vmatpush1.msra.mxu0 0.0
    %2299 = vmatprep.subr.mxu0 0.0
    %2300 = vmatpush1.msra.mxu0 0.0
    %2301 = vmatprep.subr.mxu0 0.0
    %v2302 = vand.u32 %v2049, 4294901760
    %v2303 = vsub.f32 %v2049, %v2302
    %v2304 = vand.u32 %v2303, 4294901760
    %v2305 = vsub.f32 %v2303, %v2304
    %v2306 = vand.u32 %v2305, 4294901760
    %2307 = vmatpush1.msra.mxu0 %v2306
    %2308 = vmatprep.subr.mxu0 0.0
    %v2309 = vand.u32 %v2048, 4294901760
    %v2310 = vsub.f32 %v2048, %v2309
    %v2311 = vand.u32 %v2310, 4294901760
    %v2312 = vsub.f32 %v2310, %v2311
    %v2313 = vand.u32 %v2312, 4294901760
    %2314 = vmatpush1.msra.mxu0 %v2313
    %2315 = vmatprep.subr.mxu0 0.0
    %v2316 = vand.u32 %v2047, 4294901760
    %v2317 = vsub.f32 %v2047, %v2316
    %v2318 = vand.u32 %v2317, 4294901760
    %v2319 = vsub.f32 %v2317, %v2318
    %v2320 = vand.u32 %v2319, 4294901760
    %2321 = vmatpush1.msra.mxu0 %v2320
    %2322 = vmatprep.subr.mxu0 0.0
    %v2323 = vand.u32 %v2046, 4294901760
    %v2324 = vsub.f32 %v2046, %v2323
    %v2325 = vand.u32 %v2324, 4294901760
    %v2326 = vsub.f32 %v2324, %v2325
    %v2327 = vand.u32 %v2326, 4294901760
    %2328 = vmatpush1.msra.mxu0 %v2327
    %2329 = vmatprep.subr.mxu0 0.0
    %v2330 = vand.u32 %v2045, 4294901760
    %v2331 = vsub.f32 %v2045, %v2330
    %v2332 = vand.u32 %v2331, 4294901760
    %v2333 = vsub.f32 %v2331, %v2332
    %v2334 = vand.u32 %v2333, 4294901760
    %2335 = vmatpush1.msra.mxu0 %v2334
    %2336 = vmatprep.subr.mxu0 0.0
    %v2337 = vand.u32 %v2044, 4294901760
    %v2338 = vsub.f32 %v2044, %v2337
    %v2339 = vand.u32 %v2338, 4294901760
    %v2340 = vsub.f32 %v2338, %v2339
    %v2341 = vand.u32 %v2340, 4294901760
    %2342 = vmatpush1.msra.mxu0 %v2341
    %2343 = vmatprep.subr.mxu0 0.0
    %v2344 = vand.u32 %v2043, 4294901760
    %v2345 = vsub.f32 %v2043, %v2344
    %v2346 = vand.u32 %v2345, 4294901760
    %v2347 = vsub.f32 %v2345, %v2346
    %v2348 = vand.u32 %v2347, 4294901760
    %2349 = vmatpush1.msra.mxu0 %v2348
    %2350 = vmatprep.subr.mxu0 0.0
    %v2351 = vand.u32 %v2042, 4294901760
    %v2352 = vsub.f32 %v2042, %v2351
    %v2353 = vand.u32 %v2352, 4294901760
    %v2354 = vsub.f32 %v2352, %v2353
    %v2355 = vand.u32 %v2354, 4294901760
    %2356 = vmatpush1.msra.mxu0 %v2355
    %2357 = vmatprep.subr.mxu0 0.0
    %2358 = vmatpush2.msra.mxu0 0.0
    %2359 = vmatprep.subr.mxu0 0.0
    %2360 = vmatpush2.msra.mxu0 0.0
    %2361 = vmatprep.subr.mxu0 0.0
    %2362 = vmatpush2.msra.mxu0 0.0
    %2363 = vmatprep.subr.mxu0 0.0
    %2364 = vmatpush2.msra.mxu0 0.0
    %2365 = vmatprep.subr.mxu0 0.0
    %2366 = vmatpush2.msra.mxu0 0.0
    %2367 = vmatprep.subr.mxu0 0.0
    %2368 = vmatpush2.msra.mxu0 0.0
    %2369 = vmatprep.subr.mxu0 0.0
    %2370 = vmatpush2.msra.mxu0 0.0
    %2371 = vmatprep.subr.mxu0 0.0
    %2372 = vmatpush2.msra.mxu0 0.0
    %2373 = vmatprep.subr.mxu0 0.0
    %2374 = vmatpush2.msra.mxu0 0.0
    %2375 = vmatprep.subr.mxu0 0.0
    %2376 = vmatpush2.msra.mxu0 0.0
    %2377 = vmatprep.subr.mxu0 0.0
    %2378 = vmatpush2.msra.mxu0 0.0
    %2379 = vmatprep.subr.mxu0 0.0
    %2380 = vmatpush2.msra.mxu0 0.0
    %2381 = vmatprep.subr.mxu0 0.0
    %2382 = vmatpush2.msra.mxu0 0.0
    %2383 = vmatprep.subr.mxu0 0.0
    %2384 = vmatpush2.msra.mxu0 0.0
    %2385 = vmatprep.subr.mxu0 0.0
    %2386 = vmatpush2.msra.mxu0 0.0
    %2387 = vmatprep.subr.mxu0 0.0
    %2388 = vmatpush2.msra.mxu0 0.0
    %2389 = vmatprep.mubr.f32.mxu0 0.0
    %v2390 = vand.u32 %v2109, 4294901760
    %2391 = vmatmul.mubr.f32.gmra.mxu0 %v2390
    %v2392 = vpop.f32.mrf.mxu0
    %v2393 = vadd.f32 %v2212, %v2392
    %v2394 = vpop.f32.mrf.mxu0
    %2395 = vmatprep.mubr.f32.mxu0 0.0
    %v2396 = vand.u32 %v2112, 4294901760
    %2397 = vmatmul.mubr.f32.gmra.mxu0 %v2396
    %v2398 = vpop.f32.mrf.mxu0
    %v2399 = vadd.f32 %v2222, %v2398
    %v2400 = vpop.f32.mrf.mxu0
    %2401 = vmatprep.mubr.f32.mxu0 0.0
    %v2402 = vand.u32 %v2115, 4294901760
    %2403 = vmatmul.mubr.f32.gmra.mxu0 %v2402
    %v2404 = vpop.f32.mrf.mxu0
    %v2405 = vadd.f32 %v2232, %v2404
    %v2406 = vpop.f32.mrf.mxu0
    %2407 = vmatprep.mubr.f32.mxu0 0.0
    %v2408 = vand.u32 %v2118, 4294901760
    %2409 = vmatmul.mubr.f32.gmra.mxu0 %v2408
    %v2410 = vpop.f32.mrf.mxu0
    %v2411 = vadd.f32 %v2242, %v2410
    %v2412 = vpop.f32.mrf.mxu0
    %2413 = vmatprep.mubr.f32.mxu0 0.0
    %v2414 = vand.u32 %v2121, 4294901760
    %2415 = vmatmul.mubr.f32.gmra.mxu0 %v2414
    %v2416 = vpop.f32.mrf.mxu0
    %v2417 = vadd.f32 %v2252, %v2416
    %v2418 = vpop.f32.mrf.mxu0
    %2419 = vmatprep.mubr.f32.mxu0 0.0
    %v2420 = vand.u32 %v2124, 4294901760
    %2421 = vmatmul.mubr.f32.gmra.mxu0 %v2420
    %v2422 = vpop.f32.mrf.mxu0
    %v2423 = vadd.f32 %v2262, %v2422
    %v2424 = vpop.f32.mrf.mxu0
    %2425 = vmatprep.mubr.f32.mxu0 0.0
    %v2426 = vand.u32 %v2127, 4294901760
    %2427 = vmatmul.mubr.f32.gmra.mxu0 %v2426
    %v2428 = vpop.f32.mrf.mxu0
    %v2429 = vadd.f32 %v2272, %v2428
    %v2430 = vpop.f32.mrf.mxu0
    %2431 = vmatprep.mubr.f32.mxu0 0.0
    %v2432 = vand.u32 %v2130, 4294901760
    %2433 = vmatmul.mubr.f32.gmra.mxu0 %v2432
    %v2434 = vpop.f32.mrf.mxu0
    %v2435 = vadd.f32 %v2282, %v2434
    %v2436 = vpop.f32.mrf.mxu0
    %2437 = vdwg.mxu0
    %2438 = vmatprep.subr.mxu0 0.0
    %2439 = vmatpush1.msra.mxu0 0.0
    %2440 = vmatprep.subr.mxu0 0.0
    %2441 = vmatpush1.msra.mxu0 0.0
    %2442 = vmatprep.subr.mxu0 0.0
    %2443 = vmatpush1.msra.mxu0 0.0
    %2444 = vmatprep.subr.mxu0 0.0
    %2445 = vmatpush1.msra.mxu0 0.0
    %2446 = vmatprep.subr.mxu0 0.0
    %2447 = vmatpush1.msra.mxu0 0.0
    %2448 = vmatprep.subr.mxu0 0.0
    %2449 = vmatpush1.msra.mxu0 0.0
    %2450 = vmatprep.subr.mxu0 0.0
    %2451 = vmatpush1.msra.mxu0 0.0
    %2452 = vmatprep.subr.mxu0 0.0
    %2453 = vmatpush1.msra.mxu0 0.0
    %2454 = vmatprep.subr.mxu0 0.0
    %v2455 = vand.u32 %v2049, 4294901760
    %v2456 = vsub.f32 %v2049, %v2455
    %2457 = vmatpush1.msra.mxu0 %v2456
    %2458 = vmatprep.subr.mxu0 0.0
    %v2459 = vand.u32 %v2048, 4294901760
    %v2460 = vsub.f32 %v2048, %v2459
    %2461 = vmatpush1.msra.mxu0 %v2460
    %2462 = vmatprep.subr.mxu0 0.0
    %v2463 = vand.u32 %v2047, 4294901760
    %v2464 = vsub.f32 %v2047, %v2463
    %2465 = vmatpush1.msra.mxu0 %v2464
    %2466 = vmatprep.subr.mxu0 0.0
    %v2467 = vand.u32 %v2046, 4294901760
    %v2468 = vsub.f32 %v2046, %v2467
    %2469 = vmatpush1.msra.mxu0 %v2468
    %2470 = vmatprep.subr.mxu0 0.0
    %v2471 = vand.u32 %v2045, 4294901760
    %v2472 = vsub.f32 %v2045, %v2471
    %2473 = vmatpush1.msra.mxu0 %v2472
    %2474 = vmatprep.subr.mxu0 0.0
    %v2475 = vand.u32 %v2044, 4294901760
    %v2476 = vsub.f32 %v2044, %v2475
    %2477 = vmatpush1.msra.mxu0 %v2476
    %2478 = vmatprep.subr.mxu0 0.0
    %v2479 = vand.u32 %v2043, 4294901760
    %v2480 = vsub.f32 %v2043, %v2479
    %2481 = vmatpush1.msra.mxu0 %v2480
    %2482 = vmatprep.subr.mxu0 0.0
    %v2483 = vand.u32 %v2042, 4294901760
    %v2484 = vsub.f32 %v2042, %v2483
    %2485 = vmatpush1.msra.mxu0 %v2484
    %2486 = vmatprep.subr.mxu0 0.0
    %2487 = vmatpush2.msra.mxu0 0.0
    %2488 = vmatprep.subr.mxu0 0.0
    %2489 = vmatpush2.msra.mxu0 0.0
    %2490 = vmatprep.subr.mxu0 0.0
    %2491 = vmatpush2.msra.mxu0 0.0
    %2492 = vmatprep.subr.mxu0 0.0
    %2493 = vmatpush2.msra.mxu0 0.0
    %2494 = vmatprep.subr.mxu0 0.0
    %2495 = vmatpush2.msra.mxu0 0.0
    %2496 = vmatprep.subr.mxu0 0.0
    %2497 = vmatpush2.msra.mxu0 0.0
    %2498 = vmatprep.subr.mxu0 0.0
    %2499 = vmatpush2.msra.mxu0 0.0
    %2500 = vmatprep.subr.mxu0 0.0
    %2501 = vmatpush2.msra.mxu0 0.0
    %2502 = vmatprep.subr.mxu0 0.0
    %2503 = vmatpush2.msra.mxu0 0.0
    %2504 = vmatprep.subr.mxu0 0.0
    %2505 = vmatpush2.msra.mxu0 0.0
    %2506 = vmatprep.subr.mxu0 0.0
    %2507 = vmatpush2.msra.mxu0 0.0
    %2508 = vmatprep.subr.mxu0 0.0
    %2509 = vmatpush2.msra.mxu0 0.0
    %2510 = vmatprep.subr.mxu0 0.0
    %2511 = vmatpush2.msra.mxu0 0.0
    %2512 = vmatprep.subr.mxu0 0.0
    %2513 = vmatpush2.msra.mxu0 0.0
    %2514 = vmatprep.subr.mxu0 0.0
    %2515 = vmatpush2.msra.mxu0 0.0
    %2516 = vmatprep.subr.mxu0 0.0
    %2517 = vmatpush2.msra.mxu0 0.0
    %2518 = vmatprep.mubr.f32.mxu0 0.0
    %v2519 = vand.u32 %v2109, 4294901760
    %v2520 = vsub.f32 %v2109, %v2519
    %2521 = vmatmul.mubr.f32.gmra.mxu0 %v2520
    %v2522 = vpop.f32.mrf.mxu0
    %v2523 = vadd.f32 %v2393, %v2522
    %v2524 = vpop.f32.mrf.mxu0
    %2525 = vmatprep.mubr.f32.mxu0 0.0
    %v2526 = vand.u32 %v2112, 4294901760
    %v2527 = vsub.f32 %v2112, %v2526
    %2528 = vmatmul.mubr.f32.gmra.mxu0 %v2527
    %v2529 = vpop.f32.mrf.mxu0
    %v2530 = vadd.f32 %v2399, %v2529
    %v2531 = vpop.f32.mrf.mxu0
    %2532 = vmatprep.mubr.f32.mxu0 0.0
    %v2533 = vand.u32 %v2115, 4294901760
    %v2534 = vsub.f32 %v2115, %v2533
    %2535 = vmatmul.mubr.f32.gmra.mxu0 %v2534
    %v2536 = vpop.f32.mrf.mxu0
    %v2537 = vadd.f32 %v2405, %v2536
    %v2538 = vpop.f32.mrf.mxu0
    %2539 = vmatprep.mubr.f32.mxu0 0.0
    %v2540 = vand.u32 %v2118, 4294901760
    %v2541 = vsub.f32 %v2118, %v2540
    %2542 = vmatmul.mubr.f32.gmra.mxu0 %v2541
    %v2543 = vpop.f32.mrf.mxu0
    %v2544 = vadd.f32 %v2411, %v2543
    %v2545 = vpop.f32.mrf.mxu0
    %2546 = vmatprep.mubr.f32.mxu0 0.0
    %v2547 = vand.u32 %v2121, 4294901760
    %v2548 = vsub.f32 %v2121, %v2547
    %2549 = vmatmul.mubr.f32.gmra.mxu0 %v2548
    %v2550 = vpop.f32.mrf.mxu0
    %v2551 = vadd.f32 %v2417, %v2550
    %v2552 = vpop.f32.mrf.mxu0
    %2553 = vmatprep.mubr.f32.mxu0 0.0
    %v2554 = vand.u32 %v2124, 4294901760
    %v2555 = vsub.f32 %v2124, %v2554
    %2556 = vmatmul.mubr.f32.gmra.mxu0 %v2555
    %v2557 = vpop.f32.mrf.mxu0
    %v2558 = vadd.f32 %v2423, %v2557
    %v2559 = vpop.f32.mrf.mxu0
    %2560 = vmatprep.mubr.f32.mxu0 0.0
    %v2561 = vand.u32 %v2127, 4294901760
    %v2562 = vsub.f32 %v2127, %v2561
    %2563 = vmatmul.mubr.f32.gmra.mxu0 %v2562
    %v2564 = vpop.f32.mrf.mxu0
    %v2565 = vadd.f32 %v2429, %v2564
    %v2566 = vpop.f32.mrf.mxu0
    %2567 = vmatprep.mubr.f32.mxu0 0.0
    %v2568 = vand.u32 %v2130, 4294901760
    %v2569 = vsub.f32 %v2130, %v2568
    %2570 = vmatmul.mubr.f32.gmra.mxu0 %v2569
    %v2571 = vpop.f32.mrf.mxu0
    %v2572 = vadd.f32 %v2435, %v2571
    %v2573 = vpop.f32.mrf.mxu0
    %2574 = vdwg.mxu0
    %2575 = vmatprep.subr.mxu0 0.0
    %2576 = vmatpush1.msra.mxu0 0.0
    %2577 = vmatprep.subr.mxu0 0.0
    %2578 = vmatpush1.msra.mxu0 0.0
    %2579 = vmatprep.subr.mxu0 0.0
    %2580 = vmatpush1.msra.mxu0 0.0
    %2581 = vmatprep.subr.mxu0 0.0
    %2582 = vmatpush1.msra.mxu0 0.0
    %2583 = vmatprep.subr.mxu0 0.0
    %2584 = vmatpush1.msra.mxu0 0.0
    %2585 = vmatprep.subr.mxu0 0.0
    %2586 = vmatpush1.msra.mxu0 0.0
    %2587 = vmatprep.subr.mxu0 0.0
    %2588 = vmatpush1.msra.mxu0 0.0
    %2589 = vmatprep.subr.mxu0 0.0
    %2590 = vmatpush1.msra.mxu0 0.0
    %2591 = vmatprep.subr.mxu0 0.0
    %v2592 = vand.u32 %v2049, 4294901760
    %2593 = vmatpush1.msra.mxu0 %v2592
    %2594 = vmatprep.subr.mxu0 0.0
    %v2595 = vand.u32 %v2048, 4294901760
    %2596 = vmatpush1.msra.mxu0 %v2595
    %2597 = vmatprep.subr.mxu0 0.0
    %v2598 = vand.u32 %v2047, 4294901760
    %2599 = vmatpush1.msra.mxu0 %v2598
    %2600 = vmatprep.subr.mxu0 0.0
    %v2601 = vand.u32 %v2046, 4294901760
    %2602 = vmatpush1.msra.mxu0 %v2601
    %2603 = vmatprep.subr.mxu0 0.0
    %v2604 = vand.u32 %v2045, 4294901760
    %2605 = vmatpush1.msra.mxu0 %v2604
    %2606 = vmatprep.subr.mxu0 0.0
    %v2607 = vand.u32 %v2044, 4294901760
    %2608 = vmatpush1.msra.mxu0 %v2607
    %2609 = vmatprep.subr.mxu0 0.0
    %v2610 = vand.u32 %v2043, 4294901760
    %2611 = vmatpush1.msra.mxu0 %v2610
    %2612 = vmatprep.subr.mxu0 0.0
    %v2613 = vand.u32 %v2042, 4294901760
    %2614 = vmatpush1.msra.mxu0 %v2613
    %2615 = vmatprep.subr.mxu0 0.0
    %2616 = vmatpush2.msra.mxu0 0.0
    %2617 = vmatprep.subr.mxu0 0.0
    %2618 = vmatpush2.msra.mxu0 0.0
    %2619 = vmatprep.subr.mxu0 0.0
    %2620 = vmatpush2.msra.mxu0 0.0
    %2621 = vmatprep.subr.mxu0 0.0
    %2622 = vmatpush2.msra.mxu0 0.0
    %2623 = vmatprep.subr.mxu0 0.0
    %2624 = vmatpush2.msra.mxu0 0.0
    %2625 = vmatprep.subr.mxu0 0.0
    %2626 = vmatpush2.msra.mxu0 0.0
    %2627 = vmatprep.subr.mxu0 0.0
    %2628 = vmatpush2.msra.mxu0 0.0
    %2629 = vmatprep.subr.mxu0 0.0
    %2630 = vmatpush2.msra.mxu0 0.0
    %2631 = vmatprep.subr.mxu0 0.0
    %2632 = vmatpush2.msra.mxu0 0.0
    %2633 = vmatprep.subr.mxu0 0.0
    %2634 = vmatpush2.msra.mxu0 0.0
    %2635 = vmatprep.subr.mxu0 0.0
    %2636 = vmatpush2.msra.mxu0 0.0
    %2637 = vmatprep.subr.mxu0 0.0
    %2638 = vmatpush2.msra.mxu0 0.0
    %2639 = vmatprep.subr.mxu0 0.0
    %2640 = vmatpush2.msra.mxu0 0.0
    %2641 = vmatprep.subr.mxu0 0.0
    %2642 = vmatpush2.msra.mxu0 0.0
    %2643 = vmatprep.subr.mxu0 0.0
    %2644 = vmatpush2.msra.mxu0 0.0
    %2645 = vmatprep.subr.mxu0 0.0
    %2646 = vmatpush2.msra.mxu0 0.0
    %2647 = vmatprep.mubr.f32.mxu0 0.0
    %v2648 = vand.u32 %v2109, 4294901760
    %v2649 = vsub.f32 %v2109, %v2648
    %v2650 = vand.u32 %v2649, 4294901760
    %2651 = vmatmul.mubr.f32.gmra.mxu0 %v2650
    %v2652 = vpop.f32.mrf.mxu0
    %v2653 = vadd.f32 %v2523, %v2652
    %v2654 = vpop.f32.mrf.mxu0
    %2655 = vmatprep.mubr.f32.mxu0 0.0
    %v2656 = vand.u32 %v2112, 4294901760
    %v2657 = vsub.f32 %v2112, %v2656
    %v2658 = vand.u32 %v2657, 4294901760
    %2659 = vmatmul.mubr.f32.gmra.mxu0 %v2658
    %v2660 = vpop.f32.mrf.mxu0
    %v2661 = vadd.f32 %v2530, %v2660
    %v2662 = vpop.f32.mrf.mxu0
    %2663 = vmatprep.mubr.f32.mxu0 0.0
    %v2664 = vand.u32 %v2115, 4294901760
    %v2665 = vsub.f32 %v2115, %v2664
    %v2666 = vand.u32 %v2665, 4294901760
    %2667 = vmatmul.mubr.f32.gmra.mxu0 %v2666
    %v2668 = vpop.f32.mrf.mxu0
    %v2669 = vadd.f32 %v2537, %v2668
    %v2670 = vpop.f32.mrf.mxu0
    %2671 = vmatprep.mubr.f32.mxu0 0.0
    %v2672 = vand.u32 %v2118, 4294901760
    %v2673 = vsub.f32 %v2118, %v2672
    %v2674 = vand.u32 %v2673, 4294901760
    %2675 = vmatmul.mubr.f32.gmra.mxu0 %v2674
    %v2676 = vpop.f32.mrf.mxu0
    %v2677 = vadd.f32 %v2544, %v2676
    %v2678 = vpop.f32.mrf.mxu0
    %2679 = vmatprep.mubr.f32.mxu0 0.0
    %v2680 = vand.u32 %v2121, 4294901760
    %v2681 = vsub.f32 %v2121, %v2680
    %v2682 = vand.u32 %v2681, 4294901760
    %2683 = vmatmul.mubr.f32.gmra.mxu0 %v2682
    %v2684 = vpop.f32.mrf.mxu0
    %v2685 = vadd.f32 %v2551, %v2684
    %v2686 = vpop.f32.mrf.mxu0
    %2687 = vmatprep.mubr.f32.mxu0 0.0
    %v2688 = vand.u32 %v2124, 4294901760
    %v2689 = vsub.f32 %v2124, %v2688
    %v2690 = vand.u32 %v2689, 4294901760
    %2691 = vmatmul.mubr.f32.gmra.mxu0 %v2690
    %v2692 = vpop.f32.mrf.mxu0
    %v2693 = vadd.f32 %v2558, %v2692
    %v2694 = vpop.f32.mrf.mxu0
    %2695 = vmatprep.mubr.f32.mxu0 0.0
    %v2696 = vand.u32 %v2127, 4294901760
    %v2697 = vsub.f32 %v2127, %v2696
    %v2698 = vand.u32 %v2697, 4294901760
    %2699 = vmatmul.mubr.f32.gmra.mxu0 %v2698
    %v2700 = vpop.f32.mrf.mxu0
    %v2701 = vadd.f32 %v2565, %v2700
    %v2702 = vpop.f32.mrf.mxu0
    %2703 = vmatprep.mubr.f32.mxu0 0.0
    %v2704 = vand.u32 %v2130, 4294901760
    %v2705 = vsub.f32 %v2130, %v2704
    %v2706 = vand.u32 %v2705, 4294901760
    %2707 = vmatmul.mubr.f32.gmra.mxu0 %v2706
    %v2708 = vpop.f32.mrf.mxu0
    %v2709 = vadd.f32 %v2572, %v2708
    %v2710 = vpop.f32.mrf.mxu0
    %2711 = vdwg.mxu0
    %2712 = vmatprep.subr.mxu0 0.0
    %2713 = vmatpush1.msra.mxu0 0.0
    %2714 = vmatprep.subr.mxu0 0.0
    %2715 = vmatpush1.msra.mxu0 0.0
    %2716 = vmatprep.subr.mxu0 0.0
    %2717 = vmatpush1.msra.mxu0 0.0
    %2718 = vmatprep.subr.mxu0 0.0
    %2719 = vmatpush1.msra.mxu0 0.0
    %2720 = vmatprep.subr.mxu0 0.0
    %2721 = vmatpush1.msra.mxu0 0.0
    %2722 = vmatprep.subr.mxu0 0.0
    %2723 = vmatpush1.msra.mxu0 0.0
    %2724 = vmatprep.subr.mxu0 0.0
    %2725 = vmatpush1.msra.mxu0 0.0
    %2726 = vmatprep.subr.mxu0 0.0
    %2727 = vmatpush1.msra.mxu0 0.0
    %2728 = vmatprep.subr.mxu0 0.0
    %v2729 = vand.u32 %v2049, 4294901760
    %v2730 = vsub.f32 %v2049, %v2729
    %v2731 = vand.u32 %v2730, 4294901760
    %2732 = vmatpush1.msra.mxu0 %v2731
    %2733 = vmatprep.subr.mxu0 0.0
    %v2734 = vand.u32 %v2048, 4294901760
    %v2735 = vsub.f32 %v2048, %v2734
    %v2736 = vand.u32 %v2735, 4294901760
    %2737 = vmatpush1.msra.mxu0 %v2736
    %2738 = vmatprep.subr.mxu0 0.0
    %v2739 = vand.u32 %v2047, 4294901760
    %v2740 = vsub.f32 %v2047, %v2739
    %v2741 = vand.u32 %v2740, 4294901760
    %2742 = vmatpush1.msra.mxu0 %v2741
    %2743 = vmatprep.subr.mxu0 0.0
    %v2744 = vand.u32 %v2046, 4294901760
    %v2745 = vsub.f32 %v2046, %v2744
    %v2746 = vand.u32 %v2745, 4294901760
    %2747 = vmatpush1.msra.mxu0 %v2746
    %2748 = vmatprep.subr.mxu0 0.0
    %v2749 = vand.u32 %v2045, 4294901760
    %v2750 = vsub.f32 %v2045, %v2749
    %v2751 = vand.u32 %v2750, 4294901760
    %2752 = vmatpush1.msra.mxu0 %v2751
    %2753 = vmatprep.subr.mxu0 0.0
    %v2754 = vand.u32 %v2044, 4294901760
    %v2755 = vsub.f32 %v2044, %v2754
    %v2756 = vand.u32 %v2755, 4294901760
    %2757 = vmatpush1.msra.mxu0 %v2756
    %2758 = vmatprep.subr.mxu0 0.0
    %v2759 = vand.u32 %v2043, 4294901760
    %v2760 = vsub.f32 %v2043, %v2759
    %v2761 = vand.u32 %v2760, 4294901760
    %2762 = vmatpush1.msra.mxu0 %v2761
    %2763 = vmatprep.subr.mxu0 0.0
    %v2764 = vand.u32 %v2042, 4294901760
    %v2765 = vsub.f32 %v2042, %v2764
    %v2766 = vand.u32 %v2765, 4294901760
    %2767 = vmatpush1.msra.mxu0 %v2766
    %2768 = vmatprep.subr.mxu0 0.0
    %2769 = vmatpush2.msra.mxu0 0.0
    %2770 = vmatprep.subr.mxu0 0.0
    %2771 = vmatpush2.msra.mxu0 0.0
    %2772 = vmatprep.subr.mxu0 0.0
    %2773 = vmatpush2.msra.mxu0 0.0
    %2774 = vmatprep.subr.mxu0 0.0
    %2775 = vmatpush2.msra.mxu0 0.0
    %2776 = vmatprep.subr.mxu0 0.0
    %2777 = vmatpush2.msra.mxu0 0.0
    %2778 = vmatprep.subr.mxu0 0.0
    %2779 = vmatpush2.msra.mxu0 0.0
    %2780 = vmatprep.subr.mxu0 0.0
    %2781 = vmatpush2.msra.mxu0 0.0
    %2782 = vmatprep.subr.mxu0 0.0
    %2783 = vmatpush2.msra.mxu0 0.0
    %2784 = vmatprep.subr.mxu0 0.0
    %2785 = vmatpush2.msra.mxu0 0.0
    %2786 = vmatprep.subr.mxu0 0.0
    %2787 = vmatpush2.msra.mxu0 0.0
    %2788 = vmatprep.subr.mxu0 0.0
    %2789 = vmatpush2.msra.mxu0 0.0
    %2790 = vmatprep.subr.mxu0 0.0
    %2791 = vmatpush2.msra.mxu0 0.0
    %2792 = vmatprep.subr.mxu0 0.0
    %2793 = vmatpush2.msra.mxu0 0.0
    %2794 = vmatprep.subr.mxu0 0.0
    %2795 = vmatpush2.msra.mxu0 0.0
    %2796 = vmatprep.subr.mxu0 0.0
    %2797 = vmatpush2.msra.mxu0 0.0
    %2798 = vmatprep.subr.mxu0 0.0
    %2799 = vmatpush2.msra.mxu0 0.0
    %2800 = vmatprep.mubr.f32.mxu0 0.0
    %v2801 = vand.u32 %v2109, 4294901760
    %2802 = vmatmul.mubr.f32.gmra.mxu0 %v2801
    %v2803 = vpop.f32.mrf.mxu0
    %v2804 = vadd.f32 %v2653, %v2803
    %v2805 = vpop.f32.mrf.mxu0
    %2806 = vmatprep.mubr.f32.mxu0 0.0
    %v2807 = vand.u32 %v2112, 4294901760
    %2808 = vmatmul.mubr.f32.gmra.mxu0 %v2807
    %v2809 = vpop.f32.mrf.mxu0
    %v2810 = vadd.f32 %v2661, %v2809
    %v2811 = vpop.f32.mrf.mxu0
    %2812 = vmatprep.mubr.f32.mxu0 0.0
    %v2813 = vand.u32 %v2115, 4294901760
    %2814 = vmatmul.mubr.f32.gmra.mxu0 %v2813
    %v2815 = vpop.f32.mrf.mxu0
    %v2816 = vadd.f32 %v2669, %v2815
    %v2817 = vpop.f32.mrf.mxu0
    %2818 = vmatprep.mubr.f32.mxu0 0.0
    %v2819 = vand.u32 %v2118, 4294901760
    %2820 = vmatmul.mubr.f32.gmra.mxu0 %v2819
    %v2821 = vpop.f32.mrf.mxu0
    %v2822 = vadd.f32 %v2677, %v2821
    %v2823 = vpop.f32.mrf.mxu0
    %2824 = vmatprep.mubr.f32.mxu0 0.0
    %v2825 = vand.u32 %v2121, 4294901760
    %2826 = vmatmul.mubr.f32.gmra.mxu0 %v2825
    %v2827 = vpop.f32.mrf.mxu0
    %v2828 = vadd.f32 %v2685, %v2827
    %v2829 = vpop.f32.mrf.mxu0
    %2830 = vmatprep.mubr.f32.mxu0 0.0
    %v2831 = vand.u32 %v2124, 4294901760
    %2832 = vmatmul.mubr.f32.gmra.mxu0 %v2831
    %v2833 = vpop.f32.mrf.mxu0
    %v2834 = vadd.f32 %v2693, %v2833
    %v2835 = vpop.f32.mrf.mxu0
    %2836 = vmatprep.mubr.f32.mxu0 0.0
    %v2837 = vand.u32 %v2127, 4294901760
    %2838 = vmatmul.mubr.f32.gmra.mxu0 %v2837
    %v2839 = vpop.f32.mrf.mxu0
    %v2840 = vadd.f32 %v2701, %v2839
    %v2841 = vpop.f32.mrf.mxu0
    %2842 = vmatprep.mubr.f32.mxu0 0.0
    %v2843 = vand.u32 %v2130, 4294901760
    %2844 = vmatmul.mubr.f32.gmra.mxu0 %v2843
    %v2845 = vpop.f32.mrf.mxu0
    %v2846 = vadd.f32 %v2709, %v2845
    %v2847 = vpop.f32.mrf.mxu0
    %2848 = vdwg.mxu0
    %2849 = vmatprep.subr.mxu0 0.0
    %2850 = vmatpush1.msra.mxu0 0.0
    %2851 = vmatprep.subr.mxu0 0.0
    %2852 = vmatpush1.msra.mxu0 0.0
    %2853 = vmatprep.subr.mxu0 0.0
    %2854 = vmatpush1.msra.mxu0 0.0
    %2855 = vmatprep.subr.mxu0 0.0
    %2856 = vmatpush1.msra.mxu0 0.0
    %2857 = vmatprep.subr.mxu0 0.0
    %2858 = vmatpush1.msra.mxu0 0.0
    %2859 = vmatprep.subr.mxu0 0.0
    %2860 = vmatpush1.msra.mxu0 0.0
    %2861 = vmatprep.subr.mxu0 0.0
    %2862 = vmatpush1.msra.mxu0 0.0
    %2863 = vmatprep.subr.mxu0 0.0
    %2864 = vmatpush1.msra.mxu0 0.0
    %2865 = vmatprep.subr.mxu0 0.0
    %v2866 = vand.u32 %v2049, 4294901760
    %2867 = vmatpush1.msra.mxu0 %v2866
    %2868 = vmatprep.subr.mxu0 0.0
    %v2869 = vand.u32 %v2048, 4294901760
    %2870 = vmatpush1.msra.mxu0 %v2869
    %2871 = vmatprep.subr.mxu0 0.0
    %v2872 = vand.u32 %v2047, 4294901760
    %2873 = vmatpush1.msra.mxu0 %v2872
    %2874 = vmatprep.subr.mxu0 0.0
    %v2875 = vand.u32 %v2046, 4294901760
    %2876 = vmatpush1.msra.mxu0 %v2875
    %2877 = vmatprep.subr.mxu0 0.0
    %v2878 = vand.u32 %v2045, 4294901760
    %2879 = vmatpush1.msra.mxu0 %v2878
    %2880 = vmatprep.subr.mxu0 0.0
    %v2881 = vand.u32 %v2044, 4294901760
    %2882 = vmatpush1.msra.mxu0 %v2881
    %2883 = vmatprep.subr.mxu0 0.0
    %v2884 = vand.u32 %v2043, 4294901760
    %2885 = vmatpush1.msra.mxu0 %v2884
    %2886 = vmatprep.subr.mxu0 0.0
    %v2887 = vand.u32 %v2042, 4294901760
    %2888 = vmatpush1.msra.mxu0 %v2887
    %2889 = vmatprep.subr.mxu0 0.0
    %2890 = vmatpush2.msra.mxu0 0.0
    %2891 = vmatprep.subr.mxu0 0.0
    %2892 = vmatpush2.msra.mxu0 0.0
    %2893 = vmatprep.subr.mxu0 0.0
    %2894 = vmatpush2.msra.mxu0 0.0
    %2895 = vmatprep.subr.mxu0 0.0
    %2896 = vmatpush2.msra.mxu0 0.0
    %2897 = vmatprep.subr.mxu0 0.0
    %2898 = vmatpush2.msra.mxu0 0.0
    %2899 = vmatprep.subr.mxu0 0.0
    %2900 = vmatpush2.msra.mxu0 0.0
    %2901 = vmatprep.subr.mxu0 0.0
    %2902 = vmatpush2.msra.mxu0 0.0
    %2903 = vmatprep.subr.mxu0 0.0
    %2904 = vmatpush2.msra.mxu0 0.0
    %2905 = vmatprep.subr.mxu0 0.0
    %2906 = vmatpush2.msra.mxu0 0.0
    %2907 = vmatprep.subr.mxu0 0.0
    %2908 = vmatpush2.msra.mxu0 0.0
    %2909 = vmatprep.subr.mxu0 0.0
    %2910 = vmatpush2.msra.mxu0 0.0
    %2911 = vmatprep.subr.mxu0 0.0
    %2912 = vmatpush2.msra.mxu0 0.0
    %2913 = vmatprep.subr.mxu0 0.0
    %2914 = vmatpush2.msra.mxu0 0.0
    %2915 = vmatprep.subr.mxu0 0.0
    %2916 = vmatpush2.msra.mxu0 0.0
    %2917 = vmatprep.subr.mxu0 0.0
    %2918 = vmatpush2.msra.mxu0 0.0
    %2919 = vmatprep.subr.mxu0 0.0
    %2920 = vmatpush2.msra.mxu0 0.0
    %2921 = vmatprep.mubr.f32.mxu0 0.0
    %v2922 = vand.u32 %v2109, 4294901760
    %2923 = vmatmul.mubr.f32.gmra.mxu0 %v2922
    %v2924 = vpop.f32.mrf.mxu0
    %v2925 = vadd.f32 %v2804, %v2924
    %v2926 = vpop.f32.mrf.mxu0
    %2927 = vmatprep.mubr.f32.mxu0 0.0
    %v2928 = vand.u32 %v2112, 4294901760
    %2929 = vmatmul.mubr.f32.gmra.mxu0 %v2928
    %v2930 = vpop.f32.mrf.mxu0
    %v2931 = vadd.f32 %v2810, %v2930
    %v2932 = vpop.f32.mrf.mxu0
    %2933 = vmatprep.mubr.f32.mxu0 0.0
    %v2934 = vand.u32 %v2115, 4294901760
    %2935 = vmatmul.mubr.f32.gmra.mxu0 %v2934
    %v2936 = vpop.f32.mrf.mxu0
    %v2937 = vadd.f32 %v2816, %v2936
    %v2938 = vpop.f32.mrf.mxu0
    %2939 = vmatprep.mubr.f32.mxu0 0.0
    %v2940 = vand.u32 %v2118, 4294901760
    %2941 = vmatmul.mubr.f32.gmra.mxu0 %v2940
    %v2942 = vpop.f32.mrf.mxu0
    %v2943 = vadd.f32 %v2822, %v2942
    %v2944 = vpop.f32.mrf.mxu0
    %2945 = vmatprep.mubr.f32.mxu0 0.0
    %v2946 = vand.u32 %v2121, 4294901760
    %2947 = vmatmul.mubr.f32.gmra.mxu0 %v2946
    %v2948 = vpop.f32.mrf.mxu0
    %v2949 = vadd.f32 %v2828, %v2948
    %v2950 = vpop.f32.mrf.mxu0
    %2951 = vmatprep.mubr.f32.mxu0 0.0
    %v2952 = vand.u32 %v2124, 4294901760
    %2953 = vmatmul.mubr.f32.gmra.mxu0 %v2952
    %v2954 = vpop.f32.mrf.mxu0
    %v2955 = vadd.f32 %v2834, %v2954
    %v2956 = vpop.f32.mrf.mxu0
    %2957 = vmatprep.mubr.f32.mxu0 0.0
    %v2958 = vand.u32 %v2127, 4294901760
    %2959 = vmatmul.mubr.f32.gmra.mxu0 %v2958
    %v2960 = vpop.f32.mrf.mxu0
    %v2961 = vadd.f32 %v2840, %v2960
    %v2962 = vpop.f32.mrf.mxu0
    %2963 = vmatprep.mubr.f32.mxu0 0.0
    %v2964 = vand.u32 %v2130, 4294901760
    %2965 = vmatmul.mubr.f32.gmra.mxu0 %v2964
    %v2966 = vpop.f32.mrf.mxu0
    %v2967 = vadd.f32 %v2846, %v2966
    %v2968 = vpop.f32.mrf.mxu0
    %2969 = vdwg.mxu0
    %v2970 = vtanh.pop %v2925
    %v2971 = vtanh.pop %v2931
    %v2972 = vtanh.pop %v2937
    %v2973 = vtanh.pop %v2943
    %v2974 = vtanh.pop %v2949
    %v2975 = vtanh.pop %v2955
    %v2976 = vtanh.pop %v2961
    %v2977 = vtanh.pop %v2967
    %s2978 = scalar_lea.vmem %s3, 128
    %v2979 = vld [vmem:[%s2978] sm:$0xff]
    %v2980 = vld [vmem:[%s2978 + $0x8] sm:$0xff]
    %v2981 = vld [vmem:[%s2978 + $0x10] sm:$0xff]
    %v2982 = vld [vmem:[%s2978 + $0x18] sm:$0xff]
    %v2983 = vld [vmem:[%s2978 + $0x20] sm:$0xff]
    %v2984 = vld [vmem:[%s2978 + $0x28] sm:$0xff]
    %v2985 = vld [vmem:[%s2978 + $0x30] sm:$0xff]
    %v2986 = vld [vmem:[%s2978 + $0x38] sm:$0xff]
    %s2987 = scalar_lea.vmem %s4, 128
    %v2988 = vld [vmem:[%s2987] sm:$0xff]
    %v2989 = vld [vmem:[%s2987 + $0x8] sm:$0xff]
    %v2990 = vld [vmem:[%s2987 + $0x10] sm:$0xff]
    %v2991 = vld [vmem:[%s2987 + $0x18] sm:$0xff]
    %v2992 = vld [vmem:[%s2987 + $0x20] sm:$0xff]
    %v2993 = vld [vmem:[%s2987 + $0x28] sm:$0xff]
    %v2994 = vld [vmem:[%s2987 + $0x30] sm:$0xff]
    %v2995 = vld [vmem:[%s2987 + $0x38] sm:$0xff]
    %2997 = vset.pattern.permute.xlu0 0
    %2998 = vperm.xlu0 %2997, %v2988
    %v2999 = vpop.permute.xlu0 %2998
    %3002 = vset.pattern.permute.xlu0 0
    %3003 = vperm.xlu0 %3002, %v2989
    %v3004 = vpop.permute.xlu0 %3003
    %3007 = vset.pattern.permute.xlu0 0
    %3008 = vperm.xlu0 %3007, %v2990
    %v3009 = vpop.permute.xlu0 %3008
    %3012 = vset.pattern.permute.xlu0 0
    %3013 = vperm.xlu0 %3012, %v2991
    %v3014 = vpop.permute.xlu0 %3013
    %3017 = vset.pattern.permute.xlu0 0
    %3018 = vperm.xlu0 %3017, %v2992
    %v3019 = vpop.permute.xlu0 %3018
    %3022 = vset.pattern.permute.xlu0 0
    %3023 = vperm.xlu0 %3022, %v2993
    %v3024 = vpop.permute.xlu0 %3023
    %3027 = vset.pattern.permute.xlu0 0
    %3028 = vperm.xlu0 %3027, %v2994
    %v3029 = vpop.permute.xlu0 %3028
    %3032 = vset.pattern.permute.xlu0 0
    %3033 = vperm.xlu0 %3032, %v2995
    %v3034 = vpop.permute.xlu0 %3033
    %v3037 = vsel %vm1179, %v2979, 0
    %v3040 = vsel %vm1179, %v2980, 0
    %v3043 = vsel %vm1179, %v2981, 0
    %v3046 = vsel %vm1179, %v2982, 0
    %v3049 = vsel %vm1179, %v2983, 0
    %v3052 = vsel %vm1179, %v2984, 0
    %v3055 = vsel %vm1179, %v2985, 0
    %v3058 = vsel %vm1179, %v2986, 0
    %3060 = vmatprep.subr.mxu0 0.0
    %3061 = vmatpush1.msra.mxu0 0.0
    %3062 = vmatprep.subr.mxu0 0.0
    %3063 = vmatpush1.msra.mxu0 0.0
    %3064 = vmatprep.subr.mxu0 0.0
    %3065 = vmatpush1.msra.mxu0 0.0
    %3066 = vmatprep.subr.mxu0 0.0
    %3067 = vmatpush1.msra.mxu0 0.0
    %3068 = vmatprep.subr.mxu0 0.0
    %3069 = vmatpush1.msra.mxu0 0.0
    %3070 = vmatprep.subr.mxu0 0.0
    %3071 = vmatpush1.msra.mxu0 0.0
    %3072 = vmatprep.subr.mxu0 0.0
    %3073 = vmatpush1.msra.mxu0 0.0
    %3074 = vmatprep.subr.mxu0 0.0
    %3075 = vmatpush1.msra.mxu0 0.0
    %3076 = vmatprep.subr.mxu0 0.0
    %v3077 = vand.u32 %v2977, 4294901760
    %3078 = vmatpush1.msra.mxu0 %v3077
    %3079 = vmatprep.subr.mxu0 0.0
    %v3080 = vand.u32 %v2976, 4294901760
    %3081 = vmatpush1.msra.mxu0 %v3080
    %3082 = vmatprep.subr.mxu0 0.0
    %v3083 = vand.u32 %v2975, 4294901760
    %3084 = vmatpush1.msra.mxu0 %v3083
    %3085 = vmatprep.subr.mxu0 0.0
    %v3086 = vand.u32 %v2974, 4294901760
    %3087 = vmatpush1.msra.mxu0 %v3086
    %3088 = vmatprep.subr.mxu0 0.0
    %v3089 = vand.u32 %v2973, 4294901760
    %3090 = vmatpush1.msra.mxu0 %v3089
    %3091 = vmatprep.subr.mxu0 0.0
    %v3092 = vand.u32 %v2972, 4294901760
    %3093 = vmatpush1.msra.mxu0 %v3092
    %3094 = vmatprep.subr.mxu0 0.0
    %v3095 = vand.u32 %v2971, 4294901760
    %3096 = vmatpush1.msra.mxu0 %v3095
    %3097 = vmatprep.subr.mxu0 0.0
    %v3098 = vand.u32 %v2970, 4294901760
    %3099 = vmatpush1.msra.mxu0 %v3098
    %3100 = vmatprep.subr.mxu0 0.0
    %3101 = vmatpush2.msra.mxu0 0.0
    %3102 = vmatprep.subr.mxu0 0.0
    %3103 = vmatpush2.msra.mxu0 0.0
    %3104 = vmatprep.subr.mxu0 0.0
    %3105 = vmatpush2.msra.mxu0 0.0
    %3106 = vmatprep.subr.mxu0 0.0
    %3107 = vmatpush2.msra.mxu0 0.0
    %3108 = vmatprep.subr.mxu0 0.0
    %3109 = vmatpush2.msra.mxu0 0.0
    %3110 = vmatprep.subr.mxu0 0.0
    %3111 = vmatpush2.msra.mxu0 0.0
    %3112 = vmatprep.subr.mxu0 0.0
    %3113 = vmatpush2.msra.mxu0 0.0
    %3114 = vmatprep.subr.mxu0 0.0
    %3115 = vmatpush2.msra.mxu0 0.0
    %3116 = vmatprep.subr.mxu0 0.0
    %3117 = vmatpush2.msra.mxu0 0.0
    %3118 = vmatprep.subr.mxu0 0.0
    %3119 = vmatpush2.msra.mxu0 0.0
    %3120 = vmatprep.subr.mxu0 0.0
    %3121 = vmatpush2.msra.mxu0 0.0
    %3122 = vmatprep.subr.mxu0 0.0
    %3123 = vmatpush2.msra.mxu0 0.0
    %3124 = vmatprep.subr.mxu0 0.0
    %3125 = vmatpush2.msra.mxu0 0.0
    %3126 = vmatprep.subr.mxu0 0.0
    %3127 = vmatpush2.msra.mxu0 0.0
    %3128 = vmatprep.subr.mxu0 0.0
    %3129 = vmatpush2.msra.mxu0 0.0
    %3130 = vmatprep.subr.mxu0 0.0
    %3131 = vmatpush2.msra.mxu0 0.0
    %3132 = vmatprep.mubr.f32.mxu0 0.0
    %v3133 = vand.u32 %v3037, 4294901760
    %v3134 = vsub.f32 %v3037, %v3133
    %v3135 = vand.u32 %v3134, 4294901760
    %v3136 = vsub.f32 %v3134, %v3135
    %v3137 = vand.u32 %v3136, 4294901760
    %3138 = vmatmul.mubr.f32.gmra.mxu0 %v3137
    %v3139 = vpop.f32.mrf.mxu0
    %v3140 = vadd.f32 %v2999, %v3139
    %v3141 = vpop.f32.mrf.mxu0
    %3142 = vmatprep.mubr.f32.mxu0 0.0
    %v3143 = vand.u32 %v3040, 4294901760
    %v3144 = vsub.f32 %v3040, %v3143
    %v3145 = vand.u32 %v3144, 4294901760
    %v3146 = vsub.f32 %v3144, %v3145
    %v3147 = vand.u32 %v3146, 4294901760
    %3148 = vmatmul.mubr.f32.gmra.mxu0 %v3147
    %v3149 = vpop.f32.mrf.mxu0
    %v3150 = vadd.f32 %v3004, %v3149
    %v3151 = vpop.f32.mrf.mxu0
    %3152 = vmatprep.mubr.f32.mxu0 0.0
    %v3153 = vand.u32 %v3043, 4294901760
    %v3154 = vsub.f32 %v3043, %v3153
    %v3155 = vand.u32 %v3154, 4294901760
    %v3156 = vsub.f32 %v3154, %v3155
    %v3157 = vand.u32 %v3156, 4294901760
    %3158 = vmatmul.mubr.f32.gmra.mxu0 %v3157
    %v3159 = vpop.f32.mrf.mxu0
    %v3160 = vadd.f32 %v3009, %v3159
    %v3161 = vpop.f32.mrf.mxu0
    %3162 = vmatprep.mubr.f32.mxu0 0.0
    %v3163 = vand.u32 %v3046, 4294901760
    %v3164 = vsub.f32 %v3046, %v3163
    %v3165 = vand.u32 %v3164, 4294901760
    %v3166 = vsub.f32 %v3164, %v3165
    %v3167 = vand.u32 %v3166, 4294901760
    %3168 = vmatmul.mubr.f32.gmra.mxu0 %v3167
    %v3169 = vpop.f32.mrf.mxu0
    %v3170 = vadd.f32 %v3014, %v3169
    %v3171 = vpop.f32.mrf.mxu0
    %3172 = vmatprep.mubr.f32.mxu0 0.0
    %v3173 = vand.u32 %v3049, 4294901760
    %v3174 = vsub.f32 %v3049, %v3173
    %v3175 = vand.u32 %v3174, 4294901760
    %v3176 = vsub.f32 %v3174, %v3175
    %v3177 = vand.u32 %v3176, 4294901760
    %3178 = vmatmul.mubr.f32.gmra.mxu0 %v3177
    %v3179 = vpop.f32.mrf.mxu0
    %v3180 = vadd.f32 %v3019, %v3179
    %v3181 = vpop.f32.mrf.mxu0
    %3182 = vmatprep.mubr.f32.mxu0 0.0
    %v3183 = vand.u32 %v3052, 4294901760
    %v3184 = vsub.f32 %v3052, %v3183
    %v3185 = vand.u32 %v3184, 4294901760
    %v3186 = vsub.f32 %v3184, %v3185
    %v3187 = vand.u32 %v3186, 4294901760
    %3188 = vmatmul.mubr.f32.gmra.mxu0 %v3187
    %v3189 = vpop.f32.mrf.mxu0
    %v3190 = vadd.f32 %v3024, %v3189
    %v3191 = vpop.f32.mrf.mxu0
    %3192 = vmatprep.mubr.f32.mxu0 0.0
    %v3193 = vand.u32 %v3055, 4294901760
    %v3194 = vsub.f32 %v3055, %v3193
    %v3195 = vand.u32 %v3194, 4294901760
    %v3196 = vsub.f32 %v3194, %v3195
    %v3197 = vand.u32 %v3196, 4294901760
    %3198 = vmatmul.mubr.f32.gmra.mxu0 %v3197
    %v3199 = vpop.f32.mrf.mxu0
    %v3200 = vadd.f32 %v3029, %v3199
    %v3201 = vpop.f32.mrf.mxu0
    %3202 = vmatprep.mubr.f32.mxu0 0.0
    %v3203 = vand.u32 %v3058, 4294901760
    %v3204 = vsub.f32 %v3058, %v3203
    %v3205 = vand.u32 %v3204, 4294901760
    %v3206 = vsub.f32 %v3204, %v3205
    %v3207 = vand.u32 %v3206, 4294901760
    %3208 = vmatmul.mubr.f32.gmra.mxu0 %v3207
    %v3209 = vpop.f32.mrf.mxu0
    %v3210 = vadd.f32 %v3034, %v3209
    %v3211 = vpop.f32.mrf.mxu0
    %3212 = vdwg.mxu0
    %3213 = vmatprep.subr.mxu0 0.0
    %3214 = vmatpush1.msra.mxu0 0.0
    %3215 = vmatprep.subr.mxu0 0.0
    %3216 = vmatpush1.msra.mxu0 0.0
    %3217 = vmatprep.subr.mxu0 0.0
    %3218 = vmatpush1.msra.mxu0 0.0
    %3219 = vmatprep.subr.mxu0 0.0
    %3220 = vmatpush1.msra.mxu0 0.0
    %3221 = vmatprep.subr.mxu0 0.0
    %3222 = vmatpush1.msra.mxu0 0.0
    %3223 = vmatprep.subr.mxu0 0.0
    %3224 = vmatpush1.msra.mxu0 0.0
    %3225 = vmatprep.subr.mxu0 0.0
    %3226 = vmatpush1.msra.mxu0 0.0
    %3227 = vmatprep.subr.mxu0 0.0
    %3228 = vmatpush1.msra.mxu0 0.0
    %3229 = vmatprep.subr.mxu0 0.0
    %v3230 = vand.u32 %v2977, 4294901760
    %v3231 = vsub.f32 %v2977, %v3230
    %v3232 = vand.u32 %v3231, 4294901760
    %v3233 = vsub.f32 %v3231, %v3232
    %v3234 = vand.u32 %v3233, 4294901760
    %3235 = vmatpush1.msra.mxu0 %v3234
    %3236 = vmatprep.subr.mxu0 0.0
    %v3237 = vand.u32 %v2976, 4294901760
    %v3238 = vsub.f32 %v2976, %v3237
    %v3239 = vand.u32 %v3238, 4294901760
    %v3240 = vsub.f32 %v3238, %v3239
    %v3241 = vand.u32 %v3240, 4294901760
    %3242 = vmatpush1.msra.mxu0 %v3241
    %3243 = vmatprep.subr.mxu0 0.0
    %v3244 = vand.u32 %v2975, 4294901760
    %v3245 = vsub.f32 %v2975, %v3244
    %v3246 = vand.u32 %v3245, 4294901760
    %v3247 = vsub.f32 %v3245, %v3246
    %v3248 = vand.u32 %v3247, 4294901760
    %3249 = vmatpush1.msra.mxu0 %v3248
    %3250 = vmatprep.subr.mxu0 0.0
    %v3251 = vand.u32 %v2974, 4294901760
    %v3252 = vsub.f32 %v2974, %v3251
    %v3253 = vand.u32 %v3252, 4294901760
    %v3254 = vsub.f32 %v3252, %v3253
    %v3255 = vand.u32 %v3254, 4294901760
    %3256 = vmatpush1.msra.mxu0 %v3255
    %3257 = vmatprep.subr.mxu0 0.0
    %v3258 = vand.u32 %v2973, 4294901760
    %v3259 = vsub.f32 %v2973, %v3258
    %v3260 = vand.u32 %v3259, 4294901760
    %v3261 = vsub.f32 %v3259, %v3260
    %v3262 = vand.u32 %v3261, 4294901760
    %3263 = vmatpush1.msra.mxu0 %v3262
    %3264 = vmatprep.subr.mxu0 0.0
    %v3265 = vand.u32 %v2972, 4294901760
    %v3266 = vsub.f32 %v2972, %v3265
    %v3267 = vand.u32 %v3266, 4294901760
    %v3268 = vsub.f32 %v3266, %v3267
    %v3269 = vand.u32 %v3268, 4294901760
    %3270 = vmatpush1.msra.mxu0 %v3269
    %3271 = vmatprep.subr.mxu0 0.0
    %v3272 = vand.u32 %v2971, 4294901760
    %v3273 = vsub.f32 %v2971, %v3272
    %v3274 = vand.u32 %v3273, 4294901760
    %v3275 = vsub.f32 %v3273, %v3274
    %v3276 = vand.u32 %v3275, 4294901760
    %3277 = vmatpush1.msra.mxu0 %v3276
    %3278 = vmatprep.subr.mxu0 0.0
    %v3279 = vand.u32 %v2970, 4294901760
    %v3280 = vsub.f32 %v2970, %v3279
    %v3281 = vand.u32 %v3280, 4294901760
    %v3282 = vsub.f32 %v3280, %v3281
    %v3283 = vand.u32 %v3282, 4294901760
    %3284 = vmatpush1.msra.mxu0 %v3283
    %3285 = vmatprep.subr.mxu0 0.0
    %3286 = vmatpush2.msra.mxu0 0.0
    %3287 = vmatprep.subr.mxu0 0.0
    %3288 = vmatpush2.msra.mxu0 0.0
    %3289 = vmatprep.subr.mxu0 0.0
    %3290 = vmatpush2.msra.mxu0 0.0
    %3291 = vmatprep.subr.mxu0 0.0
    %3292 = vmatpush2.msra.mxu0 0.0
    %3293 = vmatprep.subr.mxu0 0.0
    %3294 = vmatpush2.msra.mxu0 0.0
    %3295 = vmatprep.subr.mxu0 0.0
    %3296 = vmatpush2.msra.mxu0 0.0
    %3297 = vmatprep.subr.mxu0 0.0
    %3298 = vmatpush2.msra.mxu0 0.0
    %3299 = vmatprep.subr.mxu0 0.0
    %3300 = vmatpush2.msra.mxu0 0.0
    %3301 = vmatprep.subr.mxu0 0.0
    %3302 = vmatpush2.msra.mxu0 0.0
    %3303 = vmatprep.subr.mxu0 0.0
    %3304 = vmatpush2.msra.mxu0 0.0
    %3305 = vmatprep.subr.mxu0 0.0
    %3306 = vmatpush2.msra.mxu0 0.0
    %3307 = vmatprep.subr.mxu0 0.0
    %3308 = vmatpush2.msra.mxu0 0.0
    %3309 = vmatprep.subr.mxu0 0.0
    %3310 = vmatpush2.msra.mxu0 0.0
    %3311 = vmatprep.subr.mxu0 0.0
    %3312 = vmatpush2.msra.mxu0 0.0
    %3313 = vmatprep.subr.mxu0 0.0
    %3314 = vmatpush2.msra.mxu0 0.0
    %3315 = vmatprep.subr.mxu0 0.0
    %3316 = vmatpush2.msra.mxu0 0.0
    %3317 = vmatprep.mubr.f32.mxu0 0.0
    %v3318 = vand.u32 %v3037, 4294901760
    %3319 = vmatmul.mubr.f32.gmra.mxu0 %v3318
    %v3320 = vpop.f32.mrf.mxu0
    %v3321 = vadd.f32 %v3140, %v3320
    %v3322 = vpop.f32.mrf.mxu0
    %3323 = vmatprep.mubr.f32.mxu0 0.0
    %v3324 = vand.u32 %v3040, 4294901760
    %3325 = vmatmul.mubr.f32.gmra.mxu0 %v3324
    %v3326 = vpop.f32.mrf.mxu0
    %v3327 = vadd.f32 %v3150, %v3326
    %v3328 = vpop.f32.mrf.mxu0
    %3329 = vmatprep.mubr.f32.mxu0 0.0
    %v3330 = vand.u32 %v3043, 4294901760
    %3331 = vmatmul.mubr.f32.gmra.mxu0 %v3330
    %v3332 = vpop.f32.mrf.mxu0
    %v3333 = vadd.f32 %v3160, %v3332
    %v3334 = vpop.f32.mrf.mxu0
    %3335 = vmatprep.mubr.f32.mxu0 0.0
    %v3336 = vand.u32 %v3046, 4294901760
    %3337 = vmatmul.mubr.f32.gmra.mxu0 %v3336
    %v3338 = vpop.f32.mrf.mxu0
    %v3339 = vadd.f32 %v3170, %v3338
    %v3340 = vpop.f32.mrf.mxu0
    %3341 = vmatprep.mubr.f32.mxu0 0.0
    %v3342 = vand.u32 %v3049, 4294901760
    %3343 = vmatmul.mubr.f32.gmra.mxu0 %v3342
    %v3344 = vpop.f32.mrf.mxu0
    %v3345 = vadd.f32 %v3180, %v3344
    %v3346 = vpop.f32.mrf.mxu0
    %3347 = vmatprep.mubr.f32.mxu0 0.0
    %v3348 = vand.u32 %v3052, 4294901760
    %3349 = vmatmul.mubr.f32.gmra.mxu0 %v3348
    %v3350 = vpop.f32.mrf.mxu0
    %v3351 = vadd.f32 %v3190, %v3350
    %v3352 = vpop.f32.mrf.mxu0
    %3353 = vmatprep.mubr.f32.mxu0 0.0
    %v3354 = vand.u32 %v3055, 4294901760
    %3355 = vmatmul.mubr.f32.gmra.mxu0 %v3354
    %v3356 = vpop.f32.mrf.mxu0
    %v3357 = vadd.f32 %v3200, %v3356
    %v3358 = vpop.f32.mrf.mxu0
    %3359 = vmatprep.mubr.f32.mxu0 0.0
    %v3360 = vand.u32 %v3058, 4294901760
    %3361 = vmatmul.mubr.f32.gmra.mxu0 %v3360
    %v3362 = vpop.f32.mrf.mxu0
    %v3363 = vadd.f32 %v3210, %v3362
    %v3364 = vpop.f32.mrf.mxu0
    %3365 = vdwg.mxu0
    %3366 = vmatprep.subr.mxu0 0.0
    %3367 = vmatpush1.msra.mxu0 0.0
    %3368 = vmatprep.subr.mxu0 0.0
    %3369 = vmatpush1.msra.mxu0 0.0
    %3370 = vmatprep.subr.mxu0 0.0
    %3371 = vmatpush1.msra.mxu0 0.0
    %3372 = vmatprep.subr.mxu0 0.0
    %3373 = vmatpush1.msra.mxu0 0.0
    %3374 = vmatprep.subr.mxu0 0.0
    %3375 = vmatpush1.msra.mxu0 0.0
    %3376 = vmatprep.subr.mxu0 0.0
    %3377 = vmatpush1.msra.mxu0 0.0
    %3378 = vmatprep.subr.mxu0 0.0
    %3379 = vmatpush1.msra.mxu0 0.0
    %3380 = vmatprep.subr.mxu0 0.0
    %3381 = vmatpush1.msra.mxu0 0.0
    %3382 = vmatprep.subr.mxu0 0.0
    %v3383 = vand.u32 %v2977, 4294901760
    %v3384 = vsub.f32 %v2977, %v3383
    %3385 = vmatpush1.msra.mxu0 %v3384
    %3386 = vmatprep.subr.mxu0 0.0
    %v3387 = vand.u32 %v2976, 4294901760
    %v3388 = vsub.f32 %v2976, %v3387
    %3389 = vmatpush1.msra.mxu0 %v3388
    %3390 = vmatprep.subr.mxu0 0.0
    %v3391 = vand.u32 %v2975, 4294901760
    %v3392 = vsub.f32 %v2975, %v3391
    %3393 = vmatpush1.msra.mxu0 %v3392
    %3394 = vmatprep.subr.mxu0 0.0
    %v3395 = vand.u32 %v2974, 4294901760
    %v3396 = vsub.f32 %v2974, %v3395
    %3397 = vmatpush1.msra.mxu0 %v3396
    %3398 = vmatprep.subr.mxu0 0.0
    %v3399 = vand.u32 %v2973, 4294901760
    %v3400 = vsub.f32 %v2973, %v3399
    %3401 = vmatpush1.msra.mxu0 %v3400
    %3402 = vmatprep.subr.mxu0 0.0
    %v3403 = vand.u32 %v2972, 4294901760
    %v3404 = vsub.f32 %v2972, %v3403
    %3405 = vmatpush1.msra.mxu0 %v3404
    %3406 = vmatprep.subr.mxu0 0.0
    %v3407 = vand.u32 %v2971, 4294901760
    %v3408 = vsub.f32 %v2971, %v3407
    %3409 = vmatpush1.msra.mxu0 %v3408
    %3410 = vmatprep.subr.mxu0 0.0
    %v3411 = vand.u32 %v2970, 4294901760
    %v3412 = vsub.f32 %v2970, %v3411
    %3413 = vmatpush1.msra.mxu0 %v3412
    %3414 = vmatprep.subr.mxu0 0.0
    %3415 = vmatpush2.msra.mxu0 0.0
    %3416 = vmatprep.subr.mxu0 0.0
    %3417 = vmatpush2.msra.mxu0 0.0
    %3418 = vmatprep.subr.mxu0 0.0
    %3419 = vmatpush2.msra.mxu0 0.0
    %3420 = vmatprep.subr.mxu0 0.0
    %3421 = vmatpush2.msra.mxu0 0.0
    %3422 = vmatprep.subr.mxu0 0.0
    %3423 = vmatpush2.msra.mxu0 0.0
    %3424 = vmatprep.subr.mxu0 0.0
    %3425 = vmatpush2.msra.mxu0 0.0
    %3426 = vmatprep.subr.mxu0 0.0
    %3427 = vmatpush2.msra.mxu0 0.0
    %3428 = vmatprep.subr.mxu0 0.0
    %3429 = vmatpush2.msra.mxu0 0.0
    %3430 = vmatprep.subr.mxu0 0.0
    %3431 = vmatpush2.msra.mxu0 0.0
    %3432 = vmatprep.subr.mxu0 0.0
    %3433 = vmatpush2.msra.mxu0 0.0
    %3434 = vmatprep.subr.mxu0 0.0
    %3435 = vmatpush2.msra.mxu0 0.0
    %3436 = vmatprep.subr.mxu0 0.0
    %3437 = vmatpush2.msra.mxu0 0.0
    %3438 = vmatprep.subr.mxu0 0.0
    %3439 = vmatpush2.msra.mxu0 0.0
    %3440 = vmatprep.subr.mxu0 0.0
    %3441 = vmatpush2.msra.mxu0 0.0
    %3442 = vmatprep.subr.mxu0 0.0
    %3443 = vmatpush2.msra.mxu0 0.0
    %3444 = vmatprep.subr.mxu0 0.0
    %3445 = vmatpush2.msra.mxu0 0.0
    %3446 = vmatprep.mubr.f32.mxu0 0.0
    %v3447 = vand.u32 %v3037, 4294901760
    %v3448 = vsub.f32 %v3037, %v3447
    %3449 = vmatmul.mubr.f32.gmra.mxu0 %v3448
    %v3450 = vpop.f32.mrf.mxu0
    %v3451 = vadd.f32 %v3321, %v3450
    %v3452 = vpop.f32.mrf.mxu0
    %3453 = vmatprep.mubr.f32.mxu0 0.0
    %v3454 = vand.u32 %v3040, 4294901760
    %v3455 = vsub.f32 %v3040, %v3454
    %3456 = vmatmul.mubr.f32.gmra.mxu0 %v3455
    %v3457 = vpop.f32.mrf.mxu0
    %v3458 = vadd.f32 %v3327, %v3457
    %v3459 = vpop.f32.mrf.mxu0
    %3460 = vmatprep.mubr.f32.mxu0 0.0
    %v3461 = vand.u32 %v3043, 4294901760
    %v3462 = vsub.f32 %v3043, %v3461
    %3463 = vmatmul.mubr.f32.gmra.mxu0 %v3462
    %v3464 = vpop.f32.mrf.mxu0
    %v3465 = vadd.f32 %v3333, %v3464
    %v3466 = vpop.f32.mrf.mxu0
    %3467 = vmatprep.mubr.f32.mxu0 0.0
    %v3468 = vand.u32 %v3046, 4294901760
    %v3469 = vsub.f32 %v3046, %v3468
    %3470 = vmatmul.mubr.f32.gmra.mxu0 %v3469
    %v3471 = vpop.f32.mrf.mxu0
    %v3472 = vadd.f32 %v3339, %v3471
    %v3473 = vpop.f32.mrf.mxu0
    %3474 = vmatprep.mubr.f32.mxu0 0.0
    %v3475 = vand.u32 %v3049, 4294901760
    %v3476 = vsub.f32 %v3049, %v3475
    %3477 = vmatmul.mubr.f32.gmra.mxu0 %v3476
    %v3478 = vpop.f32.mrf.mxu0
    %v3479 = vadd.f32 %v3345, %v3478
    %v3480 = vpop.f32.mrf.mxu0
    %3481 = vmatprep.mubr.f32.mxu0 0.0
    %v3482 = vand.u32 %v3052, 4294901760
    %v3483 = vsub.f32 %v3052, %v3482
    %3484 = vmatmul.mubr.f32.gmra.mxu0 %v3483
    %v3485 = vpop.f32.mrf.mxu0
    %v3486 = vadd.f32 %v3351, %v3485
    %v3487 = vpop.f32.mrf.mxu0
    %3488 = vmatprep.mubr.f32.mxu0 0.0
    %v3489 = vand.u32 %v3055, 4294901760
    %v3490 = vsub.f32 %v3055, %v3489
    %3491 = vmatmul.mubr.f32.gmra.mxu0 %v3490
    %v3492 = vpop.f32.mrf.mxu0
    %v3493 = vadd.f32 %v3357, %v3492
    %v3494 = vpop.f32.mrf.mxu0
    %3495 = vmatprep.mubr.f32.mxu0 0.0
    %v3496 = vand.u32 %v3058, 4294901760
    %v3497 = vsub.f32 %v3058, %v3496
    %3498 = vmatmul.mubr.f32.gmra.mxu0 %v3497
    %v3499 = vpop.f32.mrf.mxu0
    %v3500 = vadd.f32 %v3363, %v3499
    %v3501 = vpop.f32.mrf.mxu0
    %3502 = vdwg.mxu0
    %3503 = vmatprep.subr.mxu0 0.0
    %3504 = vmatpush1.msra.mxu0 0.0
    %3505 = vmatprep.subr.mxu0 0.0
    %3506 = vmatpush1.msra.mxu0 0.0
    %3507 = vmatprep.subr.mxu0 0.0
    %3508 = vmatpush1.msra.mxu0 0.0
    %3509 = vmatprep.subr.mxu0 0.0
    %3510 = vmatpush1.msra.mxu0 0.0
    %3511 = vmatprep.subr.mxu0 0.0
    %3512 = vmatpush1.msra.mxu0 0.0
    %3513 = vmatprep.subr.mxu0 0.0
    %3514 = vmatpush1.msra.mxu0 0.0
    %3515 = vmatprep.subr.mxu0 0.0
    %3516 = vmatpush1.msra.mxu0 0.0
    %3517 = vmatprep.subr.mxu0 0.0
    %3518 = vmatpush1.msra.mxu0 0.0
    %3519 = vmatprep.subr.mxu0 0.0
    %v3520 = vand.u32 %v2977, 4294901760
    %3521 = vmatpush1.msra.mxu0 %v3520
    %3522 = vmatprep.subr.mxu0 0.0
    %v3523 = vand.u32 %v2976, 4294901760
    %3524 = vmatpush1.msra.mxu0 %v3523
    %3525 = vmatprep.subr.mxu0 0.0
    %v3526 = vand.u32 %v2975, 4294901760
    %3527 = vmatpush1.msra.mxu0 %v3526
    %3528 = vmatprep.subr.mxu0 0.0
    %v3529 = vand.u32 %v2974, 4294901760
    %3530 = vmatpush1.msra.mxu0 %v3529
    %3531 = vmatprep.subr.mxu0 0.0
    %v3532 = vand.u32 %v2973, 4294901760
    %3533 = vmatpush1.msra.mxu0 %v3532
    %3534 = vmatprep.subr.mxu0 0.0
    %v3535 = vand.u32 %v2972, 4294901760
    %3536 = vmatpush1.msra.mxu0 %v3535
    %3537 = vmatprep.subr.mxu0 0.0
    %v3538 = vand.u32 %v2971, 4294901760
    %3539 = vmatpush1.msra.mxu0 %v3538
    %3540 = vmatprep.subr.mxu0 0.0
    %v3541 = vand.u32 %v2970, 4294901760
    %3542 = vmatpush1.msra.mxu0 %v3541
    %3543 = vmatprep.subr.mxu0 0.0
    %3544 = vmatpush2.msra.mxu0 0.0
    %3545 = vmatprep.subr.mxu0 0.0
    %3546 = vmatpush2.msra.mxu0 0.0
    %3547 = vmatprep.subr.mxu0 0.0
    %3548 = vmatpush2.msra.mxu0 0.0
    %3549 = vmatprep.subr.mxu0 0.0
    %3550 = vmatpush2.msra.mxu0 0.0
    %3551 = vmatprep.subr.mxu0 0.0
    %3552 = vmatpush2.msra.mxu0 0.0
    %3553 = vmatprep.subr.mxu0 0.0
    %3554 = vmatpush2.msra.mxu0 0.0
    %3555 = vmatprep.subr.mxu0 0.0
    %3556 = vmatpush2.msra.mxu0 0.0
    %3557 = vmatprep.subr.mxu0 0.0
    %3558 = vmatpush2.msra.mxu0 0.0
    %3559 = vmatprep.subr.mxu0 0.0
    %3560 = vmatpush2.msra.mxu0 0.0
    %3561 = vmatprep.subr.mxu0 0.0
    %3562 = vmatpush2.msra.mxu0 0.0
    %3563 = vmatprep.subr.mxu0 0.0
    %3564 = vmatpush2.msra.mxu0 0.0
    %3565 = vmatprep.subr.mxu0 0.0
    %3566 = vmatpush2.msra.mxu0 0.0
    %3567 = vmatprep.subr.mxu0 0.0
    %3568 = vmatpush2.msra.mxu0 0.0
    %3569 = vmatprep.subr.mxu0 0.0
    %3570 = vmatpush2.msra.mxu0 0.0
    %3571 = vmatprep.subr.mxu0 0.0
    %3572 = vmatpush2.msra.mxu0 0.0
    %3573 = vmatprep.subr.mxu0 0.0
    %3574 = vmatpush2.msra.mxu0 0.0
    %3575 = vmatprep.mubr.f32.mxu0 0.0
    %v3576 = vand.u32 %v3037, 4294901760
    %v3577 = vsub.f32 %v3037, %v3576
    %v3578 = vand.u32 %v3577, 4294901760
    %3579 = vmatmul.mubr.f32.gmra.mxu0 %v3578
    %v3580 = vpop.f32.mrf.mxu0
    %v3581 = vadd.f32 %v3451, %v3580
    %v3582 = vpop.f32.mrf.mxu0
    %3583 = vmatprep.mubr.f32.mxu0 0.0
    %v3584 = vand.u32 %v3040, 4294901760
    %v3585 = vsub.f32 %v3040, %v3584
    %v3586 = vand.u32 %v3585, 4294901760
    %3587 = vmatmul.mubr.f32.gmra.mxu0 %v3586
    %v3588 = vpop.f32.mrf.mxu0
    %v3589 = vadd.f32 %v3458, %v3588
    %v3590 = vpop.f32.mrf.mxu0
    %3591 = vmatprep.mubr.f32.mxu0 0.0
    %v3592 = vand.u32 %v3043, 4294901760
    %v3593 = vsub.f32 %v3043, %v3592
    %v3594 = vand.u32 %v3593, 4294901760
    %3595 = vmatmul.mubr.f32.gmra.mxu0 %v3594
    %v3596 = vpop.f32.mrf.mxu0
    %v3597 = vadd.f32 %v3465, %v3596
    %v3598 = vpop.f32.mrf.mxu0
    %3599 = vmatprep.mubr.f32.mxu0 0.0
    %v3600 = vand.u32 %v3046, 4294901760
    %v3601 = vsub.f32 %v3046, %v3600
    %v3602 = vand.u32 %v3601, 4294901760
    %3603 = vmatmul.mubr.f32.gmra.mxu0 %v3602
    %v3604 = vpop.f32.mrf.mxu0
    %v3605 = vadd.f32 %v3472, %v3604
    %v3606 = vpop.f32.mrf.mxu0
    %3607 = vmatprep.mubr.f32.mxu0 0.0
    %v3608 = vand.u32 %v3049, 4294901760
    %v3609 = vsub.f32 %v3049, %v3608
    %v3610 = vand.u32 %v3609, 4294901760
    %3611 = vmatmul.mubr.f32.gmra.mxu0 %v3610
    %v3612 = vpop.f32.mrf.mxu0
    %v3613 = vadd.f32 %v3479, %v3612
    %v3614 = vpop.f32.mrf.mxu0
    %3615 = vmatprep.mubr.f32.mxu0 0.0
    %v3616 = vand.u32 %v3052, 4294901760
    %v3617 = vsub.f32 %v3052, %v3616
    %v3618 = vand.u32 %v3617, 4294901760
    %3619 = vmatmul.mubr.f32.gmra.mxu0 %v3618
    %v3620 = vpop.f32.mrf.mxu0
    %v3621 = vadd.f32 %v3486, %v3620
    %v3622 = vpop.f32.mrf.mxu0
    %3623 = vmatprep.mubr.f32.mxu0 0.0
    %v3624 = vand.u32 %v3055, 4294901760
    %v3625 = vsub.f32 %v3055, %v3624
    %v3626 = vand.u32 %v3625, 4294901760
    %3627 = vmatmul.mubr.f32.gmra.mxu0 %v3626
    %v3628 = vpop.f32.mrf.mxu0
    %v3629 = vadd.f32 %v3493, %v3628
    %v3630 = vpop.f32.mrf.mxu0
    %3631 = vmatprep.mubr.f32.mxu0 0.0
    %v3632 = vand.u32 %v3058, 4294901760
    %v3633 = vsub.f32 %v3058, %v3632
    %v3634 = vand.u32 %v3633, 4294901760
    %3635 = vmatmul.mubr.f32.gmra.mxu0 %v3634
    %v3636 = vpop.f32.mrf.mxu0
    %v3637 = vadd.f32 %v3500, %v3636
    %v3638 = vpop.f32.mrf.mxu0
    %3639 = vdwg.mxu0
    %3640 = vmatprep.subr.mxu0 0.0
    %3641 = vmatpush1.msra.mxu0 0.0
    %3642 = vmatprep.subr.mxu0 0.0
    %3643 = vmatpush1.msra.mxu0 0.0
    %3644 = vmatprep.subr.mxu0 0.0
    %3645 = vmatpush1.msra.mxu0 0.0
    %3646 = vmatprep.subr.mxu0 0.0
    %3647 = vmatpush1.msra.mxu0 0.0
    %3648 = vmatprep.subr.mxu0 0.0
    %3649 = vmatpush1.msra.mxu0 0.0
    %3650 = vmatprep.subr.mxu0 0.0
    %3651 = vmatpush1.msra.mxu0 0.0
    %3652 = vmatprep.subr.mxu0 0.0
    %3653 = vmatpush1.msra.mxu0 0.0
    %3654 = vmatprep.subr.mxu0 0.0
    %3655 = vmatpush1.msra.mxu0 0.0
    %3656 = vmatprep.subr.mxu0 0.0
    %v3657 = vand.u32 %v2977, 4294901760
    %v3658 = vsub.f32 %v2977, %v3657
    %v3659 = vand.u32 %v3658, 4294901760
    %3660 = vmatpush1.msra.mxu0 %v3659
    %3661 = vmatprep.subr.mxu0 0.0
    %v3662 = vand.u32 %v2976, 4294901760
    %v3663 = vsub.f32 %v2976, %v3662
    %v3664 = vand.u32 %v3663, 4294901760
    %3665 = vmatpush1.msra.mxu0 %v3664
    %3666 = vmatprep.subr.mxu0 0.0
    %v3667 = vand.u32 %v2975, 4294901760
    %v3668 = vsub.f32 %v2975, %v3667
    %v3669 = vand.u32 %v3668, 4294901760
    %3670 = vmatpush1.msra.mxu0 %v3669
    %3671 = vmatprep.subr.mxu0 0.0
    %v3672 = vand.u32 %v2974, 4294901760
    %v3673 = vsub.f32 %v2974, %v3672
    %v3674 = vand.u32 %v3673, 4294901760
    %3675 = vmatpush1.msra.mxu0 %v3674
    %3676 = vmatprep.subr.mxu0 0.0
    %v3677 = vand.u32 %v2973, 4294901760
    %v3678 = vsub.f32 %v2973, %v3677
    %v3679 = vand.u32 %v3678, 4294901760
    %3680 = vmatpush1.msra.mxu0 %v3679
    %3681 = vmatprep.subr.mxu0 0.0
    %v3682 = vand.u32 %v2972, 4294901760
    %v3683 = vsub.f32 %v2972, %v3682
    %v3684 = vand.u32 %v3683, 4294901760
    %3685 = vmatpush1.msra.mxu0 %v3684
    %3686 = vmatprep.subr.mxu0 0.0
    %v3687 = vand.u32 %v2971, 4294901760
    %v3688 = vsub.f32 %v2971, %v3687
    %v3689 = vand.u32 %v3688, 4294901760
    %3690 = vmatpush1.msra.mxu0 %v3689
    %3691 = vmatprep.subr.mxu0 0.0
    %v3692 = vand.u32 %v2970, 4294901760
    %v3693 = vsub.f32 %v2970, %v3692
    %v3694 = vand.u32 %v3693, 4294901760
    %3695 = vmatpush1.msra.mxu0 %v3694
    %3696 = vmatprep.subr.mxu0 0.0
    %3697 = vmatpush2.msra.mxu0 0.0
    %3698 = vmatprep.subr.mxu0 0.0
    %3699 = vmatpush2.msra.mxu0 0.0
    %3700 = vmatprep.subr.mxu0 0.0
    %3701 = vmatpush2.msra.mxu0 0.0
    %3702 = vmatprep.subr.mxu0 0.0
    %3703 = vmatpush2.msra.mxu0 0.0
    %3704 = vmatprep.subr.mxu0 0.0
    %3705 = vmatpush2.msra.mxu0 0.0
    %3706 = vmatprep.subr.mxu0 0.0
    %3707 = vmatpush2.msra.mxu0 0.0
    %3708 = vmatprep.subr.mxu0 0.0
    %3709 = vmatpush2.msra.mxu0 0.0
    %3710 = vmatprep.subr.mxu0 0.0
    %3711 = vmatpush2.msra.mxu0 0.0
    %3712 = vmatprep.subr.mxu0 0.0
    %3713 = vmatpush2.msra.mxu0 0.0
    %3714 = vmatprep.subr.mxu0 0.0
    %3715 = vmatpush2.msra.mxu0 0.0
    %3716 = vmatprep.subr.mxu0 0.0
    %3717 = vmatpush2.msra.mxu0 0.0
    %3718 = vmatprep.subr.mxu0 0.0
    %3719 = vmatpush2.msra.mxu0 0.0
    %3720 = vmatprep.subr.mxu0 0.0
    %3721 = vmatpush2.msra.mxu0 0.0
    %3722 = vmatprep.subr.mxu0 0.0
    %3723 = vmatpush2.msra.mxu0 0.0
    %3724 = vmatprep.subr.mxu0 0.0
    %3725 = vmatpush2.msra.mxu0 0.0
    %3726 = vmatprep.subr.mxu0 0.0
    %3727 = vmatpush2.msra.mxu0 0.0
    %3728 = vmatprep.mubr.f32.mxu0 0.0
    %v3729 = vand.u32 %v3037, 4294901760
    %3730 = vmatmul.mubr.f32.gmra.mxu0 %v3729
    %v3731 = vpop.f32.mrf.mxu0
    %v3732 = vadd.f32 %v3581, %v3731
    %v3733 = vpop.f32.mrf.mxu0
    %3734 = vmatprep.mubr.f32.mxu0 0.0
    %v3735 = vand.u32 %v3040, 4294901760
    %3736 = vmatmul.mubr.f32.gmra.mxu0 %v3735
    %v3737 = vpop.f32.mrf.mxu0
    %v3738 = vadd.f32 %v3589, %v3737
    %v3739 = vpop.f32.mrf.mxu0
    %3740 = vmatprep.mubr.f32.mxu0 0.0
    %v3741 = vand.u32 %v3043, 4294901760
    %3742 = vmatmul.mubr.f32.gmra.mxu0 %v3741
    %v3743 = vpop.f32.mrf.mxu0
    %v3744 = vadd.f32 %v3597, %v3743
    %v3745 = vpop.f32.mrf.mxu0
    %3746 = vmatprep.mubr.f32.mxu0 0.0
    %v3747 = vand.u32 %v3046, 4294901760
    %3748 = vmatmul.mubr.f32.gmra.mxu0 %v3747
    %v3749 = vpop.f32.mrf.mxu0
    %v3750 = vadd.f32 %v3605, %v3749
    %v3751 = vpop.f32.mrf.mxu0
    %3752 = vmatprep.mubr.f32.mxu0 0.0
    %v3753 = vand.u32 %v3049, 4294901760
    %3754 = vmatmul.mubr.f32.gmra.mxu0 %v3753
    %v3755 = vpop.f32.mrf.mxu0
    %v3756 = vadd.f32 %v3613, %v3755
    %v3757 = vpop.f32.mrf.mxu0
    %3758 = vmatprep.mubr.f32.mxu0 0.0
    %v3759 = vand.u32 %v3052, 4294901760
    %3760 = vmatmul.mubr.f32.gmra.mxu0 %v3759
    %v3761 = vpop.f32.mrf.mxu0
    %v3762 = vadd.f32 %v3621, %v3761
    %v3763 = vpop.f32.mrf.mxu0
    %3764 = vmatprep.mubr.f32.mxu0 0.0
    %v3765 = vand.u32 %v3055, 4294901760
    %3766 = vmatmul.mubr.f32.gmra.mxu0 %v3765
    %v3767 = vpop.f32.mrf.mxu0
    %v3768 = vadd.f32 %v3629, %v3767
    %v3769 = vpop.f32.mrf.mxu0
    %3770 = vmatprep.mubr.f32.mxu0 0.0
    %v3771 = vand.u32 %v3058, 4294901760
    %3772 = vmatmul.mubr.f32.gmra.mxu0 %v3771
    %v3773 = vpop.f32.mrf.mxu0
    %v3774 = vadd.f32 %v3637, %v3773
    %v3775 = vpop.f32.mrf.mxu0
    %3776 = vdwg.mxu0
    %3777 = vmatprep.subr.mxu0 0.0
    %3778 = vmatpush1.msra.mxu0 0.0
    %3779 = vmatprep.subr.mxu0 0.0
    %3780 = vmatpush1.msra.mxu0 0.0
    %3781 = vmatprep.subr.mxu0 0.0
    %3782 = vmatpush1.msra.mxu0 0.0
    %3783 = vmatprep.subr.mxu0 0.0
    %3784 = vmatpush1.msra.mxu0 0.0
    %3785 = vmatprep.subr.mxu0 0.0
    %3786 = vmatpush1.msra.mxu0 0.0
    %3787 = vmatprep.subr.mxu0 0.0
    %3788 = vmatpush1.msra.mxu0 0.0
    %3789 = vmatprep.subr.mxu0 0.0
    %3790 = vmatpush1.msra.mxu0 0.0
    %3791 = vmatprep.subr.mxu0 0.0
    %3792 = vmatpush1.msra.mxu0 0.0
    %3793 = vmatprep.subr.mxu0 0.0
    %v3794 = vand.u32 %v2977, 4294901760
    %3795 = vmatpush1.msra.mxu0 %v3794
    %3796 = vmatprep.subr.mxu0 0.0
    %v3797 = vand.u32 %v2976, 4294901760
    %3798 = vmatpush1.msra.mxu0 %v3797
    %3799 = vmatprep.subr.mxu0 0.0
    %v3800 = vand.u32 %v2975, 4294901760
    %3801 = vmatpush1.msra.mxu0 %v3800
    %3802 = vmatprep.subr.mxu0 0.0
    %v3803 = vand.u32 %v2974, 4294901760
    %3804 = vmatpush1.msra.mxu0 %v3803
    %3805 = vmatprep.subr.mxu0 0.0
    %v3806 = vand.u32 %v2973, 4294901760
    %3807 = vmatpush1.msra.mxu0 %v3806
    %3808 = vmatprep.subr.mxu0 0.0
    %v3809 = vand.u32 %v2972, 4294901760
    %3810 = vmatpush1.msra.mxu0 %v3809
    %3811 = vmatprep.subr.mxu0 0.0
    %v3812 = vand.u32 %v2971, 4294901760
    %3813 = vmatpush1.msra.mxu0 %v3812
    %3814 = vmatprep.subr.mxu0 0.0
    %v3815 = vand.u32 %v2970, 4294901760
    %3816 = vmatpush1.msra.mxu0 %v3815
    %3817 = vmatprep.subr.mxu0 0.0
    %3818 = vmatpush2.msra.mxu0 0.0
    %3819 = vmatprep.subr.mxu0 0.0
    %3820 = vmatpush2.msra.mxu0 0.0
    %3821 = vmatprep.subr.mxu0 0.0
    %3822 = vmatpush2.msra.mxu0 0.0
    %3823 = vmatprep.subr.mxu0 0.0
    %3824 = vmatpush2.msra.mxu0 0.0
    %3825 = vmatprep.subr.mxu0 0.0
    %3826 = vmatpush2.msra.mxu0 0.0
    %3827 = vmatprep.subr.mxu0 0.0
    %3828 = vmatpush2.msra.mxu0 0.0
    %3829 = vmatprep.subr.mxu0 0.0
    %3830 = vmatpush2.msra.mxu0 0.0
    %3831 = vmatprep.subr.mxu0 0.0
    %3832 = vmatpush2.msra.mxu0 0.0
    %3833 = vmatprep.subr.mxu0 0.0
    %3834 = vmatpush2.msra.mxu0 0.0
    %3835 = vmatprep.subr.mxu0 0.0
    %3836 = vmatpush2.msra.mxu0 0.0
    %3837 = vmatprep.subr.mxu0 0.0
    %3838 = vmatpush2.msra.mxu0 0.0
    %3839 = vmatprep.subr.mxu0 0.0
    %3840 = vmatpush2.msra.mxu0 0.0
    %3841 = vmatprep.subr.mxu0 0.0
    %3842 = vmatpush2.msra.mxu0 0.0
    %3843 = vmatprep.subr.mxu0 0.0
    %3844 = vmatpush2.msra.mxu0 0.0
    %3845 = vmatprep.subr.mxu0 0.0
    %3846 = vmatpush2.msra.mxu0 0.0
    %3847 = vmatprep.subr.mxu0 0.0
    %3848 = vmatpush2.msra.mxu0 0.0
    %3849 = vmatprep.mubr.f32.mxu0 0.0
    %v3850 = vand.u32 %v3037, 4294901760
    %3851 = vmatmul.mubr.f32.gmra.mxu0 %v3850
    %v3852 = vpop.f32.mrf.mxu0
    %v3853 = vadd.f32 %v3732, %v3852
    %v3854 = vpop.f32.mrf.mxu0
    %3855 = vmatprep.mubr.f32.mxu0 0.0
    %v3856 = vand.u32 %v3040, 4294901760
    %3857 = vmatmul.mubr.f32.gmra.mxu0 %v3856
    %v3858 = vpop.f32.mrf.mxu0
    %v3859 = vadd.f32 %v3738, %v3858
    %v3860 = vpop.f32.mrf.mxu0
    %3861 = vmatprep.mubr.f32.mxu0 0.0
    %v3862 = vand.u32 %v3043, 4294901760
    %3863 = vmatmul.mubr.f32.gmra.mxu0 %v3862
    %v3864 = vpop.f32.mrf.mxu0
    %v3865 = vadd.f32 %v3744, %v3864
    %v3866 = vpop.f32.mrf.mxu0
    %3867 = vmatprep.mubr.f32.mxu0 0.0
    %v3868 = vand.u32 %v3046, 4294901760
    %3869 = vmatmul.mubr.f32.gmra.mxu0 %v3868
    %v3870 = vpop.f32.mrf.mxu0
    %v3871 = vadd.f32 %v3750, %v3870
    %v3872 = vpop.f32.mrf.mxu0
    %3873 = vmatprep.mubr.f32.mxu0 0.0
    %v3874 = vand.u32 %v3049, 4294901760
    %3875 = vmatmul.mubr.f32.gmra.mxu0 %v3874
    %v3876 = vpop.f32.mrf.mxu0
    %v3877 = vadd.f32 %v3756, %v3876
    %v3878 = vpop.f32.mrf.mxu0
    %3879 = vmatprep.mubr.f32.mxu0 0.0
    %v3880 = vand.u32 %v3052, 4294901760
    %3881 = vmatmul.mubr.f32.gmra.mxu0 %v3880
    %v3882 = vpop.f32.mrf.mxu0
    %v3883 = vadd.f32 %v3762, %v3882
    %v3884 = vpop.f32.mrf.mxu0
    %3885 = vmatprep.mubr.f32.mxu0 0.0
    %v3886 = vand.u32 %v3055, 4294901760
    %3887 = vmatmul.mubr.f32.gmra.mxu0 %v3886
    %v3888 = vpop.f32.mrf.mxu0
    %v3889 = vadd.f32 %v3768, %v3888
    %v3890 = vpop.f32.mrf.mxu0
    %3891 = vmatprep.mubr.f32.mxu0 0.0
    %v3892 = vand.u32 %v3058, 4294901760
    %3893 = vmatmul.mubr.f32.gmra.mxu0 %v3892
    %v3894 = vpop.f32.mrf.mxu0
    %v3895 = vadd.f32 %v3774, %v3894
    %v3896 = vpop.f32.mrf.mxu0
    %3897 = vdwg.mxu0
    %v3898 = vtanh.pop %v3853
    %v3899 = vtanh.pop %v3859
    %v3900 = vtanh.pop %v3865
    %v3901 = vtanh.pop %v3871
    %v3902 = vtanh.pop %v3877
    %v3903 = vtanh.pop %v3883
    %v3904 = vtanh.pop %v3889
    %v3905 = vtanh.pop %v3895
    %s3906 = scalar_lea.vmem %s3, 192
    %v3907 = vld [vmem:[%s3906] sm:$0xff]
    %v3908 = vld [vmem:[%s3906 + $0x8] sm:$0xff]
    %v3909 = vld [vmem:[%s3906 + $0x10] sm:$0xff]
    %v3910 = vld [vmem:[%s3906 + $0x18] sm:$0xff]
    %v3911 = vld [vmem:[%s3906 + $0x20] sm:$0xff]
    %v3912 = vld [vmem:[%s3906 + $0x28] sm:$0xff]
    %v3913 = vld [vmem:[%s3906 + $0x30] sm:$0xff]
    %v3914 = vld [vmem:[%s3906 + $0x38] sm:$0xff]
    %s3915 = scalar_lea.vmem %s4, 192
    %v3916 = vld [vmem:[%s3915] sm:$0xff]
    %v3917 = vld [vmem:[%s3915 + $0x8] sm:$0xff]
    %v3918 = vld [vmem:[%s3915 + $0x10] sm:$0xff]
    %v3919 = vld [vmem:[%s3915 + $0x18] sm:$0xff]
    %v3920 = vld [vmem:[%s3915 + $0x20] sm:$0xff]
    %v3921 = vld [vmem:[%s3915 + $0x28] sm:$0xff]
    %v3922 = vld [vmem:[%s3915 + $0x30] sm:$0xff]
    %v3923 = vld [vmem:[%s3915 + $0x38] sm:$0xff]
    %3925 = vset.pattern.permute.xlu0 0
    %3926 = vperm.xlu0 %3925, %v3916
    %v3927 = vpop.permute.xlu0 %3926
    %3930 = vset.pattern.permute.xlu0 0
    %3931 = vperm.xlu0 %3930, %v3917
    %v3932 = vpop.permute.xlu0 %3931
    %3935 = vset.pattern.permute.xlu0 0
    %3936 = vperm.xlu0 %3935, %v3918
    %v3937 = vpop.permute.xlu0 %3936
    %3940 = vset.pattern.permute.xlu0 0
    %3941 = vperm.xlu0 %3940, %v3919
    %v3942 = vpop.permute.xlu0 %3941
    %3945 = vset.pattern.permute.xlu0 0
    %3946 = vperm.xlu0 %3945, %v3920
    %v3947 = vpop.permute.xlu0 %3946
    %3950 = vset.pattern.permute.xlu0 0
    %3951 = vperm.xlu0 %3950, %v3921
    %v3952 = vpop.permute.xlu0 %3951
    %3955 = vset.pattern.permute.xlu0 0
    %3956 = vperm.xlu0 %3955, %v3922
    %v3957 = vpop.permute.xlu0 %3956
    %3960 = vset.pattern.permute.xlu0 0
    %3961 = vperm.xlu0 %3960, %v3923
    %v3962 = vpop.permute.xlu0 %3961
    %v3965 = vsel %vm1179, %v3907, 0
    %v3968 = vsel %vm1179, %v3908, 0
    %v3971 = vsel %vm1179, %v3909, 0
    %v3974 = vsel %vm1179, %v3910, 0
    %v3977 = vsel %vm1179, %v3911, 0
    %v3980 = vsel %vm1179, %v3912, 0
    %v3983 = vsel %vm1179, %v3913, 0
    %v3986 = vsel %vm1179, %v3914, 0
    %3988 = vmatprep.subr.mxu0 0.0
    %3989 = vmatpush1.msra.mxu0 0.0
    %3990 = vmatprep.subr.mxu0 0.0
    %3991 = vmatpush1.msra.mxu0 0.0
    %3992 = vmatprep.subr.mxu0 0.0
    %3993 = vmatpush1.msra.mxu0 0.0
    %3994 = vmatprep.subr.mxu0 0.0
    %3995 = vmatpush1.msra.mxu0 0.0
    %3996 = vmatprep.subr.mxu0 0.0
    %3997 = vmatpush1.msra.mxu0 0.0
    %3998 = vmatprep.subr.mxu0 0.0
    %3999 = vmatpush1.msra.mxu0 0.0
    %4000 = vmatprep.subr.mxu0 0.0
    %4001 = vmatpush1.msra.mxu0 0.0
    %4002 = vmatprep.subr.mxu0 0.0
    %4003 = vmatpush1.msra.mxu0 0.0
    %4004 = vmatprep.subr.mxu0 0.0
    %v4005 = vand.u32 %v3905, 4294901760
    %4006 = vmatpush1.msra.mxu0 %v4005
    %4007 = vmatprep.subr.mxu0 0.0
    %v4008 = vand.u32 %v3904, 4294901760
    %4009 = vmatpush1.msra.mxu0 %v4008
    %4010 = vmatprep.subr.mxu0 0.0
    %v4011 = vand.u32 %v3903, 4294901760
    %4012 = vmatpush1.msra.mxu0 %v4011
    %4013 = vmatprep.subr.mxu0 0.0
    %v4014 = vand.u32 %v3902, 4294901760
    %4015 = vmatpush1.msra.mxu0 %v4014
    %4016 = vmatprep.subr.mxu0 0.0
    %v4017 = vand.u32 %v3901, 4294901760
    %4018 = vmatpush1.msra.mxu0 %v4017
    %4019 = vmatprep.subr.mxu0 0.0
    %v4020 = vand.u32 %v3900, 4294901760
    %4021 = vmatpush1.msra.mxu0 %v4020
    %4022 = vmatprep.subr.mxu0 0.0
    %v4023 = vand.u32 %v3899, 4294901760
    %4024 = vmatpush1.msra.mxu0 %v4023
    %4025 = vmatprep.subr.mxu0 0.0
    %v4026 = vand.u32 %v3898, 4294901760
    %4027 = vmatpush1.msra.mxu0 %v4026
    %4028 = vmatprep.subr.mxu0 0.0
    %4029 = vmatpush2.msra.mxu0 0.0
    %4030 = vmatprep.subr.mxu0 0.0
    %4031 = vmatpush2.msra.mxu0 0.0
    %4032 = vmatprep.subr.mxu0 0.0
    %4033 = vmatpush2.msra.mxu0 0.0
    %4034 = vmatprep.subr.mxu0 0.0
    %4035 = vmatpush2.msra.mxu0 0.0
    %4036 = vmatprep.subr.mxu0 0.0
    %4037 = vmatpush2.msra.mxu0 0.0
    %4038 = vmatprep.subr.mxu0 0.0
    %4039 = vmatpush2.msra.mxu0 0.0
    %4040 = vmatprep.subr.mxu0 0.0
    %4041 = vmatpush2.msra.mxu0 0.0
    %4042 = vmatprep.subr.mxu0 0.0
    %4043 = vmatpush2.msra.mxu0 0.0
    %4044 = vmatprep.subr.mxu0 0.0
    %4045 = vmatpush2.msra.mxu0 0.0
    %4046 = vmatprep.subr.mxu0 0.0
    %4047 = vmatpush2.msra.mxu0 0.0
    %4048 = vmatprep.subr.mxu0 0.0
    %4049 = vmatpush2.msra.mxu0 0.0
    %4050 = vmatprep.subr.mxu0 0.0
    %4051 = vmatpush2.msra.mxu0 0.0
    %4052 = vmatprep.subr.mxu0 0.0
    %4053 = vmatpush2.msra.mxu0 0.0
    %4054 = vmatprep.subr.mxu0 0.0
    %4055 = vmatpush2.msra.mxu0 0.0
    %4056 = vmatprep.subr.mxu0 0.0
    %4057 = vmatpush2.msra.mxu0 0.0
    %4058 = vmatprep.subr.mxu0 0.0
    %4059 = vmatpush2.msra.mxu0 0.0
    %4060 = vmatprep.mubr.f32.mxu0 0.0
    %v4061 = vand.u32 %v3965, 4294901760
    %v4062 = vsub.f32 %v3965, %v4061
    %v4063 = vand.u32 %v4062, 4294901760
    %v4064 = vsub.f32 %v4062, %v4063
    %v4065 = vand.u32 %v4064, 4294901760
    %4066 = vmatmul.mubr.f32.gmra.mxu0 %v4065
    %v4067 = vpop.f32.mrf.mxu0
    %v4068 = vadd.f32 %v3927, %v4067
    %v4069 = vpop.f32.mrf.mxu0
    %4070 = vmatprep.mubr.f32.mxu0 0.0
    %v4071 = vand.u32 %v3968, 4294901760
    %v4072 = vsub.f32 %v3968, %v4071
    %v4073 = vand.u32 %v4072, 4294901760
    %v4074 = vsub.f32 %v4072, %v4073
    %v4075 = vand.u32 %v4074, 4294901760
    %4076 = vmatmul.mubr.f32.gmra.mxu0 %v4075
    %v4077 = vpop.f32.mrf.mxu0
    %v4078 = vadd.f32 %v3932, %v4077
    %v4079 = vpop.f32.mrf.mxu0
    %4080 = vmatprep.mubr.f32.mxu0 0.0
    %v4081 = vand.u32 %v3971, 4294901760
    %v4082 = vsub.f32 %v3971, %v4081
    %v4083 = vand.u32 %v4082, 4294901760
    %v4084 = vsub.f32 %v4082, %v4083
    %v4085 = vand.u32 %v4084, 4294901760
    %4086 = vmatmul.mubr.f32.gmra.mxu0 %v4085
    %v4087 = vpop.f32.mrf.mxu0
    %v4088 = vadd.f32 %v3937, %v4087
    %v4089 = vpop.f32.mrf.mxu0
    %4090 = vmatprep.mubr.f32.mxu0 0.0
    %v4091 = vand.u32 %v3974, 4294901760
    %v4092 = vsub.f32 %v3974, %v4091
    %v4093 = vand.u32 %v4092, 4294901760
    %v4094 = vsub.f32 %v4092, %v4093
    %v4095 = vand.u32 %v4094, 4294901760
    %4096 = vmatmul.mubr.f32.gmra.mxu0 %v4095
    %v4097 = vpop.f32.mrf.mxu0
    %v4098 = vadd.f32 %v3942, %v4097
    %v4099 = vpop.f32.mrf.mxu0
    %4100 = vmatprep.mubr.f32.mxu0 0.0
    %v4101 = vand.u32 %v3977, 4294901760
    %v4102 = vsub.f32 %v3977, %v4101
    %v4103 = vand.u32 %v4102, 4294901760
    %v4104 = vsub.f32 %v4102, %v4103
    %v4105 = vand.u32 %v4104, 4294901760
    %4106 = vmatmul.mubr.f32.gmra.mxu0 %v4105
    %v4107 = vpop.f32.mrf.mxu0
    %v4108 = vadd.f32 %v3947, %v4107
    %v4109 = vpop.f32.mrf.mxu0
    %4110 = vmatprep.mubr.f32.mxu0 0.0
    %v4111 = vand.u32 %v3980, 4294901760
    %v4112 = vsub.f32 %v3980, %v4111
    %v4113 = vand.u32 %v4112, 4294901760
    %v4114 = vsub.f32 %v4112, %v4113
    %v4115 = vand.u32 %v4114, 4294901760
    %4116 = vmatmul.mubr.f32.gmra.mxu0 %v4115
    %v4117 = vpop.f32.mrf.mxu0
    %v4118 = vadd.f32 %v3952, %v4117
    %v4119 = vpop.f32.mrf.mxu0
    %4120 = vmatprep.mubr.f32.mxu0 0.0
    %v4121 = vand.u32 %v3983, 4294901760
    %v4122 = vsub.f32 %v3983, %v4121
    %v4123 = vand.u32 %v4122, 4294901760
    %v4124 = vsub.f32 %v4122, %v4123
    %v4125 = vand.u32 %v4124, 4294901760
    %4126 = vmatmul.mubr.f32.gmra.mxu0 %v4125
    %v4127 = vpop.f32.mrf.mxu0
    %v4128 = vadd.f32 %v3957, %v4127
    %v4129 = vpop.f32.mrf.mxu0
    %4130 = vmatprep.mubr.f32.mxu0 0.0
    %v4131 = vand.u32 %v3986, 4294901760
    %v4132 = vsub.f32 %v3986, %v4131
    %v4133 = vand.u32 %v4132, 4294901760
    %v4134 = vsub.f32 %v4132, %v4133
    %v4135 = vand.u32 %v4134, 4294901760
    %4136 = vmatmul.mubr.f32.gmra.mxu0 %v4135
    %v4137 = vpop.f32.mrf.mxu0
    %v4138 = vadd.f32 %v3962, %v4137
    %v4139 = vpop.f32.mrf.mxu0
    %4140 = vdwg.mxu0
    %4141 = vmatprep.subr.mxu0 0.0
    %4142 = vmatpush1.msra.mxu0 0.0
    %4143 = vmatprep.subr.mxu0 0.0
    %4144 = vmatpush1.msra.mxu0 0.0
    %4145 = vmatprep.subr.mxu0 0.0
    %4146 = vmatpush1.msra.mxu0 0.0
    %4147 = vmatprep.subr.mxu0 0.0
    %4148 = vmatpush1.msra.mxu0 0.0
    %4149 = vmatprep.subr.mxu0 0.0
    %4150 = vmatpush1.msra.mxu0 0.0
    %4151 = vmatprep.subr.mxu0 0.0
    %4152 = vmatpush1.msra.mxu0 0.0
    %4153 = vmatprep.subr.mxu0 0.0
    %4154 = vmatpush1.msra.mxu0 0.0
    %4155 = vmatprep.subr.mxu0 0.0
    %4156 = vmatpush1.msra.mxu0 0.0
    %4157 = vmatprep.subr.mxu0 0.0
    %v4158 = vand.u32 %v3905, 4294901760
    %v4159 = vsub.f32 %v3905, %v4158
    %v4160 = vand.u32 %v4159, 4294901760
    %v4161 = vsub.f32 %v4159, %v4160
    %v4162 = vand.u32 %v4161, 4294901760
    %4163 = vmatpush1.msra.mxu0 %v4162
    %4164 = vmatprep.subr.mxu0 0.0
    %v4165 = vand.u32 %v3904, 4294901760
    %v4166 = vsub.f32 %v3904, %v4165
    %v4167 = vand.u32 %v4166, 4294901760
    %v4168 = vsub.f32 %v4166, %v4167
    %v4169 = vand.u32 %v4168, 4294901760
    %4170 = vmatpush1.msra.mxu0 %v4169
    %4171 = vmatprep.subr.mxu0 0.0
    %v4172 = vand.u32 %v3903, 4294901760
    %v4173 = vsub.f32 %v3903, %v4172
    %v4174 = vand.u32 %v4173, 4294901760
    %v4175 = vsub.f32 %v4173, %v4174
    %v4176 = vand.u32 %v4175, 4294901760
    %4177 = vmatpush1.msra.mxu0 %v4176
    %4178 = vmatprep.subr.mxu0 0.0
    %v4179 = vand.u32 %v3902, 4294901760
    %v4180 = vsub.f32 %v3902, %v4179
    %v4181 = vand.u32 %v4180, 4294901760
    %v4182 = vsub.f32 %v4180, %v4181
    %v4183 = vand.u32 %v4182, 4294901760
    %4184 = vmatpush1.msra.mxu0 %v4183
    %4185 = vmatprep.subr.mxu0 0.0
    %v4186 = vand.u32 %v3901, 4294901760
    %v4187 = vsub.f32 %v3901, %v4186
    %v4188 = vand.u32 %v4187, 4294901760
    %v4189 = vsub.f32 %v4187, %v4188
    %v4190 = vand.u32 %v4189, 4294901760
    %4191 = vmatpush1.msra.mxu0 %v4190
    %4192 = vmatprep.subr.mxu0 0.0
    %v4193 = vand.u32 %v3900, 4294901760
    %v4194 = vsub.f32 %v3900, %v4193
    %v4195 = vand.u32 %v4194, 4294901760
    %v4196 = vsub.f32 %v4194, %v4195
    %v4197 = vand.u32 %v4196, 4294901760
    %4198 = vmatpush1.msra.mxu0 %v4197
    %4199 = vmatprep.subr.mxu0 0.0
    %v4200 = vand.u32 %v3899, 4294901760
    %v4201 = vsub.f32 %v3899, %v4200
    %v4202 = vand.u32 %v4201, 4294901760
    %v4203 = vsub.f32 %v4201, %v4202
    %v4204 = vand.u32 %v4203, 4294901760
    %4205 = vmatpush1.msra.mxu0 %v4204
    %4206 = vmatprep.subr.mxu0 0.0
    %v4207 = vand.u32 %v3898, 4294901760
    %v4208 = vsub.f32 %v3898, %v4207
    %v4209 = vand.u32 %v4208, 4294901760
    %v4210 = vsub.f32 %v4208, %v4209
    %v4211 = vand.u32 %v4210, 4294901760
    %4212 = vmatpush1.msra.mxu0 %v4211
    %4213 = vmatprep.subr.mxu0 0.0
    %4214 = vmatpush2.msra.mxu0 0.0
    %4215 = vmatprep.subr.mxu0 0.0
    %4216 = vmatpush2.msra.mxu0 0.0
    %4217 = vmatprep.subr.mxu0 0.0
    %4218 = vmatpush2.msra.mxu0 0.0
    %4219 = vmatprep.subr.mxu0 0.0
    %4220 = vmatpush2.msra.mxu0 0.0
    %4221 = vmatprep.subr.mxu0 0.0
    %4222 = vmatpush2.msra.mxu0 0.0
    %4223 = vmatprep.subr.mxu0 0.0
    %4224 = vmatpush2.msra.mxu0 0.0
    %4225 = vmatprep.subr.mxu0 0.0
    %4226 = vmatpush2.msra.mxu0 0.0
    %4227 = vmatprep.subr.mxu0 0.0
    %4228 = vmatpush2.msra.mxu0 0.0
    %4229 = vmatprep.subr.mxu0 0.0
    %4230 = vmatpush2.msra.mxu0 0.0
    %4231 = vmatprep.subr.mxu0 0.0
    %4232 = vmatpush2.msra.mxu0 0.0
    %4233 = vmatprep.subr.mxu0 0.0
    %4234 = vmatpush2.msra.mxu0 0.0
    %4235 = vmatprep.subr.mxu0 0.0
    %4236 = vmatpush2.msra.mxu0 0.0
    %4237 = vmatprep.subr.mxu0 0.0
    %4238 = vmatpush2.msra.mxu0 0.0
    %4239 = vmatprep.subr.mxu0 0.0
    %4240 = vmatpush2.msra.mxu0 0.0
    %4241 = vmatprep.subr.mxu0 0.0
    %4242 = vmatpush2.msra.mxu0 0.0
    %4243 = vmatprep.subr.mxu0 0.0
    %4244 = vmatpush2.msra.mxu0 0.0
    %4245 = vmatprep.mubr.f32.mxu0 0.0
    %v4246 = vand.u32 %v3965, 4294901760
    %4247 = vmatmul.mubr.f32.gmra.mxu0 %v4246
    %v4248 = vpop.f32.mrf.mxu0
    %v4249 = vadd.f32 %v4068, %v4248
    %v4250 = vpop.f32.mrf.mxu0
    %4251 = vmatprep.mubr.f32.mxu0 0.0
    %v4252 = vand.u32 %v3968, 4294901760
    %4253 = vmatmul.mubr.f32.gmra.mxu0 %v4252
    %v4254 = vpop.f32.mrf.mxu0
    %v4255 = vadd.f32 %v4078, %v4254
    %v4256 = vpop.f32.mrf.mxu0
    %4257 = vmatprep.mubr.f32.mxu0 0.0
    %v4258 = vand.u32 %v3971, 4294901760
    %4259 = vmatmul.mubr.f32.gmra.mxu0 %v4258
    %v4260 = vpop.f32.mrf.mxu0
    %v4261 = vadd.f32 %v4088, %v4260
    %v4262 = vpop.f32.mrf.mxu0
    %4263 = vmatprep.mubr.f32.mxu0 0.0
    %v4264 = vand.u32 %v3974, 4294901760
    %4265 = vmatmul.mubr.f32.gmra.mxu0 %v4264
    %v4266 = vpop.f32.mrf.mxu0
    %v4267 = vadd.f32 %v4098, %v4266
    %v4268 = vpop.f32.mrf.mxu0
    %4269 = vmatprep.mubr.f32.mxu0 0.0
    %v4270 = vand.u32 %v3977, 4294901760
    %4271 = vmatmul.mubr.f32.gmra.mxu0 %v4270
    %v4272 = vpop.f32.mrf.mxu0
    %v4273 = vadd.f32 %v4108, %v4272
    %v4274 = vpop.f32.mrf.mxu0
    %4275 = vmatprep.mubr.f32.mxu0 0.0
    %v4276 = vand.u32 %v3980, 4294901760
    %4277 = vmatmul.mubr.f32.gmra.mxu0 %v4276
    %v4278 = vpop.f32.mrf.mxu0
    %v4279 = vadd.f32 %v4118, %v4278
    %v4280 = vpop.f32.mrf.mxu0
    %4281 = vmatprep.mubr.f32.mxu0 0.0
    %v4282 = vand.u32 %v3983, 4294901760
    %4283 = vmatmul.mubr.f32.gmra.mxu0 %v4282
    %v4284 = vpop.f32.mrf.mxu0
    %v4285 = vadd.f32 %v4128, %v4284
    %v4286 = vpop.f32.mrf.mxu0
    %4287 = vmatprep.mubr.f32.mxu0 0.0
    %v4288 = vand.u32 %v3986, 4294901760
    %4289 = vmatmul.mubr.f32.gmra.mxu0 %v4288
    %v4290 = vpop.f32.mrf.mxu0
    %v4291 = vadd.f32 %v4138, %v4290
    %v4292 = vpop.f32.mrf.mxu0
    %4293 = vdwg.mxu0
    %4294 = vmatprep.subr.mxu0 0.0
    %4295 = vmatpush1.msra.mxu0 0.0
    %4296 = vmatprep.subr.mxu0 0.0
    %4297 = vmatpush1.msra.mxu0 0.0
    %4298 = vmatprep.subr.mxu0 0.0
    %4299 = vmatpush1.msra.mxu0 0.0
    %4300 = vmatprep.subr.mxu0 0.0
    %4301 = vmatpush1.msra.mxu0 0.0
    %4302 = vmatprep.subr.mxu0 0.0
    %4303 = vmatpush1.msra.mxu0 0.0
    %4304 = vmatprep.subr.mxu0 0.0
    %4305 = vmatpush1.msra.mxu0 0.0
    %4306 = vmatprep.subr.mxu0 0.0
    %4307 = vmatpush1.msra.mxu0 0.0
    %4308 = vmatprep.subr.mxu0 0.0
    %4309 = vmatpush1.msra.mxu0 0.0
    %4310 = vmatprep.subr.mxu0 0.0
    %v4311 = vand.u32 %v3905, 4294901760
    %v4312 = vsub.f32 %v3905, %v4311
    %4313 = vmatpush1.msra.mxu0 %v4312
    %4314 = vmatprep.subr.mxu0 0.0
    %v4315 = vand.u32 %v3904, 4294901760
    %v4316 = vsub.f32 %v3904, %v4315
    %4317 = vmatpush1.msra.mxu0 %v4316
    %4318 = vmatprep.subr.mxu0 0.0
    %v4319 = vand.u32 %v3903, 4294901760
    %v4320 = vsub.f32 %v3903, %v4319
    %4321 = vmatpush1.msra.mxu0 %v4320
    %4322 = vmatprep.subr.mxu0 0.0
    %v4323 = vand.u32 %v3902, 4294901760
    %v4324 = vsub.f32 %v3902, %v4323
    %4325 = vmatpush1.msra.mxu0 %v4324
    %4326 = vmatprep.subr.mxu0 0.0
    %v4327 = vand.u32 %v3901, 4294901760
    %v4328 = vsub.f32 %v3901, %v4327
    %4329 = vmatpush1.msra.mxu0 %v4328
    %4330 = vmatprep.subr.mxu0 0.0
    %v4331 = vand.u32 %v3900, 4294901760
    %v4332 = vsub.f32 %v3900, %v4331
    %4333 = vmatpush1.msra.mxu0 %v4332
    %4334 = vmatprep.subr.mxu0 0.0
    %v4335 = vand.u32 %v3899, 4294901760
    %v4336 = vsub.f32 %v3899, %v4335
    %4337 = vmatpush1.msra.mxu0 %v4336
    %4338 = vmatprep.subr.mxu0 0.0
    %v4339 = vand.u32 %v3898, 4294901760
    %v4340 = vsub.f32 %v3898, %v4339
    %4341 = vmatpush1.msra.mxu0 %v4340
    %4342 = vmatprep.subr.mxu0 0.0
    %4343 = vmatpush2.msra.mxu0 0.0
    %4344 = vmatprep.subr.mxu0 0.0
    %4345 = vmatpush2.msra.mxu0 0.0
    %4346 = vmatprep.subr.mxu0 0.0
    %4347 = vmatpush2.msra.mxu0 0.0
    %4348 = vmatprep.subr.mxu0 0.0
    %4349 = vmatpush2.msra.mxu0 0.0
    %4350 = vmatprep.subr.mxu0 0.0
    %4351 = vmatpush2.msra.mxu0 0.0
    %4352 = vmatprep.subr.mxu0 0.0
    %4353 = vmatpush2.msra.mxu0 0.0
    %4354 = vmatprep.subr.mxu0 0.0
    %4355 = vmatpush2.msra.mxu0 0.0
    %4356 = vmatprep.subr.mxu0 0.0
    %4357 = vmatpush2.msra.mxu0 0.0
    %4358 = vmatprep.subr.mxu0 0.0
    %4359 = vmatpush2.msra.mxu0 0.0
    %4360 = vmatprep.subr.mxu0 0.0
    %4361 = vmatpush2.msra.mxu0 0.0
    %4362 = vmatprep.subr.mxu0 0.0
    %4363 = vmatpush2.msra.mxu0 0.0
    %4364 = vmatprep.subr.mxu0 0.0
    %4365 = vmatpush2.msra.mxu0 0.0
    %4366 = vmatprep.subr.mxu0 0.0
    %4367 = vmatpush2.msra.mxu0 0.0
    %4368 = vmatprep.subr.mxu0 0.0
    %4369 = vmatpush2.msra.mxu0 0.0
    %4370 = vmatprep.subr.mxu0 0.0
    %4371 = vmatpush2.msra.mxu0 0.0
    %4372 = vmatprep.subr.mxu0 0.0
    %4373 = vmatpush2.msra.mxu0 0.0
    %4374 = vmatprep.mubr.f32.mxu0 0.0
    %v4375 = vand.u32 %v3965, 4294901760
    %v4376 = vsub.f32 %v3965, %v4375
    %4377 = vmatmul.mubr.f32.gmra.mxu0 %v4376
    %v4378 = vpop.f32.mrf.mxu0
    %v4379 = vadd.f32 %v4249, %v4378
    %v4380 = vpop.f32.mrf.mxu0
    %4381 = vmatprep.mubr.f32.mxu0 0.0
    %v4382 = vand.u32 %v3968, 4294901760
    %v4383 = vsub.f32 %v3968, %v4382
    %4384 = vmatmul.mubr.f32.gmra.mxu0 %v4383
    %v4385 = vpop.f32.mrf.mxu0
    %v4386 = vadd.f32 %v4255, %v4385
    %v4387 = vpop.f32.mrf.mxu0
    %4388 = vmatprep.mubr.f32.mxu0 0.0
    %v4389 = vand.u32 %v3971, 4294901760
    %v4390 = vsub.f32 %v3971, %v4389
    %4391 = vmatmul.mubr.f32.gmra.mxu0 %v4390
    %v4392 = vpop.f32.mrf.mxu0
    %v4393 = vadd.f32 %v4261, %v4392
    %v4394 = vpop.f32.mrf.mxu0
    %4395 = vmatprep.mubr.f32.mxu0 0.0
    %v4396 = vand.u32 %v3974, 4294901760
    %v4397 = vsub.f32 %v3974, %v4396
    %4398 = vmatmul.mubr.f32.gmra.mxu0 %v4397
    %v4399 = vpop.f32.mrf.mxu0
    %v4400 = vadd.f32 %v4267, %v4399
    %v4401 = vpop.f32.mrf.mxu0
    %4402 = vmatprep.mubr.f32.mxu0 0.0
    %v4403 = vand.u32 %v3977, 4294901760
    %v4404 = vsub.f32 %v3977, %v4403
    %4405 = vmatmul.mubr.f32.gmra.mxu0 %v4404
    %v4406 = vpop.f32.mrf.mxu0
    %v4407 = vadd.f32 %v4273, %v4406
    %v4408 = vpop.f32.mrf.mxu0
    %4409 = vmatprep.mubr.f32.mxu0 0.0
    %v4410 = vand.u32 %v3980, 4294901760
    %v4411 = vsub.f32 %v3980, %v4410
    %4412 = vmatmul.mubr.f32.gmra.mxu0 %v4411
    %v4413 = vpop.f32.mrf.mxu0
    %v4414 = vadd.f32 %v4279, %v4413
    %v4415 = vpop.f32.mrf.mxu0
    %4416 = vmatprep.mubr.f32.mxu0 0.0
    %v4417 = vand.u32 %v3983, 4294901760
    %v4418 = vsub.f32 %v3983, %v4417
    %4419 = vmatmul.mubr.f32.gmra.mxu0 %v4418
    %v4420 = vpop.f32.mrf.mxu0
    %v4421 = vadd.f32 %v4285, %v4420
    %v4422 = vpop.f32.mrf.mxu0
    %4423 = vmatprep.mubr.f32.mxu0 0.0
    %v4424 = vand.u32 %v3986, 4294901760
    %v4425 = vsub.f32 %v3986, %v4424
    %4426 = vmatmul.mubr.f32.gmra.mxu0 %v4425
    %v4427 = vpop.f32.mrf.mxu0
    %v4428 = vadd.f32 %v4291, %v4427
    %v4429 = vpop.f32.mrf.mxu0
    %4430 = vdwg.mxu0
    %4431 = vmatprep.subr.mxu0 0.0
    %4432 = vmatpush1.msra.mxu0 0.0
    %4433 = vmatprep.subr.mxu0 0.0
    %4434 = vmatpush1.msra.mxu0 0.0
    %4435 = vmatprep.subr.mxu0 0.0
    %4436 = vmatpush1.msra.mxu0 0.0
    %4437 = vmatprep.subr.mxu0 0.0
    %4438 = vmatpush1.msra.mxu0 0.0
    %4439 = vmatprep.subr.mxu0 0.0
    %4440 = vmatpush1.msra.mxu0 0.0
    %4441 = vmatprep.subr.mxu0 0.0
    %4442 = vmatpush1.msra.mxu0 0.0
    %4443 = vmatprep.subr.mxu0 0.0
    %4444 = vmatpush1.msra.mxu0 0.0
    %4445 = vmatprep.subr.mxu0 0.0
    %4446 = vmatpush1.msra.mxu0 0.0
    %4447 = vmatprep.subr.mxu0 0.0
    %v4448 = vand.u32 %v3905, 4294901760
    %4449 = vmatpush1.msra.mxu0 %v4448
    %4450 = vmatprep.subr.mxu0 0.0
    %v4451 = vand.u32 %v3904, 4294901760
    %4452 = vmatpush1.msra.mxu0 %v4451
    %4453 = vmatprep.subr.mxu0 0.0
    %v4454 = vand.u32 %v3903, 4294901760
    %4455 = vmatpush1.msra.mxu0 %v4454
    %4456 = vmatprep.subr.mxu0 0.0
    %v4457 = vand.u32 %v3902, 4294901760
    %4458 = vmatpush1.msra.mxu0 %v4457
    %4459 = vmatprep.subr.mxu0 0.0
    %v4460 = vand.u32 %v3901, 4294901760
    %4461 = vmatpush1.msra.mxu0 %v4460
    %4462 = vmatprep.subr.mxu0 0.0
    %v4463 = vand.u32 %v3900, 4294901760
    %4464 = vmatpush1.msra.mxu0 %v4463
    %4465 = vmatprep.subr.mxu0 0.0
    %v4466 = vand.u32 %v3899, 4294901760
    %4467 = vmatpush1.msra.mxu0 %v4466
    %4468 = vmatprep.subr.mxu0 0.0
    %v4469 = vand.u32 %v3898, 4294901760
    %4470 = vmatpush1.msra.mxu0 %v4469
    %4471 = vmatprep.subr.mxu0 0.0
    %4472 = vmatpush2.msra.mxu0 0.0
    %4473 = vmatprep.subr.mxu0 0.0
    %4474 = vmatpush2.msra.mxu0 0.0
    %4475 = vmatprep.subr.mxu0 0.0
    %4476 = vmatpush2.msra.mxu0 0.0
    %4477 = vmatprep.subr.mxu0 0.0
    %4478 = vmatpush2.msra.mxu0 0.0
    %4479 = vmatprep.subr.mxu0 0.0
    %4480 = vmatpush2.msra.mxu0 0.0
    %4481 = vmatprep.subr.mxu0 0.0
    %4482 = vmatpush2.msra.mxu0 0.0
    %4483 = vmatprep.subr.mxu0 0.0
    %4484 = vmatpush2.msra.mxu0 0.0
    %4485 = vmatprep.subr.mxu0 0.0
    %4486 = vmatpush2.msra.mxu0 0.0
    %4487 = vmatprep.subr.mxu0 0.0
    %4488 = vmatpush2.msra.mxu0 0.0
    %4489 = vmatprep.subr.mxu0 0.0
    %4490 = vmatpush2.msra.mxu0 0.0
    %4491 = vmatprep.subr.mxu0 0.0
    %4492 = vmatpush2.msra.mxu0 0.0
    %4493 = vmatprep.subr.mxu0 0.0
    %4494 = vmatpush2.msra.mxu0 0.0
    %4495 = vmatprep.subr.mxu0 0.0
    %4496 = vmatpush2.msra.mxu0 0.0
    %4497 = vmatprep.subr.mxu0 0.0
    %4498 = vmatpush2.msra.mxu0 0.0
    %4499 = vmatprep.subr.mxu0 0.0
    %4500 = vmatpush2.msra.mxu0 0.0
    %4501 = vmatprep.subr.mxu0 0.0
    %4502 = vmatpush2.msra.mxu0 0.0
    %4503 = vmatprep.mubr.f32.mxu0 0.0
    %v4504 = vand.u32 %v3965, 4294901760
    %v4505 = vsub.f32 %v3965, %v4504
    %v4506 = vand.u32 %v4505, 4294901760
    %4507 = vmatmul.mubr.f32.gmra.mxu0 %v4506
    %v4508 = vpop.f32.mrf.mxu0
    %v4509 = vadd.f32 %v4379, %v4508
    %v4510 = vpop.f32.mrf.mxu0
    %4511 = vmatprep.mubr.f32.mxu0 0.0
    %v4512 = vand.u32 %v3968, 4294901760
    %v4513 = vsub.f32 %v3968, %v4512
    %v4514 = vand.u32 %v4513, 4294901760
    %4515 = vmatmul.mubr.f32.gmra.mxu0 %v4514
    %v4516 = vpop.f32.mrf.mxu0
    %v4517 = vadd.f32 %v4386, %v4516
    %v4518 = vpop.f32.mrf.mxu0
    %4519 = vmatprep.mubr.f32.mxu0 0.0
    %v4520 = vand.u32 %v3971, 4294901760
    %v4521 = vsub.f32 %v3971, %v4520
    %v4522 = vand.u32 %v4521, 4294901760
    %4523 = vmatmul.mubr.f32.gmra.mxu0 %v4522
    %v4524 = vpop.f32.mrf.mxu0
    %v4525 = vadd.f32 %v4393, %v4524
    %v4526 = vpop.f32.mrf.mxu0
    %4527 = vmatprep.mubr.f32.mxu0 0.0
    %v4528 = vand.u32 %v3974, 4294901760
    %v4529 = vsub.f32 %v3974, %v4528
    %v4530 = vand.u32 %v4529, 4294901760
    %4531 = vmatmul.mubr.f32.gmra.mxu0 %v4530
    %v4532 = vpop.f32.mrf.mxu0
    %v4533 = vadd.f32 %v4400, %v4532
    %v4534 = vpop.f32.mrf.mxu0
    %4535 = vmatprep.mubr.f32.mxu0 0.0
    %v4536 = vand.u32 %v3977, 4294901760
    %v4537 = vsub.f32 %v3977, %v4536
    %v4538 = vand.u32 %v4537, 4294901760
    %4539 = vmatmul.mubr.f32.gmra.mxu0 %v4538
    %v4540 = vpop.f32.mrf.mxu0
    %v4541 = vadd.f32 %v4407, %v4540
    %v4542 = vpop.f32.mrf.mxu0
    %4543 = vmatprep.mubr.f32.mxu0 0.0
    %v4544 = vand.u32 %v3980, 4294901760
    %v4545 = vsub.f32 %v3980, %v4544
    %v4546 = vand.u32 %v4545, 4294901760
    %4547 = vmatmul.mubr.f32.gmra.mxu0 %v4546
    %v4548 = vpop.f32.mrf.mxu0
    %v4549 = vadd.f32 %v4414, %v4548
    %v4550 = vpop.f32.mrf.mxu0
    %4551 = vmatprep.mubr.f32.mxu0 0.0
    %v4552 = vand.u32 %v3983, 4294901760
    %v4553 = vsub.f32 %v3983, %v4552
    %v4554 = vand.u32 %v4553, 4294901760
    %4555 = vmatmul.mubr.f32.gmra.mxu0 %v4554
    %v4556 = vpop.f32.mrf.mxu0
    %v4557 = vadd.f32 %v4421, %v4556
    %v4558 = vpop.f32.mrf.mxu0
    %4559 = vmatprep.mubr.f32.mxu0 0.0
    %v4560 = vand.u32 %v3986, 4294901760
    %v4561 = vsub.f32 %v3986, %v4560
    %v4562 = vand.u32 %v4561, 4294901760
    %4563 = vmatmul.mubr.f32.gmra.mxu0 %v4562
    %v4564 = vpop.f32.mrf.mxu0
    %v4565 = vadd.f32 %v4428, %v4564
    %v4566 = vpop.f32.mrf.mxu0
    %4567 = vdwg.mxu0
    %4568 = vmatprep.subr.mxu0 0.0
    %4569 = vmatpush1.msra.mxu0 0.0
    %4570 = vmatprep.subr.mxu0 0.0
    %4571 = vmatpush1.msra.mxu0 0.0
    %4572 = vmatprep.subr.mxu0 0.0
    %4573 = vmatpush1.msra.mxu0 0.0
    %4574 = vmatprep.subr.mxu0 0.0
    %4575 = vmatpush1.msra.mxu0 0.0
    %4576 = vmatprep.subr.mxu0 0.0
    %4577 = vmatpush1.msra.mxu0 0.0
    %4578 = vmatprep.subr.mxu0 0.0
    %4579 = vmatpush1.msra.mxu0 0.0
    %4580 = vmatprep.subr.mxu0 0.0
    %4581 = vmatpush1.msra.mxu0 0.0
    %4582 = vmatprep.subr.mxu0 0.0
    %4583 = vmatpush1.msra.mxu0 0.0
    %4584 = vmatprep.subr.mxu0 0.0
    %v4585 = vand.u32 %v3905, 4294901760
    %v4586 = vsub.f32 %v3905, %v4585
    %v4587 = vand.u32 %v4586, 4294901760
    %4588 = vmatpush1.msra.mxu0 %v4587
    %4589 = vmatprep.subr.mxu0 0.0
    %v4590 = vand.u32 %v3904, 4294901760
    %v4591 = vsub.f32 %v3904, %v4590
    %v4592 = vand.u32 %v4591, 4294901760
    %4593 = vmatpush1.msra.mxu0 %v4592
    %4594 = vmatprep.subr.mxu0 0.0
    %v4595 = vand.u32 %v3903, 4294901760
    %v4596 = vsub.f32 %v3903, %v4595
    %v4597 = vand.u32 %v4596, 4294901760
    %4598 = vmatpush1.msra.mxu0 %v4597
    %4599 = vmatprep.subr.mxu0 0.0
    %v4600 = vand.u32 %v3902, 4294901760
    %v4601 = vsub.f32 %v3902, %v4600
    %v4602 = vand.u32 %v4601, 4294901760
    %4603 = vmatpush1.msra.mxu0 %v4602
    %4604 = vmatprep.subr.mxu0 0.0
    %v4605 = vand.u32 %v3901, 4294901760
    %v4606 = vsub.f32 %v3901, %v4605
    %v4607 = vand.u32 %v4606, 4294901760
    %4608 = vmatpush1.msra.mxu0 %v4607
    %4609 = vmatprep.subr.mxu0 0.0
    %v4610 = vand.u32 %v3900, 4294901760
    %v4611 = vsub.f32 %v3900, %v4610
    %v4612 = vand.u32 %v4611, 4294901760
    %4613 = vmatpush1.msra.mxu0 %v4612
    %4614 = vmatprep.subr.mxu0 0.0
    %v4615 = vand.u32 %v3899, 4294901760
    %v4616 = vsub.f32 %v3899, %v4615
    %v4617 = vand.u32 %v4616, 4294901760
    %4618 = vmatpush1.msra.mxu0 %v4617
    %4619 = vmatprep.subr.mxu0 0.0
    %v4620 = vand.u32 %v3898, 4294901760
    %v4621 = vsub.f32 %v3898, %v4620
    %v4622 = vand.u32 %v4621, 4294901760
    %4623 = vmatpush1.msra.mxu0 %v4622
    %4624 = vmatprep.subr.mxu0 0.0
    %4625 = vmatpush2.msra.mxu0 0.0
    %4626 = vmatprep.subr.mxu0 0.0
    %4627 = vmatpush2.msra.mxu0 0.0
    %4628 = vmatprep.subr.mxu0 0.0
    %4629 = vmatpush2.msra.mxu0 0.0
    %4630 = vmatprep.subr.mxu0 0.0
    %4631 = vmatpush2.msra.mxu0 0.0
    %4632 = vmatprep.subr.mxu0 0.0
    %4633 = vmatpush2.msra.mxu0 0.0
    %4634 = vmatprep.subr.mxu0 0.0
    %4635 = vmatpush2.msra.mxu0 0.0
    %4636 = vmatprep.subr.mxu0 0.0
    %4637 = vmatpush2.msra.mxu0 0.0
    %4638 = vmatprep.subr.mxu0 0.0
    %4639 = vmatpush2.msra.mxu0 0.0
    %4640 = vmatprep.subr.mxu0 0.0
    %4641 = vmatpush2.msra.mxu0 0.0
    %4642 = vmatprep.subr.mxu0 0.0
    %4643 = vmatpush2.msra.mxu0 0.0
    %4644 = vmatprep.subr.mxu0 0.0
    %4645 = vmatpush2.msra.mxu0 0.0
    %4646 = vmatprep.subr.mxu0 0.0
    %4647 = vmatpush2.msra.mxu0 0.0
    %4648 = vmatprep.subr.mxu0 0.0
    %4649 = vmatpush2.msra.mxu0 0.0
    %4650 = vmatprep.subr.mxu0 0.0
    %4651 = vmatpush2.msra.mxu0 0.0
    %4652 = vmatprep.subr.mxu0 0.0
    %4653 = vmatpush2.msra.mxu0 0.0
    %4654 = vmatprep.subr.mxu0 0.0
    %4655 = vmatpush2.msra.mxu0 0.0
    %4656 = vmatprep.mubr.f32.mxu0 0.0
    %v4657 = vand.u32 %v3965, 4294901760
    %4658 = vmatmul.mubr.f32.gmra.mxu0 %v4657
    %v4659 = vpop.f32.mrf.mxu0
    %v4660 = vadd.f32 %v4509, %v4659
    %v4661 = vpop.f32.mrf.mxu0
    %4662 = vmatprep.mubr.f32.mxu0 0.0
    %v4663 = vand.u32 %v3968, 4294901760
    %4664 = vmatmul.mubr.f32.gmra.mxu0 %v4663
    %v4665 = vpop.f32.mrf.mxu0
    %v4666 = vadd.f32 %v4517, %v4665
    %v4667 = vpop.f32.mrf.mxu0
    %4668 = vmatprep.mubr.f32.mxu0 0.0
    %v4669 = vand.u32 %v3971, 4294901760
    %4670 = vmatmul.mubr.f32.gmra.mxu0 %v4669
    %v4671 = vpop.f32.mrf.mxu0
    %v4672 = vadd.f32 %v4525, %v4671
    %v4673 = vpop.f32.mrf.mxu0
    %4674 = vmatprep.mubr.f32.mxu0 0.0
    %v4675 = vand.u32 %v3974, 4294901760
    %4676 = vmatmul.mubr.f32.gmra.mxu0 %v4675
    %v4677 = vpop.f32.mrf.mxu0
    %v4678 = vadd.f32 %v4533, %v4677
    %v4679 = vpop.f32.mrf.mxu0
    %4680 = vmatprep.mubr.f32.mxu0 0.0
    %v4681 = vand.u32 %v3977, 4294901760
    %4682 = vmatmul.mubr.f32.gmra.mxu0 %v4681
    %v4683 = vpop.f32.mrf.mxu0
    %v4684 = vadd.f32 %v4541, %v4683
    %v4685 = vpop.f32.mrf.mxu0
    %4686 = vmatprep.mubr.f32.mxu0 0.0
    %v4687 = vand.u32 %v3980, 4294901760
    %4688 = vmatmul.mubr.f32.gmra.mxu0 %v4687
    %v4689 = vpop.f32.mrf.mxu0
    %v4690 = vadd.f32 %v4549, %v4689
    %v4691 = vpop.f32.mrf.mxu0
    %4692 = vmatprep.mubr.f32.mxu0 0.0
    %v4693 = vand.u32 %v3983, 4294901760
    %4694 = vmatmul.mubr.f32.gmra.mxu0 %v4693
    %v4695 = vpop.f32.mrf.mxu0
    %v4696 = vadd.f32 %v4557, %v4695
    %v4697 = vpop.f32.mrf.mxu0
    %4698 = vmatprep.mubr.f32.mxu0 0.0
    %v4699 = vand.u32 %v3986, 4294901760
    %4700 = vmatmul.mubr.f32.gmra.mxu0 %v4699
    %v4701 = vpop.f32.mrf.mxu0
    %v4702 = vadd.f32 %v4565, %v4701
    %v4703 = vpop.f32.mrf.mxu0
    %4704 = vdwg.mxu0
    %4705 = vmatprep.subr.mxu0 0.0
    %4706 = vmatpush1.msra.mxu0 0.0
    %4707 = vmatprep.subr.mxu0 0.0
    %4708 = vmatpush1.msra.mxu0 0.0
    %4709 = vmatprep.subr.mxu0 0.0
    %4710 = vmatpush1.msra.mxu0 0.0
    %4711 = vmatprep.subr.mxu0 0.0
    %4712 = vmatpush1.msra.mxu0 0.0
    %4713 = vmatprep.subr.mxu0 0.0
    %4714 = vmatpush1.msra.mxu0 0.0
    %4715 = vmatprep.subr.mxu0 0.0
    %4716 = vmatpush1.msra.mxu0 0.0
    %4717 = vmatprep.subr.mxu0 0.0
    %4718 = vmatpush1.msra.mxu0 0.0
    %4719 = vmatprep.subr.mxu0 0.0
    %4720 = vmatpush1.msra.mxu0 0.0
    %4721 = vmatprep.subr.mxu0 0.0
    %v4722 = vand.u32 %v3905, 4294901760
    %4723 = vmatpush1.msra.mxu0 %v4722
    %4724 = vmatprep.subr.mxu0 0.0
    %v4725 = vand.u32 %v3904, 4294901760
    %4726 = vmatpush1.msra.mxu0 %v4725
    %4727 = vmatprep.subr.mxu0 0.0
    %v4728 = vand.u32 %v3903, 4294901760
    %4729 = vmatpush1.msra.mxu0 %v4728
    %4730 = vmatprep.subr.mxu0 0.0
    %v4731 = vand.u32 %v3902, 4294901760
    %4732 = vmatpush1.msra.mxu0 %v4731
    %4733 = vmatprep.subr.mxu0 0.0
    %v4734 = vand.u32 %v3901, 4294901760
    %4735 = vmatpush1.msra.mxu0 %v4734
    %4736 = vmatprep.subr.mxu0 0.0
    %v4737 = vand.u32 %v3900, 4294901760
    %4738 = vmatpush1.msra.mxu0 %v4737
    %4739 = vmatprep.subr.mxu0 0.0
    %v4740 = vand.u32 %v3899, 4294901760
    %4741 = vmatpush1.msra.mxu0 %v4740
    %4742 = vmatprep.subr.mxu0 0.0
    %v4743 = vand.u32 %v3898, 4294901760
    %4744 = vmatpush1.msra.mxu0 %v4743
    %4745 = vmatprep.subr.mxu0 0.0
    %4746 = vmatpush2.msra.mxu0 0.0
    %4747 = vmatprep.subr.mxu0 0.0
    %4748 = vmatpush2.msra.mxu0 0.0
    %4749 = vmatprep.subr.mxu0 0.0
    %4750 = vmatpush2.msra.mxu0 0.0
    %4751 = vmatprep.subr.mxu0 0.0
    %4752 = vmatpush2.msra.mxu0 0.0
    %4753 = vmatprep.subr.mxu0 0.0
    %4754 = vmatpush2.msra.mxu0 0.0
    %4755 = vmatprep.subr.mxu0 0.0
    %4756 = vmatpush2.msra.mxu0 0.0
    %4757 = vmatprep.subr.mxu0 0.0
    %4758 = vmatpush2.msra.mxu0 0.0
    %4759 = vmatprep.subr.mxu0 0.0
    %4760 = vmatpush2.msra.mxu0 0.0
    %4761 = vmatprep.subr.mxu0 0.0
    %4762 = vmatpush2.msra.mxu0 0.0
    %4763 = vmatprep.subr.mxu0 0.0
    %4764 = vmatpush2.msra.mxu0 0.0
    %4765 = vmatprep.subr.mxu0 0.0
    %4766 = vmatpush2.msra.mxu0 0.0
    %4767 = vmatprep.subr.mxu0 0.0
    %4768 = vmatpush2.msra.mxu0 0.0
    %4769 = vmatprep.subr.mxu0 0.0
    %4770 = vmatpush2.msra.mxu0 0.0
    %4771 = vmatprep.subr.mxu0 0.0
    %4772 = vmatpush2.msra.mxu0 0.0
    %4773 = vmatprep.subr.mxu0 0.0
    %4774 = vmatpush2.msra.mxu0 0.0
    %4775 = vmatprep.subr.mxu0 0.0
    %4776 = vmatpush2.msra.mxu0 0.0
    %4777 = vmatprep.mubr.f32.mxu0 0.0
    %v4778 = vand.u32 %v3965, 4294901760
    %4779 = vmatmul.mubr.f32.gmra.mxu0 %v4778
    %v4780 = vpop.f32.mrf.mxu0
    %v4781 = vadd.f32 %v4660, %v4780
    %v4782 = vpop.f32.mrf.mxu0
    %4783 = vmatprep.mubr.f32.mxu0 0.0
    %v4784 = vand.u32 %v3968, 4294901760
    %4785 = vmatmul.mubr.f32.gmra.mxu0 %v4784
    %v4786 = vpop.f32.mrf.mxu0
    %v4787 = vadd.f32 %v4666, %v4786
    %v4788 = vpop.f32.mrf.mxu0
    %4789 = vmatprep.mubr.f32.mxu0 0.0
    %v4790 = vand.u32 %v3971, 4294901760
    %4791 = vmatmul.mubr.f32.gmra.mxu0 %v4790
    %v4792 = vpop.f32.mrf.mxu0
    %v4793 = vadd.f32 %v4672, %v4792
    %v4794 = vpop.f32.mrf.mxu0
    %4795 = vmatprep.mubr.f32.mxu0 0.0
    %v4796 = vand.u32 %v3974, 4294901760
    %4797 = vmatmul.mubr.f32.gmra.mxu0 %v4796
    %v4798 = vpop.f32.mrf.mxu0
    %v4799 = vadd.f32 %v4678, %v4798
    %v4800 = vpop.f32.mrf.mxu0
    %4801 = vmatprep.mubr.f32.mxu0 0.0
    %v4802 = vand.u32 %v3977, 4294901760
    %4803 = vmatmul.mubr.f32.gmra.mxu0 %v4802
    %v4804 = vpop.f32.mrf.mxu0
    %v4805 = vadd.f32 %v4684, %v4804
    %v4806 = vpop.f32.mrf.mxu0
    %4807 = vmatprep.mubr.f32.mxu0 0.0
    %v4808 = vand.u32 %v3980, 4294901760
    %4809 = vmatmul.mubr.f32.gmra.mxu0 %v4808
    %v4810 = vpop.f32.mrf.mxu0
    %v4811 = vadd.f32 %v4690, %v4810
    %v4812 = vpop.f32.mrf.mxu0
    %4813 = vmatprep.mubr.f32.mxu0 0.0
    %v4814 = vand.u32 %v3983, 4294901760
    %4815 = vmatmul.mubr.f32.gmra.mxu0 %v4814
    %v4816 = vpop.f32.mrf.mxu0
    %v4817 = vadd.f32 %v4696, %v4816
    %v4818 = vpop.f32.mrf.mxu0
    %4819 = vmatprep.mubr.f32.mxu0 0.0
    %v4820 = vand.u32 %v3986, 4294901760
    %4821 = vmatmul.mubr.f32.gmra.mxu0 %v4820
    %v4822 = vpop.f32.mrf.mxu0
    %v4823 = vadd.f32 %v4702, %v4822
    %v4824 = vpop.f32.mrf.mxu0
    %4825 = vdwg.mxu0
    %v4826 = vtanh.pop %v4781
    %v4827 = vtanh.pop %v4787
    %v4828 = vtanh.pop %v4793
    %v4829 = vtanh.pop %v4799
    %v4830 = vtanh.pop %v4805
    %v4831 = vtanh.pop %v4811
    %v4832 = vtanh.pop %v4817
    %v4833 = vtanh.pop %v4823
    %v4834 = vld [vmem:[%s5] sm:$0xff]
    %v4835 = vld [vmem:[%s5 + $0x8] sm:$0xff]
    %v4836 = vld [vmem:[%s5 + $0x10] sm:$0xff]
    %v4837 = vld [vmem:[%s5 + $0x18] sm:$0xff]
    %v4838 = vld [vmem:[%s5 + $0x20] sm:$0xff]
    %v4839 = vld [vmem:[%s5 + $0x28] sm:$0xff]
    %v4840 = vld [vmem:[%s5 + $0x30] sm:$0xff]
    %v4841 = vld [vmem:[%s5 + $0x38] sm:$0xff]
    %4843 = vset.pattern.permute.xlu0 0
    %4844 = vperm.xlu0 %4843, %v4834
    %v4845 = vpop.permute.xlu0 %4844
    %4848 = vset.pattern.permute.xlu0 0
    %4849 = vperm.xlu0 %4848, %v4835
    %v4850 = vpop.permute.xlu0 %4849
    %4853 = vset.pattern.permute.xlu0 0
    %4854 = vperm.xlu0 %4853, %v4836
    %v4855 = vpop.permute.xlu0 %4854
    %4858 = vset.pattern.permute.xlu0 0
    %4859 = vperm.xlu0 %4858, %v4837
    %v4860 = vpop.permute.xlu0 %4859
    %4863 = vset.pattern.permute.xlu0 0
    %4864 = vperm.xlu0 %4863, %v4838
    %v4865 = vpop.permute.xlu0 %4864
    %4868 = vset.pattern.permute.xlu0 0
    %4869 = vperm.xlu0 %4868, %v4839
    %v4870 = vpop.permute.xlu0 %4869
    %4873 = vset.pattern.permute.xlu0 0
    %4874 = vperm.xlu0 %4873, %v4840
    %v4875 = vpop.permute.xlu0 %4874
    %4878 = vset.pattern.permute.xlu0 0
    %4879 = vperm.xlu0 %4878, %v4841
    %v4880 = vpop.permute.xlu0 %4879
    %v4882 = vmul.f32 %v4826, %v4845
    %v4883 = vmul.f32 %v4827, %v4850
    %v4884 = vmul.f32 %v4828, %v4855
    %v4885 = vmul.f32 %v4829, %v4860
    %v4886 = vmul.f32 %v4830, %v4865
    %v4887 = vmul.f32 %v4831, %v4870
    %v4888 = vmul.f32 %v4832, %v4875
    %v4889 = vmul.f32 %v4833, %v4880
    %v4890 = vadd.f32 %v4882, %v4883
    %v4891 = vadd.f32 %v4890, %v4884
    %v4892 = vadd.f32 %v4891, %v4885
    %v4893 = vadd.f32 %v4892, %v4886
    %v4894 = vadd.f32 %v4893, %v4887
    %v4895 = vadd.f32 %v4894, %v4888
    %v4896 = vadd.f32 %v4895, %v4889
    %v4897 = vrot.slane %v4896, 4
    %v4898 = vadd.f32 %v4896, %v4897
    %v4899 = vrot.slane %v4898, 2
    %v4900 = vadd.f32 %v4898, %v4899
    %v4901 = vrot.slane %v4900, 1
    %v4902 = vadd.f32 %v4900, %v4901
    %s4903 = sld [smem:[#allocation2]]
    %v4904 = vstv %s4903
    %v4905 = vadd.f32 %v4902, %v4904
    %v4906 = vtanh.pop %v4905
    %4907 = vst [vmem:[#allocation3] sm:$0x1] %v4906
    // Predicated region
    $region30: #{tpu_custom_call.1} parent=1 // pred_check
      _
    $region31: #{tpu_custom_call.1} parent=1 // pred_check_branch
      %4909 = sbr.rel (0) target = $region33
    $region32: #{tpu_custom_call.1} parent=1 // pred_region
      %s4911 = ssub.s32 16, 16
      %4912 = vsyncadd [#allocation4], %s4911
      %s4914 = sshll.u32 [#allocation3], 4
      %s4915 = int_to_ptr.vmem [resolvable:$true] %s4914
      %4917 = dma.vmem_to_hbm [thread:$0]  %s4915, 16, %s7, [#allocation4]
    $region33: #{tpu_custom_call.1} parent=1 // pred_fallthru
      _
    // Predicated region
    $region34: #{tpu_custom_call.1} parent=1 // pred_check
      _
    $region35: #{tpu_custom_call.1} parent=1 // pred_check_branch
      %4919 = sbr.rel (0) target = $region37
    $region36: #{tpu_custom_call.1} parent=1 // pred_region
      %4920 = dma.done [#allocation4], 16
    $region37: #{tpu_custom_call.1} parent=1 // pred_fallthru
      _
    %4921 = vsyncpa [#allocation4], 1

</llo_original>
